<compile_context>
chip_gen: v5e
topology: v5e:2x2
jax: 0.10.0
libtpu: 0.0.40
codegen_flags: <defaults>
</compile_context>

<pallas_src>
import jax
import jax.numpy as jnp
import numpy as np
from jax import lax
from jax.experimental import pallas as pl
from jax.experimental.pallas import tpu as pltpu

_LANES = 128     # all channel dims are zero-padded to 128 lanes (unmasked vst)
_K1P = 32        # conv1 contraction 25 -> 32
_K2P = 160       # conv2 contraction 150 -> 160
_VMEM_LIMIT = 32 * 1024 * 1024


def _round_up(x, m):
    return (x + m - 1) // m * m


def _pad_to(a, shape):
    return jnp.pad(a, [(0, t - s) for s, t in zip(a.shape, shape)])


# ----------------------------------------------------------------------------
# Kernel 1: conv1 + bias + ReLU + 2x2 max-pool, fused.
# p_ref[p] holds the im2col rows of pooling partner p = (dy)*2 + (dx);
# pooled row m <-> (n, h2, w2).  All 4 partners go through a single MXU matmul.
# ----------------------------------------------------------------------------
def _conv_pool_kernel(p_ref, w_ref, b_ref, o_ref):
    # p_ref: (4, TM, K) bf16 ; w_ref: (K, 128) bf16 ; b_ref: (1, 128) f32
    tm = o_ref.shape[0]
    k = p_ref.shape[-1]
    p = p_ref[...].reshape(4 * tm, k)                  # sublane-safe merge (tm % 8 == 0)
    z = jnp.dot(p, w_ref[...], preferred_element_type=jnp.float32)   # 1 MXU issue
    z = jnp.max(z.reshape(4, tm, _LANES), axis=0)      # max-pool over partners (VPU)
    o_ref[...] = jnp.maximum(z + b_ref[...], 0.0).astype(o_ref.dtype)


def _conv_pool_call(patches, wmat, bias, *, tile_m):
    _, mq, k = patches.shape
    grid_m = mq // tile_m
    flops = 2 * 4 * mq * k * _LANES
    bytes_accessed = (patches.size * 2 + wmat.size * 2 + bias.size * 4
                      + mq * _LANES * 2)
    return pl.pallas_call(
        _conv_pool_kernel,
        out_shape=jax.ShapeDtypeStruct((mq, _LANES), jnp.bfloat16),
        grid=(grid_m,),
        in_specs=[
            pl.BlockSpec((4, tile_m, k), lambda m: (0, m, 0)),
            pl.BlockSpec((k, _LANES), lambda m: (0, 0)),
            pl.BlockSpec((1, _LANES), lambda m: (0, 0)),
        ],
        out_specs=pl.BlockSpec((tile_m, _LANES), lambda m: (m, 0)),
        compiler_params=pltpu.CompilerParams(
            dimension_semantics=("parallel",),
            vmem_limit_bytes=_VMEM_LIMIT),
        cost_estimate=pl.CostEstimate(flops=flops, transcendentals=0,
                                      bytes_accessed=bytes_accessed),
    )(patches, wmat, bias)


# ----------------------------------------------------------------------------
# Kernel 2 ("tail"): conv2 + ReLU + pool + conv3 + ReLU + fc4 + ReLU + fc5, fused.
# p_ref[p, s] holds the conv2 im2col rows for pooling partner p at pooled spatial
# position s = h2*5 + w2.  conv2 over all (p, s) is ONE matmul; conv3 is ONE
# K=3200 matmul after restaging the pooled activations into a (TB, 25*128) scratch.
# ----------------------------------------------------------------------------
def _tail_kernel(p_ref, w2_ref, b2_ref, w3_ref, b3_ref, w4_ref, b4_ref,
                 w5_ref, b5_ref, o_ref, y2_ref):
    tb = o_ref.shape[0]
    k2 = p_ref.shape[-1]

    # conv2 for all 4 partners x 25 pooled spatial positions in ONE matmul.
    p = p_ref[...].reshape(4 * 25 * tb, k2)            # sublane-safe merge (tb % 8 == 0)
    z = jnp.dot(p, w2_ref[...], preferred_element_type=jnp.float32)   # (100*tb, 128)
    z = jnp.max(z.reshape(4, 25 * tb, _LANES), axis=0)                # 2x2 max-pool
    y2 = jnp.maximum(z + b2_ref[...], 0.0).astype(jnp.bfloat16)       # (25*tb, 128)

    # Restage y2 as (tb, 25*128) with 25 tile-aligned copies so conv3 is ONE matmul.
    for s in range(25):
        y2_ref[:, s * _LANES:(s + 1) * _LANES] = y2[s * tb:(s + 1) * tb, :]

    acc3 = jnp.dot(y2_ref[...], w3_ref[...], preferred_element_type=jnp.float32)
    h3 = jnp.maximum(acc3 + b3_ref[...], 0.0).astype(jnp.bfloat16)
    h4 = jnp.maximum(
        jnp.dot(h3, w4_ref[...], preferred_element_type=jnp.float32) + b4_ref[...],
        0.0).astype(jnp.bfloat16)
    o_ref[...] = (jnp.dot(h4, w5_ref[...], preferred_element_type=jnp.float32)
                  + b5_ref[...])


def _tail_call(patches, w2m, b2, w3f, b3, w4m, b4, w5m, b5, *, tile_b):
    _, _, nb, k2 = patches.shape
    grid_b = nb // tile_b
    flops = 2 * nb * (100 * k2 * _LANES + 25 * _LANES * _LANES + 2 * _LANES * _LANES)
    bytes_accessed = (patches.size * 2 + (w2m.size + w3f.size + w4m.size + w5m.size) * 2
                      + (b2.size + b3.size + b4.size + b5.size) * 4
                      + nb * _LANES * 4)
    bias_spec = pl.BlockSpec((1, _LANES), lambda b: (0, 0))
    sq_spec = pl.BlockSpec((_LANES, _LANES), lambda b: (0, 0))
    return pl.pallas_call(
        _tail_kernel,
        out_shape=jax.ShapeDtypeStruct((nb, _LANES), jnp.float32),
        grid=(grid_b,),
        in_specs=[
            pl.BlockSpec((4, 25, tile_b, k2), lambda b: (0, 0, b, 0)),
            pl.BlockSpec((k2, _LANES), lambda b: (0, 0)),
            bias_spec,
            pl.BlockSpec((25 * _LANES, _LANES), lambda b: (0, 0)),
            bias_spec,
            sq_spec,
            bias_spec,
            sq_spec,
            bias_spec,
        ],
        out_specs=pl.BlockSpec((tile_b, _LANES), lambda b: (b, 0)),
        scratch_shapes=[pltpu.VMEM((tile_b, 25 * _LANES), jnp.bfloat16)],
        compiler_params=pltpu.CompilerParams(
            dimension_semantics=("parallel",),
            vmem_limit_bytes=_VMEM_LIMIT),
        cost_estimate=pl.CostEstimate(flops=flops, transcendentals=0,
                                      bytes_accessed=bytes_accessed),
    )(patches, w2m, b2, w3f, b3, w4m, b4, w5m, b5)


# ----------------------------------------------------------------------------
# Parameters (PyTorch layouts) and forward
# ----------------------------------------------------------------------------
def init_params(key):
    ks = jax.random.split(key, 10)

    def u(k, shape, fan_in):
        bound = 1.0 / float(np.sqrt(fan_in))
        return jax.random.uniform(k, shape, jnp.float32, -bound, bound)

    return {
        "w1": u(ks[0], (6, 1, 5, 5), 25),     "b1": u(ks[1], (6,), 25),
        "w2": u(ks[2], (16, 6, 5, 5), 150),   "b2": u(ks[3], (16,), 150),
        "w3": u(ks[4], (120, 16, 5, 5), 400), "b3": u(ks[5], (120,), 400),
        "w4": u(ks[6], (84, 120), 120),       "b4": u(ks[7], (84,), 120),
        "w5": u(ks[8], (10, 84), 84),         "b5": u(ks[9], (10,), 84),
    }


def lenet_forward(params, x):
    """x: (N, 1, 28, 28) NCHW (PyTorch layout) -> (N, 10) float32 logits."""
    N = x.shape[0]
    f32, bf16 = jnp.float32, jnp.bfloat16

    # ---- weight prep: matmul layout, zero-padded to 128 lanes, bf16 for the MXU ----
    w1m = _pad_to(params["w1"].reshape(6, 25).T, (_K1P, _LANES)).astype(bf16)
    b1p = _pad_to(params["b1"].reshape(1, 6), (1, _LANES)).astype(f32)
    w2m = _pad_to(params["w2"].transpose(2, 3, 1, 0).reshape(150, 16),
                  (_K2P, _LANES)).astype(bf16)
    b2p = _pad_to(params["b2"].reshape(1, 16), (1, _LANES)).astype(f32)
    w3f = _pad_to(params["w3"].transpose(2, 3, 1, 0).reshape(25, 16, 120),
                  (25, _LANES, _LANES)).astype(bf16).reshape(25 * _LANES, _LANES)
    b3p = _pad_to(params["b3"].reshape(1, 120), (1, _LANES)).astype(f32)
    w4m = _pad_to(params["w4"].T, (_LANES, _LANES)).astype(bf16)
    b4p = _pad_to(params["b4"].reshape(1, 84), (1, _LANES)).astype(f32)
    w5m = _pad_to(params["w5"].T, (_LANES, _LANES)).astype(bf16)
    b5p = _pad_to(params["b5"].reshape(1, 10), (1, _LANES)).astype(f32)

    # ---- layer 1: conv(1->6, 5x5, pad=2) + ReLU + MaxPool(2), one fused call ----
    x2 = jnp.pad(x[:, 0], ((0, 0), (2, 2), (2, 2)))                    # (N, 32, 32)
    wins1 = jnp.stack([x2[:, i:i + 28, j:j + 28]
                       for i in range(5) for j in range(5)], axis=-1)  # (N,28,28,25)
    p1 = wins1.reshape(N, 14, 2, 14, 2, 25).transpose(2, 4, 0, 1, 3, 5)
    p1 = p1.reshape(4, N * 196, 25)                                    # (4, N*14*14, 25)
    mq1 = N * 196
    tile_m = min(2048, _round_up(mq1, 8))
    mq1p = _round_up(mq1, tile_m)
    p1 = _pad_to(p1, (4, mq1p, _K1P)).astype(bf16)
    o1 = _conv_pool_call(p1, w1m, b1p, tile_m=tile_m)                  # (mq1p, 128) bf16
    a1 = o1[:mq1].reshape(N, 14, 14, _LANES)                           # channels-last

    # ---- im2col for layer 2 (single hoisted channel slice, then 25 spatial windows) ----
    a1c = a1[..., :6]                                                  # one lane-slice
    wins2 = jnp.stack([a1c[:, i:i + 10, j:j + 10]
                       for i in range(5) for j in range(5)], axis=3)   # (N,10,10,25,6)
    wins2 = wins2.reshape(N, 10, 10, 150)
    p2 = wins2.reshape(N, 5, 2, 5, 2, 150).transpose(2, 4, 1, 3, 0, 5)
    p2 = p2.reshape(4, 25, N, 150)                                     # (part, spatial, n, k)
    tile_b = min(128, _round_up(N, 8))
    nbp = _round_up(N, tile_b)
    p2 = _pad_to(p2, (4, 25, nbp, _K2P)).astype(bf16)

    # ---- layers 2..5 fused: conv2+ReLU+pool, conv3+ReLU, fc4+ReLU, fc5 ----
    out = _tail_call(p2, w2m, b2p, w3f, b3p, w4m, b4p, w5m, b5p, tile_b=tile_b)
    return out[:N, :10]


# ----------------------------------------------------------------------------
# Pure-JAX reference (loose numerical sanity check against the bf16 kernels)
# ----------------------------------------------------------------------------
def lenet_reference(params, x):
    dn = ("NCHW", "OIHW", "NCHW")
    y = lax.conv_general_dilated(x, params["w1"], (1, 1), ((2, 2), (2, 2)),
                                 dimension_numbers=dn)
    y = jax.nn.relu(y + params["b1"].reshape(1, 6, 1, 1))
    y = lax.reduce_window(y, -jnp.inf, lax.max, (1, 1, 2, 2), (1, 1, 2, 2), "VALID")
    y = lax.conv_general_dilated(y, params["w2"], (1, 1), "VALID", dimension_numbers=dn)
    y = jax.nn.relu(y + params["b2"].reshape(1, 16, 1, 1))
    y = lax.reduce_window(y, -jnp.inf, lax.max, (1, 1, 2, 2), (1, 1, 2, 2), "VALID")
    y = lax.conv_general_dilated(y, params["w3"], (1, 1), "VALID", dimension_numbers=dn)
    y = jax.nn.relu(y + params["b3"].reshape(1, 120, 1, 1))
    y = y.reshape(y.shape[0], -1)
    y = jax.nn.relu(y @ params["w4"].T + params["b4"])
    return y @ params["w5"].T + params["b5"]


if __name__ == "__main__":
    key = jax.random.PRNGKey(0)
    k_param, k_x = jax.random.split(key)
    params = init_params(k_param)

    # LeNet's geometry fixes the spatial size: (batch=2, C=1, 28, 28).
    x = jax.random.normal(k_x, (2, 1, 28, 28), dtype=jnp.float32)

    out = jax.jit(lenet_forward)(params, x)
    out = jax.block_until_ready(out)

    assert out.shape == (2, 10), out.shape
    assert out.dtype == jnp.float32

    ref = jax.block_until_ready(jax.jit(lenet_reference)(params, x))
    max_err = float(jnp.max(jnp.abs(out - ref)))
    assert max_err < 5e-2, f"max abs error vs reference: {max_err}"

    print("KERNEL_OK")
</pallas_src>

<mosaic_0001>
module attributes {stable_mosaic.version = 11 : i64} {
  func.func @_conv_pool_kernel(%arg0: i32, %arg1: memref<4x392x32xbf16, #tpu.memory_space<vmem>>, %arg2: memref<32x128xbf16, #tpu.memory_space<vmem>>, %arg3: memref<1x128xf32, #tpu.memory_space<vmem>>, %arg4: memref<392x128xbf16, #tpu.memory_space<vmem>>) attributes {dimension_semantics = [#tpu.dimension_semantics<parallel>], iteration_bounds = array<i64: 1>, scalar_prefetch = 0 : i64, scratch_operands = 0 : i64, tpu.core_type = #tpu.core_type<tc>, window_params = [{transform_indices = @transform_0, window_bounds = array<i64: 4, 392, 32>}, {pipeline_mode = #tpu.pipeline_mode<synchronous>, transform_indices = @transform_1, window_bounds = array<i64: 32, 128>}, {pipeline_mode = #tpu.pipeline_mode<synchronous>, transform_indices = @transform_2, window_bounds = array<i64: 1, 128>}, {transform_indices = @transform_3, window_bounds = array<i64: 392, 128>}]} {
    %c0 = arith.constant 0 : index
    %c0_0 = arith.constant 0 : index
    %c0_1 = arith.constant 0 : index
    %0 = vector.load %arg1[%c0, %c0_0, %c0_1] : memref<4x392x32xbf16, #tpu.memory_space<vmem>>, vector<4x392x32xbf16>
    %1 = vector.shape_cast %0 : vector<4x392x32xbf16> to vector<1568x32xbf16>
    %c0_2 = arith.constant 0 : index
    %c0_3 = arith.constant 0 : index
    %2 = vector.load %arg2[%c0_2, %c0_3] : memref<32x128xbf16, #tpu.memory_space<vmem>>, vector<32x128xbf16>
    %cst = arith.constant dense<0.000000e+00> : vector<1568x128xf32>
    %3 = tpu.matmul %1, %2, %cst {dimension_numbers = #tpu.dot_dimension_numbers<[1], [0], [0], [1], [0, 0, 1, 1], [], []>} : vector<1568x32xbf16>, vector<32x128xbf16>, vector<1568x128xf32> -> vector<1568x128xf32>
    %4 = vector.shape_cast %3 : vector<1568x128xf32> to vector<4x392x128xf32>
    %cst_4 = arith.constant dense<0xFF800000> : vector<392x128xf32>
    %5 = vector.multi_reduction <maximumf>, %4, %cst_4 [0] : vector<4x392x128xf32> to vector<392x128xf32>
    %c0_5 = arith.constant 0 : index
    %c0_6 = arith.constant 0 : index
    %6 = vector.load %arg3[%c0_5, %c0_6] : memref<1x128xf32, #tpu.memory_space<vmem>>, vector<1x128xf32>
    %7 = vector.broadcast %6 : vector<1x128xf32> to vector<392x128xf32>
    %8 = arith.addf %5, %7 : vector<392x128xf32>
    %cst_7 = arith.constant 0.000000e+00 : f32
    %9 = vector.broadcast %cst_7 : f32 to vector<392x128xf32>
    %10 = arith.maximumf %8, %9 : vector<392x128xf32>
    %11 = arith.truncf %10 : vector<392x128xf32> to vector<392x128xbf16>
    %c0_8 = arith.constant 0 : index
    %c0_9 = arith.constant 0 : index
    %12 = vector.load %arg4[%c0_8, %c0_9] : memref<392x128xbf16, #tpu.memory_space<vmem>>, vector<392x128xbf16>
    tpu.vector_store %arg4[%c0_8, %c0_9], %11 {strides = array<i32>} : memref<392x128xbf16, #tpu.memory_space<vmem>>, vector<392x128xbf16>,
    return
  }
  func.func @transform_0(%arg0: i32) -> (i32, i32, i32) {
    %c0_i32 = arith.constant 0 : i32
    %c0_i32_0 = arith.constant 0 : i32
    %c0_i32_1 = arith.constant 0 : i32
    return %c0_i32, %arg0, %c0_i32_0 : i32, i32, i32
  }
  func.func @transform_1(%arg0: i32) -> (i32, i32) {
    %c0_i32 = arith.constant 0 : i32
    %c0_i32_0 = arith.constant 0 : i32
    %c0_i32_1 = arith.constant 0 : i32
    return %c0_i32, %c0_i32_0 : i32, i32
  }
  func.func @transform_2(%arg0: i32) -> (i32, i32) {
    %c0_i32 = arith.constant 0 : i32
    %c0_i32_0 = arith.constant 0 : i32
    %c0_i32_1 = arith.constant 0 : i32
    return %c0_i32, %c0_i32_0 : i32, i32
  }
  func.func @transform_3(%arg0: i32) -> (i32, i32) {
    %c0_i32 = arith.constant 0 : i32
    %c0_i32_0 = arith.constant 0 : i32
    return %arg0, %c0_i32 : i32, i32
  }
}

module attributes {stable_mosaic.version = 11 : i64} {
  func.func @_tail_kernel(%arg0: i32, %arg1: memref<4x25x8x160xbf16, #tpu.memory_space<vmem>>, %arg2: memref<160x128xbf16, #tpu.memory_space<vmem>>, %arg3: memref<1x128xf32, #tpu.memory_space<vmem>>, %arg4: memref<3200x128xbf16, #tpu.memory_space<vmem>>, %arg5: memref<1x128xf32, #tpu.memory_space<vmem>>, %arg6: memref<128x128xbf16, #tpu.memory_space<vmem>>, %arg7: memref<1x128xf32, #tpu.memory_space<vmem>>, %arg8: memref<128x128xbf16, #tpu.memory_space<vmem>>, %arg9: memref<1x128xf32, #tpu.memory_space<vmem>>, %arg10: memref<8x128xf32, #tpu.memory_space<vmem>>, %arg11: memref<8x3200xbf16, #tpu.memory_space<vmem>>) attributes {dimension_semantics = [#tpu.dimension_semantics<parallel>], iteration_bounds = array<i64: 1>, scalar_prefetch = 0 : i64, scratch_operands = 1 : i64, tpu.core_type = #tpu.core_type<tc>, window_params = [{transform_indices = @transform_0, window_bounds = array<i64: 4, 25, 8, 160>}, {pipeline_mode = #tpu.pipeline_mode<synchronous>, transform_indices = @transform_1, window_bounds = array<i64: 160, 128>}, {pipeline_mode = #tpu.pipeline_mode<synchronous>, transform_indices = @transform_2, window_bounds = array<i64: 1, 128>}, {pipeline_mode = #tpu.pipeline_mode<synchronous>, transform_indices = @transform_3, window_bounds = array<i64: 3200, 128>}, {pipeline_mode = #tpu.pipeline_mode<synchronous>, transform_indices = @transform_4, window_bounds = array<i64: 1, 128>}, {pipeline_mode = #tpu.pipeline_mode<synchronous>, transform_indices = @transform_5, window_bounds = array<i64: 128, 128>}, {pipeline_mode = #tpu.pipeline_mode<synchronous>, transform_indices = @transform_6, window_bounds = array<i64: 1, 128>}, {pipeline_mode = #tpu.pipeline_mode<synchronous>, transform_indices = @transform_7, window_bounds = array<i64: 128, 128>}, {pipeline_mode = #tpu.pipeline_mode<synchronous>, transform_indices = @transform_8, window_bounds = array<i64: 1, 128>}, {transform_indices = @transform_9, window_bounds = array<i64: 8, 128>}]} {
    %c0 = arith.constant 0 : index
    %c0_0 = arith.constant 0 : index
    %c0_1 = arith.constant 0 : index
    %c0_2 = arith.constant 0 : index
    %0 = vector.load %arg1[%c0, %c0_0, %c0_1, %c0_2] : memref<4x25x8x160xbf16, #tpu.memory_space<vmem>>, vector<4x25x8x160xbf16>
    %1 = vector.shape_cast %0 : vector<4x25x8x160xbf16> to vector<800x160xbf16>
    %c0_3 = arith.constant 0 : index
    %c0_4 = arith.constant 0 : index
    %2 = vector.load %arg2[%c0_3, %c0_4] : memref<160x128xbf16, #tpu.memory_space<vmem>>, vector<160x128xbf16>
    %cst = arith.constant dense<0.000000e+00> : vector<800x128xf32>
    %3 = tpu.matmul %1, %2, %cst {dimension_numbers = #tpu.dot_dimension_numbers<[1], [0], [0], [1], [0, 0, 1, 1], [], []>} : vector<800x160xbf16>, vector<160x128xbf16>, vector<800x128xf32> -> vector<800x128xf32>
    %4 = vector.shape_cast %3 : vector<800x128xf32> to vector<4x200x128xf32>
    %cst_5 = arith.constant dense<0xFF800000> : vector<200x128xf32>
    %5 = vector.multi_reduction <maximumf>, %4, %cst_5 [0] : vector<4x200x128xf32> to vector<200x128xf32>
    %c0_6 = arith.constant 0 : index
    %c0_7 = arith.constant 0 : index
    %6 = vector.load %arg3[%c0_6, %c0_7] : memref<1x128xf32, #tpu.memory_space<vmem>>, vector<1x128xf32>
    %7 = vector.broadcast %6 : vector<1x128xf32> to vector<200x128xf32>
    %8 = arith.addf %5, %7 : vector<200x128xf32>
    %cst_8 = arith.constant 0.000000e+00 : f32
    %9 = vector.broadcast %cst_8 : f32 to vector<200x128xf32>
    %10 = arith.maximumf %8, %9 : vector<200x128xf32>
    %11 = arith.truncf %10 : vector<200x128xf32> to vector<200x128xbf16>
    %12 = vector.extract_strided_slice %11 {offsets = [0, 0], sizes = [8, 128], strides = [1, 1]} : vector<200x128xbf16> to vector<8x128xbf16>
    %c0_9 = arith.constant 0 : index
    %c0_10 = arith.constant 0 : index
    %13 = vector.load %arg11[%c0_9, %c0_10] : memref<8x3200xbf16, #tpu.memory_space<vmem>>, vector<8x128xbf16>
    tpu.vector_store %arg11[%c0_9, %c0_10], %12 {strides = array<i32>} : memref<8x3200xbf16, #tpu.memory_space<vmem>>, vector<8x128xbf16>,
    %14 = vector.extract_strided_slice %11 {offsets = [8, 0], sizes = [8, 128], strides = [1, 1]} : vector<200x128xbf16> to vector<8x128xbf16>
    %c0_11 = arith.constant 0 : index
    %c128 = arith.constant 128 : index
    %15 = vector.load %arg11[%c0_11, %c128] : memref<8x3200xbf16, #tpu.memory_space<vmem>>, vector<8x128xbf16>
    tpu.vector_store %arg11[%c0_11, %c128], %14 {strides = array<i32>} : memref<8x3200xbf16, #tpu.memory_space<vmem>>, vector<8x128xbf16>,
    %16 = vector.extract_strided_slice %11 {offsets = [16, 0], sizes = [8, 128], strides = [1, 1]} : vector<200x128xbf16> to vector<8x128xbf16>
    %c0_12 = arith.constant 0 : index
    %c256 = arith.constant 256 : index
    %17 = vector.load %arg11[%c0_12, %c256] : memref<8x3200xbf16, #tpu.memory_space<vmem>>, vector<8x128xbf16>
    tpu.vector_store %arg11[%c0_12, %c256], %16 {strides = array<i32>} : memref<8x3200xbf16, #tpu.memory_space<vmem>>, vector<8x128xbf16>,
    %18 = vector.extract_strided_slice %11 {offsets = [24, 0], sizes = [8, 128], strides = [1, 1]} : vector<200x128xbf16> to vector<8x128xbf16>
    %c0_13 = arith.constant 0 : index
    %c384 = arith.constant 384 : index
    %19 = vector.load %arg11[%c0_13, %c384] : memref<8x3200xbf16, #tpu.memory_space<vmem>>, vector<8x128xbf16>
    tpu.vector_store %arg11[%c0_13, %c384], %18 {strides = array<i32>} : memref<8x3200xbf16, #tpu.memory_space<vmem>>, vector<8x128xbf16>,
    %20 = vector.extract_strided_slice %11 {offsets = [32, 0], sizes = [8, 128], strides = [1, 1]} : vector<200x128xbf16> to vector<8x128xbf16>
    %c0_14 = arith.constant 0 : index
    %c512 = arith.constant 512 : index
    %21 = vector.load %arg11[%c0_14, %c512] : memref<8x3200xbf16, #tpu.memory_space<vmem>>, vector<8x128xbf16>
    tpu.vector_store %arg11[%c0_14, %c512], %20 {strides = array<i32>} : memref<8x3200xbf16, #tpu.memory_space<vmem>>, vector<8x128xbf16>,
    %22 = vector.extract_strided_slice %11 {offsets = [40, 0], sizes = [8, 128], strides = [1, 1]} : vector<200x128xbf16> to vector<8x128xbf16>
    %c0_15 = arith.constant 0 : index
    %c640 = arith.constant 640 : index
    %23 = vector.load %arg11[%c0_15, %c640] : memref<8x3200xbf16, #tpu.memory_space<vmem>>, vector<8x128xbf16>
    tpu.vector_store %arg11[%c0_15, %c640], %22 {strides = array<i32>} : memref<8x3200xbf16, #tpu.memory_space<vmem>>, vector<8x128xbf16>,
    %24 = vector.extract_strided_slice %11 {offsets = [48, 0], sizes = [8, 128], strides = [1, 1]} : vector<200x128xbf16> to vector<8x128xbf16>
    %c0_16 = arith.constant 0 : index
    %c768 = arith.constant 768 : index
    %25 = vector.load %arg11[%c0_16, %c768] : memref<8x3200xbf16, #tpu.memory_space<vmem>>, vector<8x128xbf16>
    tpu.vector_store %arg11[%c0_16, %c768], %24 {strides = array<i32>} : memref<8x3200xbf16, #tpu.memory_space<vmem>>, vector<8x128xbf16>,
    %26 = vector.extract_strided_slice %11 {offsets = [56, 0], sizes = [8, 128], strides = [1, 1]} : vector<200x128xbf16> to vector<8x128xbf16>
    %c0_17 = arith.constant 0 : index
    %c896 = arith.constant 896 : index
    %27 = vector.load %arg11[%c0_17, %c896] : memref<8x3200xbf16, #tpu.memory_space<vmem>>, vector<8x128xbf16>
    tpu.vector_store %arg11[%c0_17, %c896], %26 {strides = array<i32>} : memref<8x3200xbf16, #tpu.memory_space<vmem>>, vector<8x128xbf16>,
    %28 = vector.extract_strided_slice %11 {offsets = [64, 0], sizes = [8, 128], strides = [1, 1]} : vector<200x128xbf16> to vector<8x128xbf16>
    %c0_18 = arith.constant 0 : index
    %c1024 = arith.constant 1024 : index
    %29 = vector.load %arg11[%c0_18, %c1024] : memref<8x3200xbf16, #tpu.memory_space<vmem>>, vector<8x128xbf16>
    tpu.vector_store %arg11[%c0_18, %c1024], %28 {strides = array<i32>} : memref<8x3200xbf16, #tpu.memory_space<vmem>>, vector<8x128xbf16>,
    %30 = vector.extract_strided_slice %11 {offsets = [72, 0], sizes = [8, 128], strides = [1, 1]} : vector<200x128xbf16> to vector<8x128xbf16>
    %c0_19 = arith.constant 0 : index
    %c1152 = arith.constant 1152 : index
    %31 = vector.load %arg11[%c0_19, %c1152] : memref<8x3200xbf16, #tpu.memory_space<vmem>>, vector<8x128xbf16>
    tpu.vector_store %arg11[%c0_19, %c1152], %30 {strides = array<i32>} : memref<8x3200xbf16, #tpu.memory_space<vmem>>, vector<8x128xbf16>,
    %32 = vector.extract_strided_slice %11 {offsets = [80, 0], sizes = [8, 128], strides = [1, 1]} : vector<200x128xbf16> to vector<8x128xbf16>
    %c0_20 = arith.constant 0 : index
    %c1280 = arith.constant 1280 : index
    %33 = vector.load %arg11[%c0_20, %c1280] : memref<8x3200xbf16, #tpu.memory_space<vmem>>, vector<8x128xbf16>
    tpu.vector_store %arg11[%c0_20, %c1280], %32 {strides = array<i32>} : memref<8x3200xbf16, #tpu.memory_space<vmem>>, vector<8x128xbf16>,
    %34 = vector.extract_strided_slice %11 {offsets = [88, 0], sizes = [8, 128], strides = [1, 1]} : vector<200x128xbf16> to vector<8x128xbf16>
    %c0_21 = arith.constant 0 : index
    %c1408 = arith.constant 1408 : index
    %35 = vector.load %arg11[%c0_21, %c1408] : memref<8x3200xbf16, #tpu.memory_space<vmem>>, vector<8x128xbf16>
    tpu.vector_store %arg11[%c0_21, %c1408], %34 {strides = array<i32>} : memref<8x3200xbf16, #tpu.memory_space<vmem>>, vector<8x128xbf16>,
    %36 = vector.extract_strided_slice %11 {offsets = [96, 0], sizes = [8, 128], strides = [1, 1]} : vector<200x128xbf16> to vector<8x128xbf16>
    %c0_22 = arith.constant 0 : index
    %c1536 = arith.constant 1536 : index
    %37 = vector.load %arg11[%c0_22, %c1536] : memref<8x3200xbf16, #tpu.memory_space<vmem>>, vector<8x128xbf16>
    tpu.vector_store %arg11[%c0_22, %c1536], %36 {strides = array<i32>} : memref<8x3200xbf16, #tpu.memory_space<vmem>>, vector<8x128xbf16>,
    %38 = vector.extract_strided_slice %11 {offsets = [104, 0], sizes = [8, 128], strides = [1, 1]} : vector<200x128xbf16> to vector<8x128xbf16>
    %c0_23 = arith.constant 0 : index
    %c1664 = arith.constant 1664 : index
    %39 = vector.load %arg11[%c0_23, %c1664] : memref<8x3200xbf16, #tpu.memory_space<vmem>>, vector<8x128xbf16>
    tpu.vector_store %arg11[%c0_23, %c1664], %38 {strides = array<i32>} : memref<8x3200xbf16, #tpu.memory_space<vmem>>, vector<8x128xbf16>,
    %40 = vector.extract_strided_slice %11 {offsets = [112, 0], sizes = [8, 128], strides = [1, 1]} : vector<200x128xbf16> to vector<8x128xbf16>
    %c0_24 = arith.constant 0 : index
    %c1792 = arith.constant 1792 : index
    %41 = vector.load %arg11[%c0_24, %c1792] : memref<8x3200xbf16, #tpu.memory_space<vmem>>, vector<8x128xbf16>
    tpu.vector_store %arg11[%c0_24, %c1792], %40 {strides = array<i32>} : memref<8x3200xbf16, #tpu.memory_space<vmem>>, vector<8x128xbf16>,
    %42 = vector.extract_strided_slice %11 {offsets = [120, 0], sizes = [8, 128], strides = [1, 1]} : vector<200x128xbf16> to vector<8x128xbf16>
    %c0_25 = arith.constant 0 : index
    %c1920 = arith.constant 1920 : index
    %43 = vector.load %arg11[%c0_25, %c1920] : memref<8x3200xbf16, #tpu.memory_space<vmem>>, vector<8x128xbf16>
    tpu.vector_store %arg11[%c0_25, %c1920], %42 {strides = array<i32>} : memref<8x3200xbf16, #tpu.memory_space<vmem>>, vector<8x128xbf16>,
    %44 = vector.extract_strided_slice %11 {offsets = [128, 0], sizes = [8, 128], strides = [1, 1]} : vector<200x128xbf16> to vector<8x128xbf16>
    %c0_26 = arith.constant 0 : index
    %c2048 = arith.constant 2048 : index
    %45 = vector.load %arg11[%c0_26, %c2048] : memref<8x3200xbf16, #tpu.memory_space<vmem>>, vector<8x128xbf16>
    tpu.vector_store %arg11[%c0_26, %c2048], %44 {strides = array<i32>} : memref<8x3200xbf16, #tpu.memory_space<vmem>>, vector<8x128xbf16>,
    %46 = vector.extract_strided_slice %11 {offsets = [136, 0], sizes = [8, 128], strides = [1, 1]} : vector<200x128xbf16> to vector<8x128xbf16>
    %c0_27 = arith.constant 0 : index
    %c2176 = arith.constant 2176 : index
    %47 = vector.load %arg11[%c0_27, %c2176] : memref<8x3200xbf16, #tpu.memory_space<vmem>>, vector<8x128xbf16>
    tpu.vector_store %arg11[%c0_27, %c2176], %46 {strides = array<i32>} : memref<8x3200xbf16, #tpu.memory_space<vmem>>, vector<8x128xbf16>,
    %48 = vector.extract_strided_slice %11 {offsets = [144, 0], sizes = [8, 128], strides = [1, 1]} : vector<200x128xbf16> to vector<8x128xbf16>
    %c0_28 = arith.constant 0 : index
    %c2304 = arith.constant 2304 : index
    %49 = vector.load %arg11[%c0_28, %c2304] : memref<8x3200xbf16, #tpu.memory_space<vmem>>, vector<8x128xbf16>
    tpu.vector_store %arg11[%c0_28, %c2304], %48 {strides = array<i32>} : memref<8x3200xbf16, #tpu.memory_space<vmem>>, vector<8x128xbf16>,
    %50 = vector.extract_strided_slice %11 {offsets = [152, 0], sizes = [8, 128], strides = [1, 1]} : vector<200x128xbf16> to vector<8x128xbf16>
    %c0_29 = arith.constant 0 : index
    %c2432 = arith.constant 2432 : index
    %51 = vector.load %arg11[%c0_29, %c2432] : memref<8x3200xbf16, #tpu.memory_space<vmem>>, vector<8x128xbf16>
    tpu.vector_store %arg11[%c0_29, %c2432], %50 {strides = array<i32>} : memref<8x3200xbf16, #tpu.memory_space<vmem>>, vector<8x128xbf16>,
    %52 = vector.extract_strided_slice %11 {offsets = [160, 0], sizes = [8, 128], strides = [1, 1]} : vector<200x128xbf16> to vector<8x128xbf16>
    %c0_30 = arith.constant 0 : index
    %c2560 = arith.constant 2560 : index
    %53 = vector.load %arg11[%c0_30, %c2560] : memref<8x3200xbf16, #tpu.memory_space<vmem>>, vector<8x128xbf16>
    tpu.vector_store %arg11[%c0_30, %c2560], %52 {strides = array<i32>} : memref<8x3200xbf16, #tpu.memory_space<vmem>>, vector<8x128xbf16>,
    %54 = vector.extract_strided_slice %11 {offsets = [168, 0], sizes = [8, 128], strides = [1, 1]} : vector<200x128xbf16> to vector<8x128xbf16>
    %c0_31 = arith.constant 0 : index
    %c2688 = arith.constant 2688 : index
    %55 = vector.load %arg11[%c0_31, %c2688] : memref<8x3200xbf16, #tpu.memory_space<vmem>>, vector<8x128xbf16>
    tpu.vector_store %arg11[%c0_31, %c2688], %54 {strides = array<i32>} : memref<8x3200xbf16, #tpu.memory_space<vmem>>, vector<8x128xbf16>,
    %56 = vector.extract_strided_slice %11 {offsets = [176, 0], sizes = [8, 128], strides = [1, 1]} : vector<200x128xbf16> to vector<8x128xbf16>
    %c0_32 = arith.constant 0 : index
    %c2816 = arith.constant 2816 : index
    %57 = vector.load %arg11[%c0_32, %c2816] : memref<8x3200xbf16, #tpu.memory_space<vmem>>, vector<8x128xbf16>
    tpu.vector_store %arg11[%c0_32, %c2816], %56 {strides = array<i32>} : memref<8x3200xbf16, #tpu.memory_space<vmem>>, vector<8x128xbf16>,
    %58 = vector.extract_strided_slice %11 {offsets = [184, 0], sizes = [8, 128], strides = [1, 1]} : vector<200x128xbf16> to vector<8x128xbf16>
    %c0_33 = arith.constant 0 : index
    %c2944 = arith.constant 2944 : index
    %59 = vector.load %arg11[%c0_33, %c2944] : memref<8x3200xbf16, #tpu.memory_space<vmem>>, vector<8x128xbf16>
    tpu.vector_store %arg11[%c0_33, %c2944], %58 {strides = array<i32>} : memref<8x3200xbf16, #tpu.memory_space<vmem>>, vector<8x128xbf16>,
    %60 = vector.extract_strided_slice %11 {offsets = [192, 0], sizes = [8, 128], strides = [1, 1]} : vector<200x128xbf16> to vector<8x128xbf16>
    %c0_34 = arith.constant 0 : index
    %c3072 = arith.constant 3072 : index
    %61 = vector.load %arg11[%c0_34, %c3072] : memref<8x3200xbf16, #tpu.memory_space<vmem>>, vector<8x128xbf16>
    tpu.vector_store %arg11[%c0_34, %c3072], %60 {strides = array<i32>} : memref<8x3200xbf16, #tpu.memory_space<vmem>>, vector<8x128xbf16>,
    %c0_35 = arith.constant 0 : index
    %c0_36 = arith.constant 0 : index
    %62 = vector.load %arg11[%c0_35, %c0_36] : memref<8x3200xbf16, #tpu.memory_space<vmem>>, vector<8x3200xbf16>
    %c0_37 = arith.constant 0 : index
    %c0_38 = arith.constant 0 : index
    %63 = vector.load %arg4[%c0_37, %c0_38] : memref<3200x128xbf16, #tpu.memory_space<vmem>>, vector<3200x128xbf16>
    %cst_39 = arith.constant dense<0.000000e+00> : vector<8x128xf32>
    %64 = tpu.matmul %62, %63, %cst_39 {dimension_numbers = #tpu.dot_dimension_numbers<[1], [0], [0], [1], [0, 0, 1, 1], [], []>} : vector<8x3200xbf16>, vector<3200x128xbf16>, vector<8x128xf32> -> vector<8x128xf32>
    %c0_40 = arith.constant 0 : index
    %c0_41 = arith.constant 0 : index
    %65 = vector.load %arg5[%c0_40, %c0_41] : memref<1x128xf32, #tpu.memory_space<vmem>>, vector<1x128xf32>
    %66 = vector.broadcast %65 : vector<1x128xf32> to vector<8x128xf32>
    %67 = arith.addf %64, %66 : vector<8x128xf32>
    %cst_42 = arith.constant 0.000000e+00 : f32
    %68 = vector.broadcast %cst_42 : f32 to vector<8x128xf32>
    %69 = arith.maximumf %67, %68 : vector<8x128xf32>
    %70 = arith.truncf %69 : vector<8x128xf32> to vector<8x128xbf16>
    %c0_43 = arith.constant 0 : index
    %c0_44 = arith.constant 0 : index
    %71 = vector.load %arg6[%c0_43, %c0_44] : memref<128x128xbf16, #tpu.memory_space<vmem>>, vector<128x128xbf16>
    %cst_45 = arith.constant dense<0.000000e+00> : vector<8x128xf32>
    %72 = tpu.matmul %70, %71, %cst_45 {dimension_numbers = #tpu.dot_dimension_numbers<[1], [0], [0], [1], [0, 0, 1, 1], [], []>} : vector<8x128xbf16>, vector<128x128xbf16>, vector<8x128xf32> -> vector<8x128xf32>
    %c0_46 = arith.constant 0 : index
    %c0_47 = arith.constant 0 : index
    %73 = vector.load %arg7[%c0_46, %c0_47] : memref<1x128xf32, #tpu.memory_space<vmem>>, vector<1x128xf32>
    %74 = vector.broadcast %73 : vector<1x128xf32> to vector<8x128xf32>
    %75 = arith.addf %72, %74 : vector<8x128xf32>
    %cst_48 = arith.constant 0.000000e+00 : f32
    %76 = vector.broadcast %cst_48 : f32 to vector<8x128xf32>
    %77 = arith.maximumf %75, %76 : vector<8x128xf32>
    %78 = arith.truncf %77 : vector<8x128xf32> to vector<8x128xbf16>
    %c0_49 = arith.constant 0 : index
    %c0_50 = arith.constant 0 : index
    %79 = vector.load %arg8[%c0_49, %c0_50] : memref<128x128xbf16, #tpu.memory_space<vmem>>, vector<128x128xbf16>
    %cst_51 = arith.constant dense<0.000000e+00> : vector<8x128xf32>
    %80 = tpu.matmul %78, %79, %cst_51 {dimension_numbers = #tpu.dot_dimension_numbers<[1], [0], [0], [1], [0, 0, 1, 1], [], []>} : vector<8x128xbf16>, vector<128x128xbf16>, vector<8x128xf32> -> vector<8x128xf32>
    %c0_52 = arith.constant 0 : index
    %c0_53 = arith.constant 0 : index
    %81 = vector.load %arg9[%c0_52, %c0_53] : memref<1x128xf32, #tpu.memory_space<vmem>>, vector<1x128xf32>
    %82 = vector.broadcast %81 : vector<1x128xf32> to vector<8x128xf32>
    %83 = arith.addf %80, %82 : vector<8x128xf32>
    %c0_54 = arith.constant 0 : index
    %c0_55 = arith.constant 0 : index
    %84 = vector.load %arg10[%c0_54, %c0_55] : memref<8x128xf32, #tpu.memory_space<vmem>>, vector<8x128xf32>
    tpu.vector_store %arg10[%c0_54, %c0_55], %83 {strides = array<i32>} : memref<8x128xf32, #tpu.memory_space<vmem>>, vector<8x128xf32>,
    return
  }
  func.func @transform_0(%arg0: i32) -> (i32, i32, i32, i32) {
    %c0_i32 = arith.constant 0 : i32
    %c0_i32_0 = arith.constant 0 : i32
    %c0_i32_1 = arith.constant 0 : i32
    %c0_i32_2 = arith.constant 0 : i32
    return %c0_i32, %c0_i32_0, %arg0, %c0_i32_1 : i32, i32, i32, i32
  }
  func.func @transform_1(%arg0: i32) -> (i32, i32) {
    %c0_i32 = arith.constant 0 : i32
    %c0_i32_0 = arith.constant 0 : i32
    %c0_i32_1 = arith.constant 0 : i32
    return %c0_i32, %c0_i32_0 : i32, i32
  }
  func.func @transform_2(%arg0: i32) -> (i32, i32) {
    %c0_i32 = arith.constant 0 : i32
    %c0_i32_0 = arith.constant 0 : i32
    %c0_i32_1 = arith.constant 0 : i32
    return %c0_i32, %c0_i32_0 : i32, i32
  }
  func.func @transform_3(%arg0: i32) -> (i32, i32) {
    %c0_i32 = arith.constant 0 : i32
    %c0_i32_0 = arith.constant 0 : i32
    %c0_i32_1 = arith.constant 0 : i32
    return %c0_i32, %c0_i32_0 : i32, i32
  }
  func.func @transform_4(%arg0: i32) -> (i32, i32) {
    %c0_i32 = arith.constant 0 : i32
    %c0_i32_0 = arith.constant 0 : i32
    %c0_i32_1 = arith.constant 0 : i32
    return %c0_i32, %c0_i32_0 : i32, i32
  }
  func.func @transform_5(%arg0: i32) -> (i32, i32) {
    %c0_i32 = arith.constant 0 : i32
    %c0_i32_0 = arith.constant 0 : i32
    %c0_i32_1 = arith.constant 0 : i32
    return %c0_i32, %c0_i32_0 : i32, i32
  }
  func.func @transform_6(%arg0: i32) -> (i32, i32) {
    %c0_i32 = arith.constant 0 : i32
    %c0_i32_0 = arith.constant 0 : i32
    %c0_i32_1 = arith.constant 0 : i32
    return %c0_i32, %c0_i32_0 : i32, i32
  }
  func.func @transform_7(%arg0: i32) -> (i32, i32) {
    %c0_i32 = arith.constant 0 : i32
    %c0_i32_0 = arith.constant 0 : i32
    %c0_i32_1 = arith.constant 0 : i32
    return %c0_i32, %c0_i32_0 : i32, i32
  }
  func.func @transform_8(%arg0: i32) -> (i32, i32) {
    %c0_i32 = arith.constant 0 : i32
    %c0_i32_0 = arith.constant 0 : i32
    %c0_i32_1 = arith.constant 0 : i32
    return %c0_i32, %c0_i32_0 : i32, i32
  }
  func.func @transform_9(%arg0: i32) -> (i32, i32) {
    %c0_i32 = arith.constant 0 : i32
    %c0_i32_0 = arith.constant 0 : i32
    return %arg0, %c0_i32 : i32, i32
  }
}

</mosaic_0001>

<llo_original>
// kernel: lenet_forward.2
$region0: #{lenet_forward.2}
  #allocation0 [shape = 'u32[]', space=smem, size = 0x4, offset = 0x4, fixed_abs, tag = 'smem constant byte address 0x4 - core index']
  #allocation1 [shape = 'u32[72,128]{1,0:T(1,128)}', space=vmem, size = 0x9000, scoped, tag = 'internal scratch']
  %s0 = inlined_call_operand.vmem [shape: bf16[4,392,32], index: 0, kind: input, shape index: {}]
  %s1 = inlined_call_operand.vmem [shape: bf16[32,128], index: 1, kind: input, shape index: {}]
  %s2 = inlined_call_operand.vmem [shape: f32[1,128], index: 2, kind: input, shape index: {}]
  %s3 = inlined_call_operand.vmem [shape: bf16[392,128], index: 3, kind: output, shape index: {}]
  %s4 = sld [smem:[#allocation0]]
  $region22: #{lenet_forward.2} parent=0
    _
  %s6 = ssub.s32 1, %s4
  %s7 = scalar_select 0, %s6, %s4
  // Predicated region
  $region2: #{lenet_forward.2} parent=0 // pred_check
    _
  $region3: #{lenet_forward.2} parent=0 // pred_check_branch
    %9 = sbr.rel (0) target = $region5
  $region4: #{lenet_forward.2} parent=0 // pred_region
    _
  $region5: #{lenet_forward.2} parent=0 // pred_fallthru
    _
  // Predicated region
  $region6: #{lenet_forward.2} parent=0 // pred_check
    _
  $region7: #{lenet_forward.2} parent=0 // pred_check_branch
    %11 = sbr.rel (0) target = $region9
  $region8: #{lenet_forward.2} parent=0 // pred_region
    _
  $region9: #{lenet_forward.2} parent=0 // pred_fallthru
    _
  // Predicated region
  $region10: #{lenet_forward.2} parent=0 // pred_check
    _
  $region11: #{lenet_forward.2} parent=0 // pred_check_branch
    %13 = sbr.rel (0) target = $region13
  $region12: #{lenet_forward.2} parent=0 // pred_region
    _
  $region13: #{lenet_forward.2} parent=0 // pred_fallthru
    _
  %v15 = vld [vmem:[%s0] sm:$0xf]
  %v16 = vld [vmem:[%s0 + $0x4] sm:$0xf]
  %v17 = vld [vmem:[%s0 + $0x8] sm:$0xf]
  %v18 = vld [vmem:[%s0 + $0xc] sm:$0xf]
  %v19 = vld [vmem:[%s0 + $0x10] sm:$0xf]
  %v20 = vld [vmem:[%s0 + $0x14] sm:$0xf]
  %v21 = vld [vmem:[%s0 + $0x18] sm:$0xf]
  %v22 = vld [vmem:[%s0 + $0x1c] sm:$0xf]
  %v23 = vld [vmem:[%s0 + $0x20] sm:$0xf]
  %v24 = vld [vmem:[%s0 + $0x24] sm:$0xf]
  %v25 = vld [vmem:[%s0 + $0x28] sm:$0xf]
  %v26 = vld [vmem:[%s0 + $0x2c] sm:$0xf]
  %v27 = vld [vmem:[%s0 + $0x30] sm:$0xf]
  %v28 = vld [vmem:[%s0 + $0x34] sm:$0xf]
  %v29 = vld [vmem:[%s0 + $0x38] sm:$0xf]
  %v30 = vld [vmem:[%s0 + $0x3c] sm:$0xf]
  %v31 = vld [vmem:[%s0 + $0x40] sm:$0xf]
  %v32 = vld [vmem:[%s0 + $0x44] sm:$0xf]
  %v33 = vld [vmem:[%s0 + $0x48] sm:$0xf]
  %v34 = vld [vmem:[%s0 + $0x4c] sm:$0xf]
  %v35 = vld [vmem:[%s0 + $0x50] sm:$0xf]
  %v36 = vld [vmem:[%s0 + $0x54] sm:$0xf]
  %v37 = vld [vmem:[%s0 + $0x58] sm:$0xf]
  %v38 = vld [vmem:[%s0 + $0x5c] sm:$0xf]
  %v39 = vld [vmem:[%s0 + $0x60] sm:$0xf]
  %v40 = vld [vmem:[%s0 + $0x64] sm:$0xf]
  %v41 = vld [vmem:[%s0 + $0x68] sm:$0xf]
  %v42 = vld [vmem:[%s0 + $0x6c] sm:$0xf]
  %v43 = vld [vmem:[%s0 + $0x70] sm:$0xf]
  %v44 = vld [vmem:[%s0 + $0x74] sm:$0xf]
  %v45 = vld [vmem:[%s0 + $0x78] sm:$0xf]
  %v46 = vld [vmem:[%s0 + $0x7c] sm:$0xf]
  %v47 = vld [vmem:[%s0 + $0x80] sm:$0xf]
  %v48 = vld [vmem:[%s0 + $0x84] sm:$0xf]
  %v49 = vld [vmem:[%s0 + $0x88] sm:$0xf]
  %v50 = vld [vmem:[%s0 + $0x8c] sm:$0xf]
  %v51 = vld [vmem:[%s0 + $0x90] sm:$0xf]
  %v52 = vld [vmem:[%s0 + $0x94] sm:$0xf]
  %v53 = vld [vmem:[%s0 + $0x98] sm:$0xf]
  %v54 = vld [vmem:[%s0 + $0x9c] sm:$0xf]
  %v55 = vld [vmem:[%s0 + $0xa0] sm:$0xf]
  %v56 = vld [vmem:[%s0 + $0xa4] sm:$0xf]
  %v57 = vld [vmem:[%s0 + $0xa8] sm:$0xf]
  %v58 = vld [vmem:[%s0 + $0xac] sm:$0xf]
  %v59 = vld [vmem:[%s0 + $0xb0] sm:$0xf]
  %v60 = vld [vmem:[%s0 + $0xb4] sm:$0xf]
  %v61 = vld [vmem:[%s0 + $0xb8] sm:$0xf]
  %v62 = vld [vmem:[%s0 + $0xbc] sm:$0xf]
  %v63 = vld [vmem:[%s0 + $0xc0] sm:$0xf]
  %v64 = vld [vmem:[%s0 + $0xc4] sm:$0xf]
  %v65 = vld [vmem:[%s0 + $0xc8] sm:$0xf]
  %v66 = vld [vmem:[%s0 + $0xcc] sm:$0xf]
  %v67 = vld [vmem:[%s0 + $0xd0] sm:$0xf]
  %v68 = vld [vmem:[%s0 + $0xd4] sm:$0xf]
  %v69 = vld [vmem:[%s0 + $0xd8] sm:$0xf]
  %v70 = vld [vmem:[%s0 + $0xdc] sm:$0xf]
  %v71 = vld [vmem:[%s0 + $0xe0] sm:$0xf]
  %v72 = vld [vmem:[%s0 + $0xe4] sm:$0xf]
  %v73 = vld [vmem:[%s0 + $0xe8] sm:$0xf]
  %v74 = vld [vmem:[%s0 + $0xec] sm:$0xf]
  %v75 = vld [vmem:[%s0 + $0xf0] sm:$0xf]
  %v76 = vld [vmem:[%s0 + $0xf4] sm:$0xf]
  %v77 = vld [vmem:[%s0 + $0xf8] sm:$0xf]
  %v78 = vld [vmem:[%s0 + $0xfc] sm:$0xf]
  %v79 = vld [vmem:[%s0 + $0x100] sm:$0xf]
  %v80 = vld [vmem:[%s0 + $0x104] sm:$0xf]
  %v81 = vld [vmem:[%s0 + $0x108] sm:$0xf]
  %v82 = vld [vmem:[%s0 + $0x10c] sm:$0xf]
  %v83 = vld [vmem:[%s0 + $0x110] sm:$0xf]
  %v84 = vld [vmem:[%s0 + $0x114] sm:$0xf]
  %v85 = vld [vmem:[%s0 + $0x118] sm:$0xf]
  %v86 = vld [vmem:[%s0 + $0x11c] sm:$0xf]
  %v87 = vld [vmem:[%s0 + $0x120] sm:$0xf]
  %v88 = vld [vmem:[%s0 + $0x124] sm:$0xf]
  %v89 = vld [vmem:[%s0 + $0x128] sm:$0xf]
  %v90 = vld [vmem:[%s0 + $0x12c] sm:$0xf]
  %v91 = vld [vmem:[%s0 + $0x130] sm:$0xf]
  %v92 = vld [vmem:[%s0 + $0x134] sm:$0xf]
  %v93 = vld [vmem:[%s0 + $0x138] sm:$0xf]
  %v94 = vld [vmem:[%s0 + $0x13c] sm:$0xf]
  %v95 = vld [vmem:[%s0 + $0x140] sm:$0xf]
  %v96 = vld [vmem:[%s0 + $0x144] sm:$0xf]
  %v97 = vld [vmem:[%s0 + $0x148] sm:$0xf]
  %v98 = vld [vmem:[%s0 + $0x14c] sm:$0xf]
  %v99 = vld [vmem:[%s0 + $0x150] sm:$0xf]
  %v100 = vld [vmem:[%s0 + $0x154] sm:$0xf]
  %v101 = vld [vmem:[%s0 + $0x158] sm:$0xf]
  %v102 = vld [vmem:[%s0 + $0x15c] sm:$0xf]
  %v103 = vld [vmem:[%s0 + $0x160] sm:$0xf]
  %v104 = vld [vmem:[%s0 + $0x164] sm:$0xf]
  %v105 = vld [vmem:[%s0 + $0x168] sm:$0xf]
  %v106 = vld [vmem:[%s0 + $0x16c] sm:$0xf]
  %v107 = vld [vmem:[%s0 + $0x170] sm:$0xf]
  %v108 = vld [vmem:[%s0 + $0x174] sm:$0xf]
  %v109 = vld [vmem:[%s0 + $0x178] sm:$0xf]
  %v110 = vld [vmem:[%s0 + $0x17c] sm:$0xf]
  %v111 = vld [vmem:[%s0 + $0x180] sm:$0xf]
  %v112 = vld [vmem:[%s0 + $0x184] sm:$0xf]
  %v113 = vld [vmem:[%s0 + $0x188] sm:$0xf]
  %v114 = vld [vmem:[%s0 + $0x18c] sm:$0xf]
  %v115 = vld [vmem:[%s0 + $0x190] sm:$0xf]
  %v116 = vld [vmem:[%s0 + $0x194] sm:$0xf]
  %v117 = vld [vmem:[%s0 + $0x198] sm:$0xf]
  %v118 = vld [vmem:[%s0 + $0x19c] sm:$0xf]
  %v119 = vld [vmem:[%s0 + $0x1a0] sm:$0xf]
  %v120 = vld [vmem:[%s0 + $0x1a4] sm:$0xf]
  %v121 = vld [vmem:[%s0 + $0x1a8] sm:$0xf]
  %v122 = vld [vmem:[%s0 + $0x1ac] sm:$0xf]
  %v123 = vld [vmem:[%s0 + $0x1b0] sm:$0xf]
  %v124 = vld [vmem:[%s0 + $0x1b4] sm:$0xf]
  %v125 = vld [vmem:[%s0 + $0x1b8] sm:$0xf]
  %v126 = vld [vmem:[%s0 + $0x1bc] sm:$0xf]
  %v127 = vld [vmem:[%s0 + $0x1c0] sm:$0xf]
  %v128 = vld [vmem:[%s0 + $0x1c4] sm:$0xf]
  %v129 = vld [vmem:[%s0 + $0x1c8] sm:$0xf]
  %v130 = vld [vmem:[%s0 + $0x1cc] sm:$0xf]
  %v131 = vld [vmem:[%s0 + $0x1d0] sm:$0xf]
  %v132 = vld [vmem:[%s0 + $0x1d4] sm:$0xf]
  %v133 = vld [vmem:[%s0 + $0x1d8] sm:$0xf]
  %v134 = vld [vmem:[%s0 + $0x1dc] sm:$0xf]
  %v135 = vld [vmem:[%s0 + $0x1e0] sm:$0xf]
  %v136 = vld [vmem:[%s0 + $0x1e4] sm:$0xf]
  %v137 = vld [vmem:[%s0 + $0x1e8] sm:$0xf]
  %v138 = vld [vmem:[%s0 + $0x1ec] sm:$0xf]
  %v139 = vld [vmem:[%s0 + $0x1f0] sm:$0xf]
  %v140 = vld [vmem:[%s0 + $0x1f4] sm:$0xf]
  %v141 = vld [vmem:[%s0 + $0x1f8] sm:$0xf]
  %v142 = vld [vmem:[%s0 + $0x1fc] sm:$0xf]
  %v143 = vld [vmem:[%s0 + $0x200] sm:$0xf]
  %v144 = vld [vmem:[%s0 + $0x204] sm:$0xf]
  %v145 = vld [vmem:[%s0 + $0x208] sm:$0xf]
  %v146 = vld [vmem:[%s0 + $0x20c] sm:$0xf]
  %v147 = vld [vmem:[%s0 + $0x210] sm:$0xf]
  %v148 = vld [vmem:[%s0 + $0x214] sm:$0xf]
  %v149 = vld [vmem:[%s0 + $0x218] sm:$0xf]
  %v150 = vld [vmem:[%s0 + $0x21c] sm:$0xf]
  %v151 = vld [vmem:[%s0 + $0x220] sm:$0xf]
  %v152 = vld [vmem:[%s0 + $0x224] sm:$0xf]
  %v153 = vld [vmem:[%s0 + $0x228] sm:$0xf]
  %v154 = vld [vmem:[%s0 + $0x22c] sm:$0xf]
  %v155 = vld [vmem:[%s0 + $0x230] sm:$0xf]
  %v156 = vld [vmem:[%s0 + $0x234] sm:$0xf]
  %v157 = vld [vmem:[%s0 + $0x238] sm:$0xf]
  %v158 = vld [vmem:[%s0 + $0x23c] sm:$0xf]
  %v159 = vld [vmem:[%s0 + $0x240] sm:$0xf]
  %v160 = vld [vmem:[%s0 + $0x244] sm:$0xf]
  %v161 = vld [vmem:[%s0 + $0x248] sm:$0xf]
  %v162 = vld [vmem:[%s0 + $0x24c] sm:$0xf]
  %v163 = vld [vmem:[%s0 + $0x250] sm:$0xf]
  %v164 = vld [vmem:[%s0 + $0x254] sm:$0xf]
  %v165 = vld [vmem:[%s0 + $0x258] sm:$0xf]
  %v166 = vld [vmem:[%s0 + $0x25c] sm:$0xf]
  %v167 = vld [vmem:[%s0 + $0x260] sm:$0xf]
  %v168 = vld [vmem:[%s0 + $0x264] sm:$0xf]
  %v169 = vld [vmem:[%s0 + $0x268] sm:$0xf]
  %v170 = vld [vmem:[%s0 + $0x26c] sm:$0xf]
  %v171 = vld [vmem:[%s0 + $0x270] sm:$0xf]
  %v172 = vld [vmem:[%s0 + $0x274] sm:$0xf]
  %v173 = vld [vmem:[%s0 + $0x278] sm:$0xf]
  %v174 = vld [vmem:[%s0 + $0x27c] sm:$0xf]
  %v175 = vld [vmem:[%s0 + $0x280] sm:$0xf]
  %v176 = vld [vmem:[%s0 + $0x284] sm:$0xf]
  %v177 = vld [vmem:[%s0 + $0x288] sm:$0xf]
  %v178 = vld [vmem:[%s0 + $0x28c] sm:$0xf]
  %v179 = vld [vmem:[%s0 + $0x290] sm:$0xf]
  %v180 = vld [vmem:[%s0 + $0x294] sm:$0xf]
  %v181 = vld [vmem:[%s0 + $0x298] sm:$0xf]
  %v182 = vld [vmem:[%s0 + $0x29c] sm:$0xf]
  %v183 = vld [vmem:[%s0 + $0x2a0] sm:$0xf]
  %v184 = vld [vmem:[%s0 + $0x2a4] sm:$0xf]
  %v185 = vld [vmem:[%s0 + $0x2a8] sm:$0xf]
  %v186 = vld [vmem:[%s0 + $0x2ac] sm:$0xf]
  %v187 = vld [vmem:[%s0 + $0x2b0] sm:$0xf]
  %v188 = vld [vmem:[%s0 + $0x2b4] sm:$0xf]
  %v189 = vld [vmem:[%s0 + $0x2b8] sm:$0xf]
  %v190 = vld [vmem:[%s0 + $0x2bc] sm:$0xf]
  %v191 = vld [vmem:[%s0 + $0x2c0] sm:$0xf]
  %v192 = vld [vmem:[%s0 + $0x2c4] sm:$0xf]
  %v193 = vld [vmem:[%s0 + $0x2c8] sm:$0xf]
  %v194 = vld [vmem:[%s0 + $0x2cc] sm:$0xf]
  %v195 = vld [vmem:[%s0 + $0x2d0] sm:$0xf]
  %v196 = vld [vmem:[%s0 + $0x2d4] sm:$0xf]
  %v197 = vld [vmem:[%s0 + $0x2d8] sm:$0xf]
  %v198 = vld [vmem:[%s0 + $0x2dc] sm:$0xf]
  %v199 = vld [vmem:[%s0 + $0x2e0] sm:$0xf]
  %v200 = vld [vmem:[%s0 + $0x2e4] sm:$0xf]
  %v201 = vld [vmem:[%s0 + $0x2e8] sm:$0xf]
  %v202 = vld [vmem:[%s0 + $0x2ec] sm:$0xf]
  %v203 = vld [vmem:[%s0 + $0x2f0] sm:$0xf]
  %v204 = vld [vmem:[%s0 + $0x2f4] sm:$0xf]
  %v205 = vld [vmem:[%s0 + $0x2f8] sm:$0xf]
  %v206 = vld [vmem:[%s0 + $0x2fc] sm:$0xf]
  %v207 = vld [vmem:[%s0 + $0x300] sm:$0xf]
  %v208 = vld [vmem:[%s0 + $0x304] sm:$0xf]
  %v209 = vld [vmem:[%s0 + $0x308] sm:$0xf]
  %v210 = vld [vmem:[%s0 + $0x30c] sm:$0xf]
  %v211 = vld [vmem:[%s1] sm:$0xf]
  %v212 = vld [vmem:[%s1 + $0x4] sm:$0xf]
  %v213 = vld [vmem:[%s1 + $0x8] sm:$0xf]
  %v214 = vld [vmem:[%s1 + $0xc] sm:$0xf]
  %v411 = vunpack.c.l.b16 %v15
  %v412 = vunpack.c.l.b16 %v16
  %v413 = vunpack.c.l.b16 %v17
  %v414 = vunpack.c.l.b16 %v18
  %v415 = vunpack.c.l.b16 %v19
  %v416 = vunpack.c.l.b16 %v20
  %v417 = vunpack.c.l.b16 %v21
  %v418 = vunpack.c.l.b16 %v22
  %v419 = vunpack.c.l.b16 %v23
  %v420 = vunpack.c.l.b16 %v24
  %v421 = vunpack.c.l.b16 %v25
  %v422 = vunpack.c.l.b16 %v26
  %v423 = vunpack.c.l.b16 %v27
  %v424 = vunpack.c.l.b16 %v28
  %v425 = vunpack.c.l.b16 %v29
  %v426 = vunpack.c.l.b16 %v30
  %v427 = vunpack.c.l.b16 %v31
  %v428 = vunpack.c.l.b16 %v32
  %v429 = vunpack.c.l.b16 %v33
  %v430 = vunpack.c.l.b16 %v34
  %v431 = vunpack.c.l.b16 %v35
  %v432 = vunpack.c.l.b16 %v36
  %v433 = vunpack.c.l.b16 %v37
  %v434 = vunpack.c.l.b16 %v38
  %v435 = vunpack.c.l.b16 %v39
  %v436 = vunpack.c.l.b16 %v40
  %v437 = vunpack.c.l.b16 %v41
  %v438 = vunpack.c.l.b16 %v42
  %v439 = vunpack.c.l.b16 %v43
  %v440 = vunpack.c.l.b16 %v44
  %v441 = vunpack.c.l.b16 %v45
  %v442 = vunpack.c.l.b16 %v46
  %v443 = vunpack.c.l.b16 %v47
  %v444 = vunpack.c.l.b16 %v48
  %v445 = vunpack.c.l.b16 %v49
  %v446 = vunpack.c.l.b16 %v50
  %v447 = vunpack.c.l.b16 %v51
  %v448 = vunpack.c.l.b16 %v52
  %v449 = vunpack.c.l.b16 %v53
  %v450 = vunpack.c.l.b16 %v54
  %v451 = vunpack.c.l.b16 %v55
  %v452 = vunpack.c.l.b16 %v56
  %v453 = vunpack.c.l.b16 %v57
  %v454 = vunpack.c.l.b16 %v58
  %v455 = vunpack.c.l.b16 %v59
  %v456 = vunpack.c.l.b16 %v60
  %v457 = vunpack.c.l.b16 %v61
  %v458 = vunpack.c.l.b16 %v62
  %v459 = vunpack.c.l.b16 %v63
  %v460 = vunpack.c.l.b16 %v64
  %v461 = vunpack.c.l.b16 %v65
  %v462 = vunpack.c.l.b16 %v66
  %v463 = vunpack.c.l.b16 %v67
  %v464 = vunpack.c.l.b16 %v68
  %v465 = vunpack.c.l.b16 %v69
  %v466 = vunpack.c.l.b16 %v70
  %v467 = vunpack.c.l.b16 %v71
  %v468 = vunpack.c.l.b16 %v72
  %v469 = vunpack.c.l.b16 %v73
  %v470 = vunpack.c.l.b16 %v74
  %v471 = vunpack.c.l.b16 %v75
  %v472 = vunpack.c.l.b16 %v76
  %v473 = vunpack.c.l.b16 %v77
  %v474 = vunpack.c.l.b16 %v78
  %v475 = vunpack.c.l.b16 %v79
  %v476 = vunpack.c.l.b16 %v80
  %v477 = vunpack.c.l.b16 %v81
  %v478 = vunpack.c.l.b16 %v82
  %v479 = vunpack.c.l.b16 %v83
  %v480 = vunpack.c.l.b16 %v84
  %v481 = vunpack.c.l.b16 %v85
  %v482 = vunpack.c.l.b16 %v86
  %v483 = vunpack.c.l.b16 %v87
  %v484 = vunpack.c.l.b16 %v88
  %v485 = vunpack.c.l.b16 %v89
  %v486 = vunpack.c.l.b16 %v90
  %v487 = vunpack.c.l.b16 %v91
  %v488 = vunpack.c.l.b16 %v92
  %v489 = vunpack.c.l.b16 %v93
  %v490 = vunpack.c.l.b16 %v94
  %v491 = vunpack.c.l.b16 %v95
  %v492 = vunpack.c.l.b16 %v96
  %v493 = vunpack.c.l.b16 %v97
  %v494 = vunpack.c.l.b16 %v98
  %v495 = vunpack.c.l.b16 %v99
  %v496 = vunpack.c.l.b16 %v100
  %v497 = vunpack.c.l.b16 %v101
  %v498 = vunpack.c.l.b16 %v102
  %v499 = vunpack.c.l.b16 %v103
  %v500 = vunpack.c.l.b16 %v104
  %v501 = vunpack.c.l.b16 %v105
  %v502 = vunpack.c.l.b16 %v106
  %v503 = vunpack.c.l.b16 %v107
  %v504 = vunpack.c.l.b16 %v108
  %v505 = vunpack.c.l.b16 %v109
  %v506 = vunpack.c.l.b16 %v110
  %v507 = vunpack.c.l.b16 %v111
  %v508 = vunpack.c.l.b16 %v112
  %v509 = vunpack.c.l.b16 %v113
  %v510 = vunpack.c.l.b16 %v114
  %v511 = vunpack.c.l.b16 %v115
  %v512 = vunpack.c.l.b16 %v116
  %v513 = vunpack.c.l.b16 %v117
  %v514 = vunpack.c.l.b16 %v118
  %v515 = vunpack.c.l.b16 %v119
  %v516 = vunpack.c.l.b16 %v120
  %v517 = vunpack.c.l.b16 %v121
  %v518 = vunpack.c.l.b16 %v122
  %v519 = vunpack.c.l.b16 %v123
  %v520 = vunpack.c.l.b16 %v124
  %v521 = vunpack.c.l.b16 %v125
  %v522 = vunpack.c.l.b16 %v126
  %v523 = vunpack.c.l.b16 %v127
  %v524 = vunpack.c.l.b16 %v128
  %v525 = vunpack.c.l.b16 %v129
  %v526 = vunpack.c.l.b16 %v130
  %v527 = vunpack.c.l.b16 %v131
  %v528 = vunpack.c.l.b16 %v132
  %v529 = vunpack.c.l.b16 %v133
  %v530 = vunpack.c.l.b16 %v134
  %v531 = vunpack.c.l.b16 %v135
  %v532 = vunpack.c.l.b16 %v136
  %v533 = vunpack.c.l.b16 %v137
  %v534 = vunpack.c.l.b16 %v138
  %v535 = vunpack.c.l.b16 %v139
  %v536 = vunpack.c.l.b16 %v140
  %v537 = vunpack.c.l.b16 %v141
  %v538 = vunpack.c.l.b16 %v142
  %v539 = vunpack.c.l.b16 %v143
  %v540 = vunpack.c.l.b16 %v144
  %v541 = vunpack.c.l.b16 %v145
  %v542 = vunpack.c.l.b16 %v146
  %v543 = vunpack.c.l.b16 %v147
  %v544 = vunpack.c.l.b16 %v148
  %v545 = vunpack.c.l.b16 %v149
  %v546 = vunpack.c.l.b16 %v150
  %v547 = vunpack.c.l.b16 %v151
  %v548 = vunpack.c.l.b16 %v152
  %v549 = vunpack.c.l.b16 %v153
  %v550 = vunpack.c.l.b16 %v154
  %v551 = vunpack.c.l.b16 %v155
  %v552 = vunpack.c.l.b16 %v156
  %v553 = vunpack.c.l.b16 %v157
  %v554 = vunpack.c.l.b16 %v158
  %v555 = vunpack.c.l.b16 %v159
  %v556 = vunpack.c.l.b16 %v160
  %v557 = vunpack.c.l.b16 %v161
  %v558 = vunpack.c.l.b16 %v162
  %v559 = vunpack.c.l.b16 %v163
  %v560 = vunpack.c.l.b16 %v164
  %v561 = vunpack.c.l.b16 %v165
  %v562 = vunpack.c.l.b16 %v166
  %v563 = vunpack.c.l.b16 %v167
  %v564 = vunpack.c.l.b16 %v168
  %v565 = vunpack.c.l.b16 %v169
  %v566 = vunpack.c.l.b16 %v170
  %v567 = vunpack.c.l.b16 %v171
  %v568 = vunpack.c.l.b16 %v172
  %v569 = vunpack.c.l.b16 %v173
  %v570 = vunpack.c.l.b16 %v174
  %v571 = vunpack.c.l.b16 %v175
  %v572 = vunpack.c.l.b16 %v176
  %v573 = vunpack.c.l.b16 %v177
  %v574 = vunpack.c.l.b16 %v178
  %v575 = vunpack.c.l.b16 %v179
  %v576 = vunpack.c.l.b16 %v180
  %v577 = vunpack.c.l.b16 %v181
  %v578 = vunpack.c.l.b16 %v182
  %v579 = vunpack.c.l.b16 %v183
  %v580 = vunpack.c.l.b16 %v184
  %v581 = vunpack.c.l.b16 %v185
  %v582 = vunpack.c.l.b16 %v186
  %v583 = vunpack.c.l.b16 %v187
  %v584 = vunpack.c.l.b16 %v188
  %v585 = vunpack.c.l.b16 %v189
  %v586 = vunpack.c.l.b16 %v190
  %v587 = vunpack.c.l.b16 %v191
  %v588 = vunpack.c.l.b16 %v192
  %v589 = vunpack.c.l.b16 %v193
  %v590 = vunpack.c.l.b16 %v194
  %v591 = vunpack.c.l.b16 %v195
  %v592 = vunpack.c.l.b16 %v196
  %v593 = vunpack.c.l.b16 %v197
  %v594 = vunpack.c.l.b16 %v198
  %v595 = vunpack.c.l.b16 %v199
  %v596 = vunpack.c.l.b16 %v200
  %v597 = vunpack.c.l.b16 %v201
  %v598 = vunpack.c.l.b16 %v202
  %v599 = vunpack.c.l.b16 %v203
  %v600 = vunpack.c.l.b16 %v204
  %v601 = vunpack.c.l.b16 %v205
  %v602 = vunpack.c.l.b16 %v206
  %v603 = vunpack.c.l.b16 %v207
  %v604 = vunpack.c.l.b16 %v208
  %v605 = vunpack.c.l.b16 %v209
  %v606 = vunpack.c.l.b16 %v210
  %v607 = vpack.c.b16 %v412, %v411
  %v608 = vpack.c.b16 %v414, %v413
  %v609 = vpack.c.b16 %v416, %v415
  %v610 = vpack.c.b16 %v418, %v417
  %v611 = vpack.c.b16 %v420, %v419
  %v612 = vpack.c.b16 %v422, %v421
  %v613 = vpack.c.b16 %v424, %v423
  %v614 = vpack.c.b16 %v426, %v425
  %v615 = vpack.c.b16 %v428, %v427
  %v616 = vpack.c.b16 %v430, %v429
  %v617 = vpack.c.b16 %v432, %v431
  %v618 = vpack.c.b16 %v434, %v433
  %v619 = vpack.c.b16 %v436, %v435
  %v620 = vpack.c.b16 %v438, %v437
  %v621 = vpack.c.b16 %v440, %v439
  %v622 = vpack.c.b16 %v442, %v441
  %v623 = vpack.c.b16 %v444, %v443
  %v624 = vpack.c.b16 %v446, %v445
  %v625 = vpack.c.b16 %v448, %v447
  %v626 = vpack.c.b16 %v450, %v449
  %v627 = vpack.c.b16 %v452, %v451
  %v628 = vpack.c.b16 %v454, %v453
  %v629 = vpack.c.b16 %v456, %v455
  %v630 = vpack.c.b16 %v458, %v457
  %v631 = vpack.c.b16 %v460, %v459
  %v632 = vpack.c.b16 %v462, %v461
  %v633 = vpack.c.b16 %v464, %v463
  %v634 = vpack.c.b16 %v466, %v465
  %v635 = vpack.c.b16 %v468, %v467
  %v636 = vpack.c.b16 %v470, %v469
  %v637 = vpack.c.b16 %v472, %v471
  %v638 = vpack.c.b16 %v474, %v473
  %v639 = vpack.c.b16 %v476, %v475
  %v640 = vpack.c.b16 %v478, %v477
  %v641 = vpack.c.b16 %v480, %v479
  %v642 = vpack.c.b16 %v482, %v481
  %v643 = vpack.c.b16 %v484, %v483
  %v644 = vpack.c.b16 %v486, %v485
  %v645 = vpack.c.b16 %v488, %v487
  %v646 = vpack.c.b16 %v490, %v489
  %v647 = vpack.c.b16 %v492, %v491
  %v648 = vpack.c.b16 %v494, %v493
  %v649 = vpack.c.b16 %v496, %v495
  %v650 = vpack.c.b16 %v498, %v497
  %v651 = vpack.c.b16 %v500, %v499
  %v652 = vpack.c.b16 %v502, %v501
  %v653 = vpack.c.b16 %v504, %v503
  %v654 = vpack.c.b16 %v506, %v505
  %v655 = vpack.c.b16 %v508, %v507
  %v656 = vpack.c.b16 %v510, %v509
  %v657 = vpack.c.b16 %v512, %v511
  %v658 = vpack.c.b16 %v514, %v513
  %v659 = vpack.c.b16 %v516, %v515
  %v660 = vpack.c.b16 %v518, %v517
  %v661 = vpack.c.b16 %v520, %v519
  %v662 = vpack.c.b16 %v522, %v521
  %v663 = vpack.c.b16 %v524, %v523
  %v664 = vpack.c.b16 %v526, %v525
  %v665 = vpack.c.b16 %v528, %v527
  %v666 = vpack.c.b16 %v530, %v529
  %v667 = vpack.c.b16 %v532, %v531
  %v668 = vpack.c.b16 %v534, %v533
  %v669 = vpack.c.b16 %v536, %v535
  %v670 = vpack.c.b16 %v538, %v537
  %v671 = vpack.c.b16 %v540, %v539
  %v672 = vpack.c.b16 %v542, %v541
  %v673 = vpack.c.b16 %v544, %v543
  %v674 = vpack.c.b16 %v546, %v545
  %v675 = vpack.c.b16 %v548, %v547
  %v676 = vpack.c.b16 %v550, %v549
  %v677 = vpack.c.b16 %v552, %v551
  %v678 = vpack.c.b16 %v554, %v553
  %v679 = vpack.c.b16 %v556, %v555
  %v680 = vpack.c.b16 %v558, %v557
  %v681 = vpack.c.b16 %v560, %v559
  %v682 = vpack.c.b16 %v562, %v561
  %v683 = vpack.c.b16 %v564, %v563
  %v684 = vpack.c.b16 %v566, %v565
  %v685 = vpack.c.b16 %v568, %v567
  %v686 = vpack.c.b16 %v570, %v569
  %v687 = vpack.c.b16 %v572, %v571
  %v688 = vpack.c.b16 %v574, %v573
  %v689 = vpack.c.b16 %v576, %v575
  %v690 = vpack.c.b16 %v578, %v577
  %v691 = vpack.c.b16 %v580, %v579
  %v692 = vpack.c.b16 %v582, %v581
  %v693 = vpack.c.b16 %v584, %v583
  %v694 = vpack.c.b16 %v586, %v585
  %v695 = vpack.c.b16 %v588, %v587
  %v696 = vpack.c.b16 %v590, %v589
  %v697 = vpack.c.b16 %v592, %v591
  %v698 = vpack.c.b16 %v594, %v593
  %v699 = vpack.c.b16 %v596, %v595
  %v700 = vpack.c.b16 %v598, %v597
  %v701 = vpack.c.b16 %v600, %v599
  %v702 = vpack.c.b16 %v602, %v601
  %v703 = vpack.c.b16 %v604, %v603
  %v704 = vpack.c.b16 %v606, %v605
  %v709 = vunpack.c.l.b16 %v211
  %v710 = vunpack.c.l.b16 %v212
  %v711 = vunpack.c.l.b16 %v213
  %v712 = vunpack.c.l.b16 %v214
  %v713 = vpack.c.b16 %v710, %v709
  %v714 = vpack.c.b16 %v712, %v711
  %vm717 = vcmask 261120
  %v719 = vsel %vm717, %v607, 0
  %v722 = vsel %vm717, %v608, 0
  %v725 = vsel %vm717, %v609, 0
  %v728 = vsel %vm717, %v610, 0
  %v731 = vsel %vm717, %v611, 0
  %v734 = vsel %vm717, %v612, 0
  %v737 = vsel %vm717, %v613, 0
  %v740 = vsel %vm717, %v614, 0
  %v743 = vsel %vm717, %v615, 0
  %v746 = vsel %vm717, %v616, 0
  %v749 = vsel %vm717, %v617, 0
  %v752 = vsel %vm717, %v618, 0
  %v755 = vsel %vm717, %v619, 0
  %v758 = vsel %vm717, %v620, 0
  %v761 = vsel %vm717, %v621, 0
  %v764 = vsel %vm717, %v622, 0
  %v767 = vsel %vm717, %v623, 0
  %v770 = vsel %vm717, %v624, 0
  %v773 = vsel %vm717, %v625, 0
  %v776 = vsel %vm717, %v626, 0
  %v779 = vsel %vm717, %v627, 0
  %v782 = vsel %vm717, %v628, 0
  %v785 = vsel %vm717, %v629, 0
  %v788 = vsel %vm717, %v630, 0
  %v791 = vsel %vm717, %v631, 0
  %v794 = vsel %vm717, %v632, 0
  %v797 = vsel %vm717, %v633, 0
  %v800 = vsel %vm717, %v634, 0
  %v803 = vsel %vm717, %v635, 0
  %v806 = vsel %vm717, %v636, 0
  %v809 = vsel %vm717, %v637, 0
  %v812 = vsel %vm717, %v638, 0
  %v815 = vsel %vm717, %v639, 0
  %v818 = vsel %vm717, %v640, 0
  %v821 = vsel %vm717, %v641, 0
  %v824 = vsel %vm717, %v642, 0
  %v827 = vsel %vm717, %v643, 0
  %v830 = vsel %vm717, %v644, 0
  %v833 = vsel %vm717, %v645, 0
  %v836 = vsel %vm717, %v646, 0
  %v839 = vsel %vm717, %v647, 0
  %v842 = vsel %vm717, %v648, 0
  %v845 = vsel %vm717, %v649, 0
  %v848 = vsel %vm717, %v650, 0
  %v851 = vsel %vm717, %v651, 0
  %v854 = vsel %vm717, %v652, 0
  %v857 = vsel %vm717, %v653, 0
  %v860 = vsel %vm717, %v654, 0
  %v863 = vsel %vm717, %v655, 0
  %v866 = vsel %vm717, %v656, 0
  %v869 = vsel %vm717, %v657, 0
  %v872 = vsel %vm717, %v658, 0
  %v875 = vsel %vm717, %v659, 0
  %v878 = vsel %vm717, %v660, 0
  %v881 = vsel %vm717, %v661, 0
  %v884 = vsel %vm717, %v662, 0
  %v887 = vsel %vm717, %v663, 0
  %v890 = vsel %vm717, %v664, 0
  %v893 = vsel %vm717, %v665, 0
  %v896 = vsel %vm717, %v666, 0
  %v899 = vsel %vm717, %v667, 0
  %v902 = vsel %vm717, %v668, 0
  %v905 = vsel %vm717, %v669, 0
  %v908 = vsel %vm717, %v670, 0
  %v911 = vsel %vm717, %v671, 0
  %v914 = vsel %vm717, %v672, 0
  %v917 = vsel %vm717, %v673, 0
  %v920 = vsel %vm717, %v674, 0
  %v923 = vsel %vm717, %v675, 0
  %v926 = vsel %vm717, %v676, 0
  %v929 = vsel %vm717, %v677, 0
  %v932 = vsel %vm717, %v678, 0
  %v935 = vsel %vm717, %v679, 0
  %v938 = vsel %vm717, %v680, 0
  %v941 = vsel %vm717, %v681, 0
  %v944 = vsel %vm717, %v682, 0
  %v947 = vsel %vm717, %v683, 0
  %v950 = vsel %vm717, %v684, 0
  %v953 = vsel %vm717, %v685, 0
  %v956 = vsel %vm717, %v686, 0
  %v959 = vsel %vm717, %v687, 0
  %v962 = vsel %vm717, %v688, 0
  %v965 = vsel %vm717, %v689, 0
  %v968 = vsel %vm717, %v690, 0
  %v971 = vsel %vm717, %v691, 0
  %v974 = vsel %vm717, %v692, 0
  %v977 = vsel %vm717, %v693, 0
  %v980 = vsel %vm717, %v694, 0
  %v983 = vsel %vm717, %v695, 0
  %v986 = vsel %vm717, %v696, 0
  %v989 = vsel %vm717, %v697, 0
  %v992 = vsel %vm717, %v698, 0
  %v995 = vsel %vm717, %v699, 0
  %v998 = vsel %vm717, %v700, 0
  %v1001 = vsel %vm717, %v701, 0
  %v1004 = vsel %vm717, %v702, 0
  %v1007 = vsel %vm717, %v703, 0
  %v1010 = vsel %vm717, %v704, 0
  %1012 = vmatpush.bf16.msra.mxu0 0
  %1013 = vmatpush.bf16.msra.mxu0 0
  %1014 = vmatpush.bf16.msra.mxu0 0
  %1015 = vmatpush.bf16.msra.mxu0 0
  %1016 = vmatpush.bf16.msra.mxu0 0
  %1017 = vmatpush.bf16.msra.mxu0 0
  %1018 = vmatpush.bf16.msra.mxu0 %v714
  %1019 = vmatpush.bf16.msra.mxu0 %v713
  %1020 = vmatmul.bf16.gmra.mxu0 %v719
  %v1021 = vpop.f32.mrf.mxu0
  %v1022 = vadd.f32 0.0, %v1021
  %v1023 = vpop.f32.mrf.mxu0
  %v1024 = vadd.f32 0.0, %v1023
  %1025 = vmatmul.bf16.gmra.mxu0 %v722
  %v1026 = vpop.f32.mrf.mxu0
  %v1027 = vadd.f32 0.0, %v1026
  %v1028 = vpop.f32.mrf.mxu0
  %v1029 = vadd.f32 0.0, %v1028
  %1030 = vmatmul.bf16.gmra.mxu0 %v725
  %v1031 = vpop.f32.mrf.mxu0
  %v1032 = vadd.f32 0.0, %v1031
  %v1033 = vpop.f32.mrf.mxu0
  %v1034 = vadd.f32 0.0, %v1033
  %1035 = vmatmul.bf16.gmra.mxu0 %v728
  %v1036 = vpop.f32.mrf.mxu0
  %v1037 = vadd.f32 0.0, %v1036
  %v1038 = vpop.f32.mrf.mxu0
  %v1039 = vadd.f32 0.0, %v1038
  %1040 = vmatmul.bf16.gmra.mxu0 %v731
  %v1041 = vpop.f32.mrf.mxu0
  %v1042 = vadd.f32 0.0, %v1041
  %v1043 = vpop.f32.mrf.mxu0
  %v1044 = vadd.f32 0.0, %v1043
  %1045 = vmatmul.bf16.gmra.mxu0 %v734
  %v1046 = vpop.f32.mrf.mxu0
  %v1047 = vadd.f32 0.0, %v1046
  %v1048 = vpop.f32.mrf.mxu0
  %v1049 = vadd.f32 0.0, %v1048
  %1050 = vmatmul.bf16.gmra.mxu0 %v737
  %v1051 = vpop.f32.mrf.mxu0
  %v1052 = vadd.f32 0.0, %v1051
  %v1053 = vpop.f32.mrf.mxu0
  %v1054 = vadd.f32 0.0, %v1053
  %1055 = vmatmul.bf16.gmra.mxu0 %v740
  %v1056 = vpop.f32.mrf.mxu0
  %v1057 = vadd.f32 0.0, %v1056
  %v1058 = vpop.f32.mrf.mxu0
  %v1059 = vadd.f32 0.0, %v1058
  %1060 = vmatmul.bf16.gmra.mxu0 %v743
  %v1061 = vpop.f32.mrf.mxu0
  %v1062 = vadd.f32 0.0, %v1061
  %v1063 = vpop.f32.mrf.mxu0
  %v1064 = vadd.f32 0.0, %v1063
  %1065 = vmatmul.bf16.gmra.mxu0 %v746
  %v1066 = vpop.f32.mrf.mxu0
  %v1067 = vadd.f32 0.0, %v1066
  %v1068 = vpop.f32.mrf.mxu0
  %v1069 = vadd.f32 0.0, %v1068
  %1070 = vmatmul.bf16.gmra.mxu0 %v749
  %v1071 = vpop.f32.mrf.mxu0
  %v1072 = vadd.f32 0.0, %v1071
  %v1073 = vpop.f32.mrf.mxu0
  %v1074 = vadd.f32 0.0, %v1073
  %1075 = vmatmul.bf16.gmra.mxu0 %v752
  %v1076 = vpop.f32.mrf.mxu0
  %v1077 = vadd.f32 0.0, %v1076
  %v1078 = vpop.f32.mrf.mxu0
  %v1079 = vadd.f32 0.0, %v1078
  %1080 = vmatmul.bf16.gmra.mxu0 %v755
  %v1081 = vpop.f32.mrf.mxu0
  %v1082 = vadd.f32 0.0, %v1081
  %v1083 = vpop.f32.mrf.mxu0
  %v1084 = vadd.f32 0.0, %v1083
  %1085 = vmatmul.bf16.gmra.mxu0 %v758
  %v1086 = vpop.f32.mrf.mxu0
  %v1087 = vadd.f32 0.0, %v1086
  %v1088 = vpop.f32.mrf.mxu0
  %v1089 = vadd.f32 0.0, %v1088
  %1090 = vmatmul.bf16.gmra.mxu0 %v761
  %v1091 = vpop.f32.mrf.mxu0
  %v1092 = vadd.f32 0.0, %v1091
  %v1093 = vpop.f32.mrf.mxu0
  %v1094 = vadd.f32 0.0, %v1093
  %1095 = vmatmul.bf16.gmra.mxu0 %v764
  %v1096 = vpop.f32.mrf.mxu0
  %v1097 = vadd.f32 0.0, %v1096
  %v1098 = vpop.f32.mrf.mxu0
  %v1099 = vadd.f32 0.0, %v1098
  %1100 = vmatmul.bf16.gmra.mxu0 %v767
  %v1101 = vpop.f32.mrf.mxu0
  %v1102 = vadd.f32 0.0, %v1101
  %v1103 = vpop.f32.mrf.mxu0
  %v1104 = vadd.f32 0.0, %v1103
  %1105 = vmatmul.bf16.gmra.mxu0 %v770
  %v1106 = vpop.f32.mrf.mxu0
  %v1107 = vadd.f32 0.0, %v1106
  %v1108 = vpop.f32.mrf.mxu0
  %v1109 = vadd.f32 0.0, %v1108
  %1110 = vmatmul.bf16.gmra.mxu0 %v773
  %v1111 = vpop.f32.mrf.mxu0
  %v1112 = vadd.f32 0.0, %v1111
  %v1113 = vpop.f32.mrf.mxu0
  %v1114 = vadd.f32 0.0, %v1113
  %1115 = vmatmul.bf16.gmra.mxu0 %v776
  %v1116 = vpop.f32.mrf.mxu0
  %v1117 = vadd.f32 0.0, %v1116
  %v1118 = vpop.f32.mrf.mxu0
  %v1119 = vadd.f32 0.0, %v1118
  %1120 = vmatmul.bf16.gmra.mxu0 %v779
  %v1121 = vpop.f32.mrf.mxu0
  %v1122 = vadd.f32 0.0, %v1121
  %v1123 = vpop.f32.mrf.mxu0
  %v1124 = vadd.f32 0.0, %v1123
  %1125 = vmatmul.bf16.gmra.mxu0 %v782
  %v1126 = vpop.f32.mrf.mxu0
  %v1127 = vadd.f32 0.0, %v1126
  %v1128 = vpop.f32.mrf.mxu0
  %v1129 = vadd.f32 0.0, %v1128
  %1130 = vmatmul.bf16.gmra.mxu0 %v785
  %v1131 = vpop.f32.mrf.mxu0
  %v1132 = vadd.f32 0.0, %v1131
  %v1133 = vpop.f32.mrf.mxu0
  %v1134 = vadd.f32 0.0, %v1133
  %1135 = vmatmul.bf16.gmra.mxu0 %v788
  %v1136 = vpop.f32.mrf.mxu0
  %v1137 = vadd.f32 0.0, %v1136
  %v1138 = vpop.f32.mrf.mxu0
  %v1139 = vadd.f32 0.0, %v1138
  %1140 = vmatmul.bf16.gmra.mxu0 %v791
  %v1141 = vpop.f32.mrf.mxu0
  %v1142 = vadd.f32 0.0, %v1141
  %v1143 = vpop.f32.mrf.mxu0
  %v1144 = vadd.f32 0.0, %v1143
  %1145 = vmatmul.bf16.gmra.mxu0 %v794
  %v1146 = vpop.f32.mrf.mxu0
  %v1147 = vadd.f32 0.0, %v1146
  %v1148 = vpop.f32.mrf.mxu0
  %v1149 = vadd.f32 0.0, %v1148
  %1150 = vmatmul.bf16.gmra.mxu0 %v797
  %v1151 = vpop.f32.mrf.mxu0
  %v1152 = vadd.f32 0.0, %v1151
  %v1153 = vpop.f32.mrf.mxu0
  %v1154 = vadd.f32 0.0, %v1153
  %1155 = vmatmul.bf16.gmra.mxu0 %v800
  %v1156 = vpop.f32.mrf.mxu0
  %v1157 = vadd.f32 0.0, %v1156
  %v1158 = vpop.f32.mrf.mxu0
  %v1159 = vadd.f32 0.0, %v1158
  %1160 = vmatmul.bf16.gmra.mxu0 %v803
  %v1161 = vpop.f32.mrf.mxu0
  %v1162 = vadd.f32 0.0, %v1161
  %v1163 = vpop.f32.mrf.mxu0
  %v1164 = vadd.f32 0.0, %v1163
  %1165 = vmatmul.bf16.gmra.mxu0 %v806
  %v1166 = vpop.f32.mrf.mxu0
  %v1167 = vadd.f32 0.0, %v1166
  %v1168 = vpop.f32.mrf.mxu0
  %v1169 = vadd.f32 0.0, %v1168
  %1170 = vmatmul.bf16.gmra.mxu0 %v809
  %v1171 = vpop.f32.mrf.mxu0
  %v1172 = vadd.f32 0.0, %v1171
  %v1173 = vpop.f32.mrf.mxu0
  %v1174 = vadd.f32 0.0, %v1173
  %1175 = vmatmul.bf16.gmra.mxu0 %v812
  %v1176 = vpop.f32.mrf.mxu0
  %v1177 = vadd.f32 0.0, %v1176
  %v1178 = vpop.f32.mrf.mxu0
  %v1179 = vadd.f32 0.0, %v1178
  %1180 = vmatmul.bf16.gmra.mxu0 %v815
  %v1181 = vpop.f32.mrf.mxu0
  %v1182 = vadd.f32 0.0, %v1181
  %v1183 = vpop.f32.mrf.mxu0
  %v1184 = vadd.f32 0.0, %v1183
  %1185 = vmatmul.bf16.gmra.mxu0 %v818
  %v1186 = vpop.f32.mrf.mxu0
  %v1187 = vadd.f32 0.0, %v1186
  %v1188 = vpop.f32.mrf.mxu0
  %v1189 = vadd.f32 0.0, %v1188
  %1190 = vmatmul.bf16.gmra.mxu0 %v821
  %v1191 = vpop.f32.mrf.mxu0
  %v1192 = vadd.f32 0.0, %v1191
  %v1193 = vpop.f32.mrf.mxu0
  %v1194 = vadd.f32 0.0, %v1193
  %1195 = vmatmul.bf16.gmra.mxu0 %v824
  %v1196 = vpop.f32.mrf.mxu0
  %v1197 = vadd.f32 0.0, %v1196
  %v1198 = vpop.f32.mrf.mxu0
  %v1199 = vadd.f32 0.0, %v1198
  %1200 = vmatmul.bf16.gmra.mxu0 %v827
  %v1201 = vpop.f32.mrf.mxu0
  %v1202 = vadd.f32 0.0, %v1201
  %v1203 = vpop.f32.mrf.mxu0
  %v1204 = vadd.f32 0.0, %v1203
  %1205 = vmatmul.bf16.gmra.mxu0 %v830
  %v1206 = vpop.f32.mrf.mxu0
  %v1207 = vadd.f32 0.0, %v1206
  %v1208 = vpop.f32.mrf.mxu0
  %v1209 = vadd.f32 0.0, %v1208
  %1210 = vmatmul.bf16.gmra.mxu0 %v833
  %v1211 = vpop.f32.mrf.mxu0
  %v1212 = vadd.f32 0.0, %v1211
  %v1213 = vpop.f32.mrf.mxu0
  %v1214 = vadd.f32 0.0, %v1213
  %1215 = vmatmul.bf16.gmra.mxu0 %v836
  %v1216 = vpop.f32.mrf.mxu0
  %v1217 = vadd.f32 0.0, %v1216
  %v1218 = vpop.f32.mrf.mxu0
  %v1219 = vadd.f32 0.0, %v1218
  %1220 = vmatmul.bf16.gmra.mxu0 %v839
  %v1221 = vpop.f32.mrf.mxu0
  %v1222 = vadd.f32 0.0, %v1221
  %v1223 = vpop.f32.mrf.mxu0
  %v1224 = vadd.f32 0.0, %v1223
  %1225 = vmatmul.bf16.gmra.mxu0 %v842
  %v1226 = vpop.f32.mrf.mxu0
  %v1227 = vadd.f32 0.0, %v1226
  %v1228 = vpop.f32.mrf.mxu0
  %v1229 = vadd.f32 0.0, %v1228
  %1230 = vmatmul.bf16.gmra.mxu0 %v845
  %v1231 = vpop.f32.mrf.mxu0
  %v1232 = vadd.f32 0.0, %v1231
  %v1233 = vpop.f32.mrf.mxu0
  %v1234 = vadd.f32 0.0, %v1233
  %1235 = vmatmul.bf16.gmra.mxu0 %v848
  %v1236 = vpop.f32.mrf.mxu0
  %v1237 = vadd.f32 0.0, %v1236
  %v1238 = vpop.f32.mrf.mxu0
  %v1239 = vadd.f32 0.0, %v1238
  %1240 = vmatmul.bf16.gmra.mxu0 %v851
  %v1241 = vpop.f32.mrf.mxu0
  %v1242 = vadd.f32 0.0, %v1241
  %v1243 = vpop.f32.mrf.mxu0
  %v1244 = vadd.f32 0.0, %v1243
  %1245 = vmatmul.bf16.gmra.mxu0 %v854
  %v1246 = vpop.f32.mrf.mxu0
  %v1247 = vadd.f32 0.0, %v1246
  %v1248 = vpop.f32.mrf.mxu0
  %v1249 = vadd.f32 0.0, %v1248
  %1250 = vmatmul.bf16.gmra.mxu0 %v857
  %v1251 = vpop.f32.mrf.mxu0
  %v1252 = vadd.f32 0.0, %v1251
  %v1253 = vpop.f32.mrf.mxu0
  %v1254 = vadd.f32 0.0, %v1253
  %1255 = vmatmul.bf16.gmra.mxu0 %v860
  %v1256 = vpop.f32.mrf.mxu0
  %v1257 = vadd.f32 0.0, %v1256
  %v1258 = vpop.f32.mrf.mxu0
  %v1259 = vadd.f32 0.0, %v1258
  %1260 = vmatmul.bf16.gmra.mxu0 %v863
  %v1261 = vpop.f32.mrf.mxu0
  %v1262 = vadd.f32 0.0, %v1261
  %v1263 = vpop.f32.mrf.mxu0
  %v1264 = vadd.f32 0.0, %v1263
  %1265 = vmatmul.bf16.gmra.mxu0 %v866
  %v1266 = vpop.f32.mrf.mxu0
  %v1267 = vadd.f32 0.0, %v1266
  %v1268 = vpop.f32.mrf.mxu0
  %v1269 = vadd.f32 0.0, %v1268
  %1270 = vmatmul.bf16.gmra.mxu0 %v869
  %v1271 = vpop.f32.mrf.mxu0
  %v1272 = vadd.f32 0.0, %v1271
  %v1273 = vpop.f32.mrf.mxu0
  %v1274 = vadd.f32 0.0, %v1273
  %1275 = vmatmul.bf16.gmra.mxu0 %v872
  %v1276 = vpop.f32.mrf.mxu0
  %v1277 = vadd.f32 0.0, %v1276
  %v1278 = vpop.f32.mrf.mxu0
  %v1279 = vadd.f32 0.0, %v1278
  %1280 = vmatmul.bf16.gmra.mxu0 %v875
  %v1281 = vpop.f32.mrf.mxu0
  %v1282 = vadd.f32 0.0, %v1281
  %v1283 = vpop.f32.mrf.mxu0
  %v1284 = vadd.f32 0.0, %v1283
  %1285 = vmatmul.bf16.gmra.mxu0 %v878
  %v1286 = vpop.f32.mrf.mxu0
  %v1287 = vadd.f32 0.0, %v1286
  %v1288 = vpop.f32.mrf.mxu0
  %v1289 = vadd.f32 0.0, %v1288
  %1290 = vmatmul.bf16.gmra.mxu0 %v881
  %v1291 = vpop.f32.mrf.mxu0
  %v1292 = vadd.f32 0.0, %v1291
  %v1293 = vpop.f32.mrf.mxu0
  %v1294 = vadd.f32 0.0, %v1293
  %1295 = vmatmul.bf16.gmra.mxu0 %v884
  %v1296 = vpop.f32.mrf.mxu0
  %v1297 = vadd.f32 0.0, %v1296
  %v1298 = vpop.f32.mrf.mxu0
  %v1299 = vadd.f32 0.0, %v1298
  %1300 = vmatmul.bf16.gmra.mxu0 %v887
  %v1301 = vpop.f32.mrf.mxu0
  %v1302 = vadd.f32 0.0, %v1301
  %v1303 = vpop.f32.mrf.mxu0
  %v1304 = vadd.f32 0.0, %v1303
  %1305 = vmatmul.bf16.gmra.mxu0 %v890
  %v1306 = vpop.f32.mrf.mxu0
  %v1307 = vadd.f32 0.0, %v1306
  %v1308 = vpop.f32.mrf.mxu0
  %v1309 = vadd.f32 0.0, %v1308
  %1310 = vmatmul.bf16.gmra.mxu0 %v893
  %v1311 = vpop.f32.mrf.mxu0
  %v1312 = vadd.f32 0.0, %v1311
  %v1313 = vpop.f32.mrf.mxu0
  %v1314 = vadd.f32 0.0, %v1313
  %1315 = vmatmul.bf16.gmra.mxu0 %v896
  %v1316 = vpop.f32.mrf.mxu0
  %v1317 = vadd.f32 0.0, %v1316
  %v1318 = vpop.f32.mrf.mxu0
  %v1319 = vadd.f32 0.0, %v1318
  %1320 = vmatmul.bf16.gmra.mxu0 %v899
  %v1321 = vpop.f32.mrf.mxu0
  %v1322 = vadd.f32 0.0, %v1321
  %v1323 = vpop.f32.mrf.mxu0
  %v1324 = vadd.f32 0.0, %v1323
  %1325 = vmatmul.bf16.gmra.mxu0 %v902
  %v1326 = vpop.f32.mrf.mxu0
  %v1327 = vadd.f32 0.0, %v1326
  %v1328 = vpop.f32.mrf.mxu0
  %v1329 = vadd.f32 0.0, %v1328
  %1330 = vmatmul.bf16.gmra.mxu0 %v905
  %v1331 = vpop.f32.mrf.mxu0
  %v1332 = vadd.f32 0.0, %v1331
  %v1333 = vpop.f32.mrf.mxu0
  %v1334 = vadd.f32 0.0, %v1333
  %1335 = vmatmul.bf16.gmra.mxu0 %v908
  %v1336 = vpop.f32.mrf.mxu0
  %v1337 = vadd.f32 0.0, %v1336
  %v1338 = vpop.f32.mrf.mxu0
  %v1339 = vadd.f32 0.0, %v1338
  %1340 = vmatmul.bf16.gmra.mxu0 %v911
  %v1341 = vpop.f32.mrf.mxu0
  %v1342 = vadd.f32 0.0, %v1341
  %v1343 = vpop.f32.mrf.mxu0
  %v1344 = vadd.f32 0.0, %v1343
  %1345 = vmatmul.bf16.gmra.mxu0 %v914
  %v1346 = vpop.f32.mrf.mxu0
  %v1347 = vadd.f32 0.0, %v1346
  %v1348 = vpop.f32.mrf.mxu0
  %v1349 = vadd.f32 0.0, %v1348
  %1350 = vmatmul.bf16.gmra.mxu0 %v917
  %v1351 = vpop.f32.mrf.mxu0
  %v1352 = vadd.f32 0.0, %v1351
  %v1353 = vpop.f32.mrf.mxu0
  %v1354 = vadd.f32 0.0, %v1353
  %1355 = vmatmul.bf16.gmra.mxu0 %v920
  %v1356 = vpop.f32.mrf.mxu0
  %v1357 = vadd.f32 0.0, %v1356
  %v1358 = vpop.f32.mrf.mxu0
  %v1359 = vadd.f32 0.0, %v1358
  %1360 = vmatmul.bf16.gmra.mxu0 %v923
  %v1361 = vpop.f32.mrf.mxu0
  %v1362 = vadd.f32 0.0, %v1361
  %v1363 = vpop.f32.mrf.mxu0
  %v1364 = vadd.f32 0.0, %v1363
  %1365 = vmatmul.bf16.gmra.mxu0 %v926
  %v1366 = vpop.f32.mrf.mxu0
  %v1367 = vadd.f32 0.0, %v1366
  %v1368 = vpop.f32.mrf.mxu0
  %v1369 = vadd.f32 0.0, %v1368
  %1370 = vmatmul.bf16.gmra.mxu0 %v929
  %v1371 = vpop.f32.mrf.mxu0
  %v1372 = vadd.f32 0.0, %v1371
  %v1373 = vpop.f32.mrf.mxu0
  %v1374 = vadd.f32 0.0, %v1373
  %1375 = vmatmul.bf16.gmra.mxu0 %v932
  %v1376 = vpop.f32.mrf.mxu0
  %v1377 = vadd.f32 0.0, %v1376
  %v1378 = vpop.f32.mrf.mxu0
  %v1379 = vadd.f32 0.0, %v1378
  %1380 = vmatmul.bf16.gmra.mxu0 %v935
  %v1381 = vpop.f32.mrf.mxu0
  %v1382 = vadd.f32 0.0, %v1381
  %v1383 = vpop.f32.mrf.mxu0
  %v1384 = vadd.f32 0.0, %v1383
  %1385 = vmatmul.bf16.gmra.mxu0 %v938
  %v1386 = vpop.f32.mrf.mxu0
  %v1387 = vadd.f32 0.0, %v1386
  %v1388 = vpop.f32.mrf.mxu0
  %v1389 = vadd.f32 0.0, %v1388
  %1390 = vmatmul.bf16.gmra.mxu0 %v941
  %v1391 = vpop.f32.mrf.mxu0
  %v1392 = vadd.f32 0.0, %v1391
  %v1393 = vpop.f32.mrf.mxu0
  %v1394 = vadd.f32 0.0, %v1393
  %1395 = vmatmul.bf16.gmra.mxu0 %v944
  %v1396 = vpop.f32.mrf.mxu0
  %v1397 = vadd.f32 0.0, %v1396
  %v1398 = vpop.f32.mrf.mxu0
  %v1399 = vadd.f32 0.0, %v1398
  %1400 = vmatmul.bf16.gmra.mxu0 %v947
  %v1401 = vpop.f32.mrf.mxu0
  %v1402 = vadd.f32 0.0, %v1401
  %v1403 = vpop.f32.mrf.mxu0
  %v1404 = vadd.f32 0.0, %v1403
  %1405 = vmatmul.bf16.gmra.mxu0 %v950
  %v1406 = vpop.f32.mrf.mxu0
  %v1407 = vadd.f32 0.0, %v1406
  %v1408 = vpop.f32.mrf.mxu0
  %v1409 = vadd.f32 0.0, %v1408
  %1410 = vmatmul.bf16.gmra.mxu0 %v953
  %v1411 = vpop.f32.mrf.mxu0
  %v1412 = vadd.f32 0.0, %v1411
  %v1413 = vpop.f32.mrf.mxu0
  %v1414 = vadd.f32 0.0, %v1413
  %1415 = vmatmul.bf16.gmra.mxu0 %v956
  %v1416 = vpop.f32.mrf.mxu0
  %v1417 = vadd.f32 0.0, %v1416
  %v1418 = vpop.f32.mrf.mxu0
  %v1419 = vadd.f32 0.0, %v1418
  %1420 = vmatmul.bf16.gmra.mxu0 %v959
  %v1421 = vpop.f32.mrf.mxu0
  %v1422 = vadd.f32 0.0, %v1421
  %v1423 = vpop.f32.mrf.mxu0
  %v1424 = vadd.f32 0.0, %v1423
  %1425 = vmatmul.bf16.gmra.mxu0 %v962
  %v1426 = vpop.f32.mrf.mxu0
  %v1427 = vadd.f32 0.0, %v1426
  %v1428 = vpop.f32.mrf.mxu0
  %v1429 = vadd.f32 0.0, %v1428
  %1430 = vmatmul.bf16.gmra.mxu0 %v965
  %v1431 = vpop.f32.mrf.mxu0
  %v1432 = vadd.f32 0.0, %v1431
  %v1433 = vpop.f32.mrf.mxu0
  %v1434 = vadd.f32 0.0, %v1433
  %1435 = vmatmul.bf16.gmra.mxu0 %v968
  %v1436 = vpop.f32.mrf.mxu0
  %v1437 = vadd.f32 0.0, %v1436
  %v1438 = vpop.f32.mrf.mxu0
  %v1439 = vadd.f32 0.0, %v1438
  %1440 = vmatmul.bf16.gmra.mxu0 %v971
  %v1441 = vpop.f32.mrf.mxu0
  %v1442 = vadd.f32 0.0, %v1441
  %v1443 = vpop.f32.mrf.mxu0
  %v1444 = vadd.f32 0.0, %v1443
  %1445 = vmatmul.bf16.gmra.mxu0 %v974
  %v1446 = vpop.f32.mrf.mxu0
  %v1447 = vadd.f32 0.0, %v1446
  %v1448 = vpop.f32.mrf.mxu0
  %v1449 = vadd.f32 0.0, %v1448
  %1450 = vmatmul.bf16.gmra.mxu0 %v977
  %v1451 = vpop.f32.mrf.mxu0
  %v1452 = vadd.f32 0.0, %v1451
  %v1453 = vpop.f32.mrf.mxu0
  %v1454 = vadd.f32 0.0, %v1453
  %1455 = vmatmul.bf16.gmra.mxu0 %v980
  %v1456 = vpop.f32.mrf.mxu0
  %v1457 = vadd.f32 0.0, %v1456
  %v1458 = vpop.f32.mrf.mxu0
  %v1459 = vadd.f32 0.0, %v1458
  %1460 = vmatmul.bf16.gmra.mxu0 %v983
  %v1461 = vpop.f32.mrf.mxu0
  %v1462 = vadd.f32 0.0, %v1461
  %v1463 = vpop.f32.mrf.mxu0
  %v1464 = vadd.f32 0.0, %v1463
  %1465 = vmatmul.bf16.gmra.mxu0 %v986
  %v1466 = vpop.f32.mrf.mxu0
  %v1467 = vadd.f32 0.0, %v1466
  %v1468 = vpop.f32.mrf.mxu0
  %v1469 = vadd.f32 0.0, %v1468
  %1470 = vmatmul.bf16.gmra.mxu0 %v989
  %v1471 = vpop.f32.mrf.mxu0
  %v1472 = vadd.f32 0.0, %v1471
  %v1473 = vpop.f32.mrf.mxu0
  %v1474 = vadd.f32 0.0, %v1473
  %1475 = vmatmul.bf16.gmra.mxu0 %v992
  %v1476 = vpop.f32.mrf.mxu0
  %v1477 = vadd.f32 0.0, %v1476
  %v1478 = vpop.f32.mrf.mxu0
  %v1479 = vadd.f32 0.0, %v1478
  %1480 = vmatmul.bf16.gmra.mxu0 %v995
  %v1481 = vpop.f32.mrf.mxu0
  %v1482 = vadd.f32 0.0, %v1481
  %v1483 = vpop.f32.mrf.mxu0
  %v1484 = vadd.f32 0.0, %v1483
  %1485 = vmatmul.bf16.gmra.mxu0 %v998
  %v1486 = vpop.f32.mrf.mxu0
  %v1487 = vadd.f32 0.0, %v1486
  %v1488 = vpop.f32.mrf.mxu0
  %v1489 = vadd.f32 0.0, %v1488
  %1490 = vmatmul.bf16.gmra.mxu0 %v1001
  %v1491 = vpop.f32.mrf.mxu0
  %v1492 = vadd.f32 0.0, %v1491
  %v1493 = vpop.f32.mrf.mxu0
  %v1494 = vadd.f32 0.0, %v1493
  %1495 = vmatmul.bf16.gmra.mxu0 %v1004
  %v1496 = vpop.f32.mrf.mxu0
  %v1497 = vadd.f32 0.0, %v1496
  %v1498 = vpop.f32.mrf.mxu0
  %v1499 = vadd.f32 0.0, %v1498
  %1500 = vmatmul.bf16.gmra.mxu0 %v1007
  %v1501 = vpop.f32.mrf.mxu0
  %v1502 = vadd.f32 0.0, %v1501
  %v1503 = vpop.f32.mrf.mxu0
  %v1504 = vadd.f32 0.0, %v1503
  %1505 = vmatmul.bf16.gmra.mxu0 %v1010
  %v1506 = vpop.f32.mrf.mxu0
  %v1507 = vadd.f32 0.0, %v1506
  %v1508 = vpop.f32.mrf.mxu0
  %v1509 = vadd.f32 0.0, %v1508
  %1510 = vdwg.mxu0
  %v1511 = vmax.f32 %v1022, %v1144
  %v1512 = vmax.f32 %v1511, %v1267
  %v1513 = vmax.f32 %v1512, %v1389
  %v1514 = vmax.f32 %v1024, %v1147
  %v1515 = vmax.f32 %v1514, %v1269
  %v1516 = vmax.f32 %v1515, %v1392
  %v1517 = vmax.f32 %v1027, %v1149
  %v1518 = vmax.f32 %v1517, %v1272
  %v1519 = vmax.f32 %v1518, %v1394
  %v1520 = vmax.f32 %v1029, %v1152
  %v1521 = vmax.f32 %v1520, %v1274
  %v1522 = vmax.f32 %v1521, %v1397
  %v1523 = vmax.f32 %v1032, %v1154
  %v1524 = vmax.f32 %v1523, %v1277
  %v1525 = vmax.f32 %v1524, %v1399
  %v1526 = vmax.f32 %v1034, %v1157
  %v1527 = vmax.f32 %v1526, %v1279
  %v1528 = vmax.f32 %v1527, %v1402
  %v1529 = vmax.f32 %v1037, %v1159
  %v1530 = vmax.f32 %v1529, %v1282
  %v1531 = vmax.f32 %v1530, %v1404
  %v1532 = vmax.f32 %v1039, %v1162
  %v1533 = vmax.f32 %v1532, %v1284
  %v1534 = vmax.f32 %v1533, %v1407
  %v1535 = vmax.f32 %v1042, %v1164
  %v1536 = vmax.f32 %v1535, %v1287
  %v1537 = vmax.f32 %v1536, %v1409
  %v1538 = vmax.f32 %v1044, %v1167
  %v1539 = vmax.f32 %v1538, %v1289
  %v1540 = vmax.f32 %v1539, %v1412
  %v1541 = vmax.f32 %v1047, %v1169
  %v1542 = vmax.f32 %v1541, %v1292
  %v1543 = vmax.f32 %v1542, %v1414
  %v1544 = vmax.f32 %v1049, %v1172
  %v1545 = vmax.f32 %v1544, %v1294
  %v1546 = vmax.f32 %v1545, %v1417
  %v1547 = vmax.f32 %v1052, %v1174
  %v1548 = vmax.f32 %v1547, %v1297
  %v1549 = vmax.f32 %v1548, %v1419
  %v1550 = vmax.f32 %v1054, %v1177
  %v1551 = vmax.f32 %v1550, %v1299
  %v1552 = vmax.f32 %v1551, %v1422
  %v1553 = vmax.f32 %v1057, %v1179
  %v1554 = vmax.f32 %v1553, %v1302
  %v1555 = vmax.f32 %v1554, %v1424
  %v1556 = vmax.f32 %v1059, %v1182
  %v1557 = vmax.f32 %v1556, %v1304
  %v1558 = vmax.f32 %v1557, %v1427
  %v1559 = vmax.f32 %v1062, %v1184
  %v1560 = vmax.f32 %v1559, %v1307
  %v1561 = vmax.f32 %v1560, %v1429
  %v1562 = vmax.f32 %v1064, %v1187
  %v1563 = vmax.f32 %v1562, %v1309
  %v1564 = vmax.f32 %v1563, %v1432
  %v1565 = vmax.f32 %v1067, %v1189
  %v1566 = vmax.f32 %v1565, %v1312
  %v1567 = vmax.f32 %v1566, %v1434
  %v1568 = vmax.f32 %v1069, %v1192
  %v1569 = vmax.f32 %v1568, %v1314
  %v1570 = vmax.f32 %v1569, %v1437
  %v1571 = vmax.f32 %v1072, %v1194
  %v1572 = vmax.f32 %v1571, %v1317
  %v1573 = vmax.f32 %v1572, %v1439
  %v1574 = vmax.f32 %v1074, %v1197
  %v1575 = vmax.f32 %v1574, %v1319
  %v1576 = vmax.f32 %v1575, %v1442
  %v1577 = vmax.f32 %v1077, %v1199
  %v1578 = vmax.f32 %v1577, %v1322
  %v1579 = vmax.f32 %v1578, %v1444
  %v1580 = vmax.f32 %v1079, %v1202
  %v1581 = vmax.f32 %v1580, %v1324
  %v1582 = vmax.f32 %v1581, %v1447
  %v1583 = vmax.f32 %v1082, %v1204
  %v1584 = vmax.f32 %v1583, %v1327
  %v1585 = vmax.f32 %v1584, %v1449
  %v1586 = vmax.f32 %v1084, %v1207
  %v1587 = vmax.f32 %v1586, %v1329
  %v1588 = vmax.f32 %v1587, %v1452
  %v1589 = vmax.f32 %v1087, %v1209
  %v1590 = vmax.f32 %v1589, %v1332
  %v1591 = vmax.f32 %v1590, %v1454
  %v1592 = vmax.f32 %v1089, %v1212
  %v1593 = vmax.f32 %v1592, %v1334
  %v1594 = vmax.f32 %v1593, %v1457
  %v1595 = vmax.f32 %v1092, %v1214
  %v1596 = vmax.f32 %v1595, %v1337
  %v1597 = vmax.f32 %v1596, %v1459
  %v1598 = vmax.f32 %v1094, %v1217
  %v1599 = vmax.f32 %v1598, %v1339
  %v1600 = vmax.f32 %v1599, %v1462
  %v1601 = vmax.f32 %v1097, %v1219
  %v1602 = vmax.f32 %v1601, %v1342
  %v1603 = vmax.f32 %v1602, %v1464
  %v1604 = vmax.f32 %v1099, %v1222
  %v1605 = vmax.f32 %v1604, %v1344
  %v1606 = vmax.f32 %v1605, %v1467
  %v1607 = vmax.f32 %v1102, %v1224
  %v1608 = vmax.f32 %v1607, %v1347
  %v1609 = vmax.f32 %v1608, %v1469
  %v1610 = vmax.f32 %v1104, %v1227
  %v1611 = vmax.f32 %v1610, %v1349
  %v1612 = vmax.f32 %v1611, %v1472
  %v1613 = vmax.f32 %v1107, %v1229
  %v1614 = vmax.f32 %v1613, %v1352
  %v1615 = vmax.f32 %v1614, %v1474
  %v1616 = vmax.f32 %v1109, %v1232
  %v1617 = vmax.f32 %v1616, %v1354
  %v1618 = vmax.f32 %v1617, %v1477
  %v1619 = vmax.f32 %v1112, %v1234
  %v1620 = vmax.f32 %v1619, %v1357
  %v1621 = vmax.f32 %v1620, %v1479
  %v1622 = vmax.f32 %v1114, %v1237
  %v1623 = vmax.f32 %v1622, %v1359
  %v1624 = vmax.f32 %v1623, %v1482
  %v1625 = vmax.f32 %v1117, %v1239
  %v1626 = vmax.f32 %v1625, %v1362
  %v1627 = vmax.f32 %v1626, %v1484
  %v1628 = vmax.f32 %v1119, %v1242
  %v1629 = vmax.f32 %v1628, %v1364
  %v1630 = vmax.f32 %v1629, %v1487
  %v1631 = vmax.f32 %v1122, %v1244
  %v1632 = vmax.f32 %v1631, %v1367
  %v1633 = vmax.f32 %v1632, %v1489
  %v1634 = vmax.f32 %v1124, %v1247
  %v1635 = vmax.f32 %v1634, %v1369
  %v1636 = vmax.f32 %v1635, %v1492
  %v1637 = vmax.f32 %v1127, %v1249
  %v1638 = vmax.f32 %v1637, %v1372
  %v1639 = vmax.f32 %v1638, %v1494
  %v1640 = vmax.f32 %v1129, %v1252
  %v1641 = vmax.f32 %v1640, %v1374
  %v1642 = vmax.f32 %v1641, %v1497
  %v1643 = vmax.f32 %v1132, %v1254
  %v1644 = vmax.f32 %v1643, %v1377
  %v1645 = vmax.f32 %v1644, %v1499
  %v1646 = vmax.f32 %v1134, %v1257
  %v1647 = vmax.f32 %v1646, %v1379
  %v1648 = vmax.f32 %v1647, %v1502
  %v1649 = vmax.f32 %v1137, %v1259
  %v1650 = vmax.f32 %v1649, %v1382
  %v1651 = vmax.f32 %v1650, %v1504
  %v1652 = vmax.f32 %v1139, %v1262
  %v1653 = vmax.f32 %v1652, %v1384
  %v1654 = vmax.f32 %v1653, %v1507
  %v1655 = vmax.f32 %v1142, %v1264
  %v1656 = vmax.f32 %v1655, %v1387
  %v1657 = vmax.f32 %v1656, %v1509
  %v1658 = vld [vmem:[%s2] sm:$0x1]
  %v1660 = vperm.slane %v1658, 0
  %v1662 = vadd.f32 %v1513, %v1660
  %v1663 = vadd.f32 %v1516, %v1660
  %v1664 = vadd.f32 %v1519, %v1660
  %v1665 = vadd.f32 %v1522, %v1660
  %v1666 = vadd.f32 %v1525, %v1660
  %v1667 = vadd.f32 %v1528, %v1660
  %v1668 = vadd.f32 %v1531, %v1660
  %v1669 = vadd.f32 %v1534, %v1660
  %v1670 = vadd.f32 %v1537, %v1660
  %v1671 = vadd.f32 %v1540, %v1660
  %v1672 = vadd.f32 %v1543, %v1660
  %v1673 = vadd.f32 %v1546, %v1660
  %v1674 = vadd.f32 %v1549, %v1660
  %v1675 = vadd.f32 %v1552, %v1660
  %v1676 = vadd.f32 %v1555, %v1660
  %v1677 = vadd.f32 %v1558, %v1660
  %v1678 = vadd.f32 %v1561, %v1660
  %v1679 = vadd.f32 %v1564, %v1660
  %v1680 = vadd.f32 %v1567, %v1660
  %v1681 = vadd.f32 %v1570, %v1660
  %v1682 = vadd.f32 %v1573, %v1660
  %v1683 = vadd.f32 %v1576, %v1660
  %v1684 = vadd.f32 %v1579, %v1660
  %v1685 = vadd.f32 %v1582, %v1660
  %v1686 = vadd.f32 %v1585, %v1660
  %v1687 = vadd.f32 %v1588, %v1660
  %v1688 = vadd.f32 %v1591, %v1660
  %v1689 = vadd.f32 %v1594, %v1660
  %v1690 = vadd.f32 %v1597, %v1660
  %v1691 = vadd.f32 %v1600, %v1660
  %v1692 = vadd.f32 %v1603, %v1660
  %v1693 = vadd.f32 %v1606, %v1660
  %v1694 = vadd.f32 %v1609, %v1660
  %v1695 = vadd.f32 %v1612, %v1660
  %v1696 = vadd.f32 %v1615, %v1660
  %v1697 = vadd.f32 %v1618, %v1660
  %v1698 = vadd.f32 %v1621, %v1660
  %v1699 = vadd.f32 %v1624, %v1660
  %v1700 = vadd.f32 %v1627, %v1660
  %v1701 = vadd.f32 %v1630, %v1660
  %v1702 = vadd.f32 %v1633, %v1660
  %v1703 = vadd.f32 %v1636, %v1660
  %v1704 = vadd.f32 %v1639, %v1660
  %v1705 = vadd.f32 %v1642, %v1660
  %v1706 = vadd.f32 %v1645, %v1660
  %v1707 = vadd.f32 %v1648, %v1660
  %v1708 = vadd.f32 %v1651, %v1660
  %v1709 = vadd.f32 %v1654, %v1660
  %v1710 = vadd.f32 %v1657, %v1660
  %v1711 = vmax.f32 %v1662, 0.0
  %v1712 = vmax.f32 %v1663, 0.0
  %v1713 = vmax.f32 %v1664, 0.0
  %v1714 = vmax.f32 %v1665, 0.0
  %v1715 = vmax.f32 %v1666, 0.0
  %v1716 = vmax.f32 %v1667, 0.0
  %v1717 = vmax.f32 %v1668, 0.0
  %v1718 = vmax.f32 %v1669, 0.0
  %v1719 = vmax.f32 %v1670, 0.0
  %v1720 = vmax.f32 %v1671, 0.0
  %v1721 = vmax.f32 %v1672, 0.0
  %v1722 = vmax.f32 %v1673, 0.0
  %v1723 = vmax.f32 %v1674, 0.0
  %v1724 = vmax.f32 %v1675, 0.0
  %v1725 = vmax.f32 %v1676, 0.0
  %v1726 = vmax.f32 %v1677, 0.0
  %v1727 = vmax.f32 %v1678, 0.0
  %v1728 = vmax.f32 %v1679, 0.0
  %v1729 = vmax.f32 %v1680, 0.0
  %v1730 = vmax.f32 %v1681, 0.0
  %v1731 = vmax.f32 %v1682, 0.0
  %v1732 = vmax.f32 %v1683, 0.0
  %v1733 = vmax.f32 %v1684, 0.0
  %v1734 = vmax.f32 %v1685, 0.0
  %v1735 = vmax.f32 %v1686, 0.0
  %v1736 = vmax.f32 %v1687, 0.0
  %v1737 = vmax.f32 %v1688, 0.0
  %v1738 = vmax.f32 %v1689, 0.0
  %v1739 = vmax.f32 %v1690, 0.0
  %v1740 = vmax.f32 %v1691, 0.0
  %v1741 = vmax.f32 %v1692, 0.0
  %v1742 = vmax.f32 %v1693, 0.0
  %v1743 = vmax.f32 %v1694, 0.0
  %v1744 = vmax.f32 %v1695, 0.0
  %v1745 = vmax.f32 %v1696, 0.0
  %v1746 = vmax.f32 %v1697, 0.0
  %v1747 = vmax.f32 %v1698, 0.0
  %v1748 = vmax.f32 %v1699, 0.0
  %v1749 = vmax.f32 %v1700, 0.0
  %v1750 = vmax.f32 %v1701, 0.0
  %v1751 = vmax.f32 %v1702, 0.0
  %v1752 = vmax.f32 %v1703, 0.0
  %v1753 = vmax.f32 %v1704, 0.0
  %v1754 = vmax.f32 %v1705, 0.0
  %v1755 = vmax.f32 %v1706, 0.0
  %v1756 = vmax.f32 %v1707, 0.0
  %v1757 = vmax.f32 %v1708, 0.0
  %v1758 = vmax.f32 %v1709, 0.0
  %v1759 = vmax.f32 %v1710, 0.0
  %v1760 = vpack.c.bf16 %v1711, %v1711
  %v1761 = vpack.c.bf16 %v1712, %v1712
  %v1762 = vpack.c.bf16 %v1713, %v1713
  %v1763 = vpack.c.bf16 %v1714, %v1714
  %v1764 = vpack.c.bf16 %v1715, %v1715
  %v1765 = vpack.c.bf16 %v1716, %v1716
  %v1766 = vpack.c.bf16 %v1717, %v1717
  %v1767 = vpack.c.bf16 %v1718, %v1718
  %v1768 = vpack.c.bf16 %v1719, %v1719
  %v1769 = vpack.c.bf16 %v1720, %v1720
  %v1770 = vpack.c.bf16 %v1721, %v1721
  %v1771 = vpack.c.bf16 %v1722, %v1722
  %v1772 = vpack.c.bf16 %v1723, %v1723
  %v1773 = vpack.c.bf16 %v1724, %v1724
  %v1774 = vpack.c.bf16 %v1725, %v1725
  %v1775 = vpack.c.bf16 %v1726, %v1726
  %v1776 = vpack.c.bf16 %v1727, %v1727
  %v1777 = vpack.c.bf16 %v1728, %v1728
  %v1778 = vpack.c.bf16 %v1729, %v1729
  %v1779 = vpack.c.bf16 %v1730, %v1730
  %v1780 = vpack.c.bf16 %v1731, %v1731
  %v1781 = vpack.c.bf16 %v1732, %v1732
  %v1782 = vpack.c.bf16 %v1733, %v1733
  %v1783 = vpack.c.bf16 %v1734, %v1734
  %v1784 = vpack.c.bf16 %v1735, %v1735
  %v1785 = vpack.c.bf16 %v1736, %v1736
  %v1786 = vpack.c.bf16 %v1737, %v1737
  %v1787 = vpack.c.bf16 %v1738, %v1738
  %v1788 = vpack.c.bf16 %v1739, %v1739
  %v1789 = vpack.c.bf16 %v1740, %v1740
  %v1790 = vpack.c.bf16 %v1741, %v1741
  %v1791 = vpack.c.bf16 %v1742, %v1742
  %v1792 = vpack.c.bf16 %v1743, %v1743
  %v1793 = vpack.c.bf16 %v1744, %v1744
  %v1794 = vpack.c.bf16 %v1745, %v1745
  %v1795 = vpack.c.bf16 %v1746, %v1746
  %v1796 = vpack.c.bf16 %v1747, %v1747
  %v1797 = vpack.c.bf16 %v1748, %v1748
  %v1798 = vpack.c.bf16 %v1749, %v1749
  %v1799 = vpack.c.bf16 %v1750, %v1750
  %v1800 = vpack.c.bf16 %v1751, %v1751
  %v1801 = vpack.c.bf16 %v1752, %v1752
  %v1802 = vpack.c.bf16 %v1753, %v1753
  %v1803 = vpack.c.bf16 %v1754, %v1754
  %v1804 = vpack.c.bf16 %v1755, %v1755
  %v1805 = vpack.c.bf16 %v1756, %v1756
  %v1806 = vpack.c.bf16 %v1757, %v1757
  %v1807 = vpack.c.bf16 %v1758, %v1758
  %v1808 = vpack.c.bf16 %v1759, %v1759
  %1809 = vst [vmem:[%s3] sm:$0xf] %v1760
  %1810 = vst [vmem:[%s3 + $0x4] sm:$0xf] %v1761
  %1811 = vst [vmem:[%s3 + $0x8] sm:$0xf] %v1762
  %1812 = vst [vmem:[%s3 + $0xc] sm:$0xf] %v1763
  %1813 = vst [vmem:[%s3 + $0x10] sm:$0xf] %v1764
  %1814 = vst [vmem:[%s3 + $0x14] sm:$0xf] %v1765
  %1815 = vst [vmem:[%s3 + $0x18] sm:$0xf] %v1766
  %1816 = vst [vmem:[%s3 + $0x1c] sm:$0xf] %v1767
  %1817 = vst [vmem:[%s3 + $0x20] sm:$0xf] %v1768
  %1818 = vst [vmem:[%s3 + $0x24] sm:$0xf] %v1769
  %1819 = vst [vmem:[%s3 + $0x28] sm:$0xf] %v1770
  %1820 = vst [vmem:[%s3 + $0x2c] sm:$0xf] %v1771
  %1821 = vst [vmem:[%s3 + $0x30] sm:$0xf] %v1772
  %1822 = vst [vmem:[%s3 + $0x34] sm:$0xf] %v1773
  %1823 = vst [vmem:[%s3 + $0x38] sm:$0xf] %v1774
  %1824 = vst [vmem:[%s3 + $0x3c] sm:$0xf] %v1775
  %1825 = vst [vmem:[%s3 + $0x40] sm:$0xf] %v1776
  %1826 = vst [vmem:[%s3 + $0x44] sm:$0xf] %v1777
  %1827 = vst [vmem:[%s3 + $0x48] sm:$0xf] %v1778
  %1828 = vst [vmem:[%s3 + $0x4c] sm:$0xf] %v1779
  %1829 = vst [vmem:[%s3 + $0x50] sm:$0xf] %v1780
  %1830 = vst [vmem:[%s3 + $0x54] sm:$0xf] %v1781
  %1831 = vst [vmem:[%s3 + $0x58] sm:$0xf] %v1782
  %1832 = vst [vmem:[%s3 + $0x5c] sm:$0xf] %v1783
  %1833 = vst [vmem:[%s3 + $0x60] sm:$0xf] %v1784
  %1834 = vst [vmem:[%s3 + $0x64] sm:$0xf] %v1785
  %1835 = vst [vmem:[%s3 + $0x68] sm:$0xf] %v1786
  %1836 = vst [vmem:[%s3 + $0x6c] sm:$0xf] %v1787
  %1837 = vst [vmem:[%s3 + $0x70] sm:$0xf] %v1788
  %1838 = vst [vmem:[%s3 + $0x74] sm:$0xf] %v1789
  %1839 = vst [vmem:[%s3 + $0x78] sm:$0xf] %v1790
  %1840 = vst [vmem:[%s3 + $0x7c] sm:$0xf] %v1791
  %1841 = vst [vmem:[%s3 + $0x80] sm:$0xf] %v1792
  %1842 = vst [vmem:[%s3 + $0x84] sm:$0xf] %v1793
  %1843 = vst [vmem:[%s3 + $0x88] sm:$0xf] %v1794
  %1844 = vst [vmem:[%s3 + $0x8c] sm:$0xf] %v1795
  %1845 = vst [vmem:[%s3 + $0x90] sm:$0xf] %v1796
  %1846 = vst [vmem:[%s3 + $0x94] sm:$0xf] %v1797
  %1847 = vst [vmem:[%s3 + $0x98] sm:$0xf] %v1798
  %1848 = vst [vmem:[%s3 + $0x9c] sm:$0xf] %v1799
  %1849 = vst [vmem:[%s3 + $0xa0] sm:$0xf] %v1800
  %1850 = vst [vmem:[%s3 + $0xa4] sm:$0xf] %v1801
  %1851 = vst [vmem:[%s3 + $0xa8] sm:$0xf] %v1802
  %1852 = vst [vmem:[%s3 + $0xac] sm:$0xf] %v1803
  %1853 = vst [vmem:[%s3 + $0xb0] sm:$0xf] %v1804
  %1854 = vst [vmem:[%s3 + $0xb4] sm:$0xf] %v1805
  %1855 = vst [vmem:[%s3 + $0xb8] sm:$0xf] %v1806
  %1856 = vst [vmem:[%s3 + $0xbc] sm:$0xf] %v1807
  %1857 = vst [vmem:[%s3 + $0xc0] sm:$0xf] %v1808
  // Predicated region
  $region14: #{lenet_forward.2} parent=0 // pred_check
    _
  $region15: #{lenet_forward.2} parent=0 // pred_check_branch
    %1859 = sbr.rel (0) target = $region17
  $region16: #{lenet_forward.2} parent=0 // pred_region
    _
  $region17: #{lenet_forward.2} parent=0 // pred_fallthru
    _
  // Predicated region
  $region18: #{lenet_forward.2} parent=0 // pred_check
    _
  $region19: #{lenet_forward.2} parent=0 // pred_check_branch
    %1861 = sbr.rel (0) target = $region21
  $region20: #{lenet_forward.2} parent=0 // pred_region
    _
  $region21: #{lenet_forward.2} parent=0 // pred_fallthru
    _

// kernel: lenet_forward.3
$region0: #{lenet_forward.3}
  #allocation0 [shape = 'u32[]', space=smem, size = 0x4, offset = 0x4, fixed_abs, tag = 'smem constant byte address 0x4 - core index']
  #allocation1 [shape = 'u32[72,128]{1,0:T(1,128)}', space=vmem, size = 0x9000, scoped, tag = 'internal scratch']
  #allocation2 [shape = 'bf16[8,3200]{1,0:T(8,128)(2,1)}', space=vmem, size = 0xc800, scoped, tag = 'scratch operand']
  %s0 = inlined_call_operand.vmem [shape: bf16[4,25,8,160], index: 0, kind: input, shape index: {}]
  %s1 = inlined_call_operand.vmem [shape: bf16[160,128], index: 1, kind: input, shape index: {}]
  %s2 = inlined_call_operand.vmem [shape: f32[1,128], index: 2, kind: input, shape index: {}]
  %s3 = inlined_call_operand.vmem [shape: bf16[3200,128], index: 3, kind: input, shape index: {}]
  %s4 = inlined_call_operand.vmem [shape: f32[1,128], index: 4, kind: input, shape index: {}]
  %s5 = inlined_call_operand.vmem [shape: bf16[128,128], index: 5, kind: input, shape index: {}]
  %s6 = inlined_call_operand.vmem [shape: f32[1,128], index: 6, kind: input, shape index: {}]
  %s7 = inlined_call_operand.vmem [shape: bf16[128,128], index: 7, kind: input, shape index: {}]
  %s8 = inlined_call_operand.vmem [shape: f32[1,128], index: 8, kind: input, shape index: {}]
  %s9 = inlined_call_operand.vmem [shape: f32[8,128], index: 9, kind: output, shape index: {}]
  %s10 = sld [smem:[#allocation0]]
  $region46: #{lenet_forward.3} parent=0
    _
  %s12 = ssub.s32 1, %s10
  %s13 = scalar_select 0, %s12, %s10
  // Predicated region
  $region2: #{lenet_forward.3} parent=0 // pred_check
    _
  $region3: #{lenet_forward.3} parent=0 // pred_check_branch
    %15 = sbr.rel (0) target = $region5
  $region4: #{lenet_forward.3} parent=0 // pred_region
    _
  $region5: #{lenet_forward.3} parent=0 // pred_fallthru
    _
  // Predicated region
  $region6: #{lenet_forward.3} parent=0 // pred_check
    _
  $region7: #{lenet_forward.3} parent=0 // pred_check_branch
    %17 = sbr.rel (0) target = $region9
  $region8: #{lenet_forward.3} parent=0 // pred_region
    _
  $region9: #{lenet_forward.3} parent=0 // pred_fallthru
    _
  // Predicated region
  $region10: #{lenet_forward.3} parent=0 // pred_check
    _
  $region11: #{lenet_forward.3} parent=0 // pred_check_branch
    %19 = sbr.rel (0) target = $region13
  $region12: #{lenet_forward.3} parent=0 // pred_region
    _
  $region13: #{lenet_forward.3} parent=0 // pred_fallthru
    _
  // Predicated region
  $region14: #{lenet_forward.3} parent=0 // pred_check
    _
  $region15: #{lenet_forward.3} parent=0 // pred_check_branch
    %21 = sbr.rel (0) target = $region17
  $region16: #{lenet_forward.3} parent=0 // pred_region
    _
  $region17: #{lenet_forward.3} parent=0 // pred_fallthru
    _
  // Predicated region
  $region18: #{lenet_forward.3} parent=0 // pred_check
    _
  $region19: #{lenet_forward.3} parent=0 // pred_check_branch
    %23 = sbr.rel (0) target = $region21
  $region20: #{lenet_forward.3} parent=0 // pred_region
    _
  $region21: #{lenet_forward.3} parent=0 // pred_fallthru
    _
  // Predicated region
  $region22: #{lenet_forward.3} parent=0 // pred_check
    _
  $region23: #{lenet_forward.3} parent=0 // pred_check_branch
    %25 = sbr.rel (0) target = $region25
  $region24: #{lenet_forward.3} parent=0 // pred_region
    _
  $region25: #{lenet_forward.3} parent=0 // pred_fallthru
    _
  // Predicated region
  $region26: #{lenet_forward.3} parent=0 // pred_check
    _
  $region27: #{lenet_forward.3} parent=0 // pred_check_branch
    %27 = sbr.rel (0) target = $region29
  $region28: #{lenet_forward.3} parent=0 // pred_region
    _
  $region29: #{lenet_forward.3} parent=0 // pred_fallthru
    _
  // Predicated region
  $region30: #{lenet_forward.3} parent=0 // pred_check
    _
  $region31: #{lenet_forward.3} parent=0 // pred_check_branch
    %29 = sbr.rel (0) target = $region33
  $region32: #{lenet_forward.3} parent=0 // pred_region
    _
  $region33: #{lenet_forward.3} parent=0 // pred_fallthru
    _
  // Predicated region
  $region34: #{lenet_forward.3} parent=0 // pred_check
    _
  $region35: #{lenet_forward.3} parent=0 // pred_check_branch
    %31 = sbr.rel (0) target = $region37
  $region36: #{lenet_forward.3} parent=0 // pred_region
    _
  $region37: #{lenet_forward.3} parent=0 // pred_fallthru
    _
  %v33 = vld [vmem:[%s0] sm:$0xff]
  %v34 = vld [vmem:[%s0 + $0x8] sm:$0xff]
  %v35 = vld [vmem:[%s0 + $0x10] sm:$0xff]
  %v36 = vld [vmem:[%s0 + $0x18] sm:$0xff]
  %v37 = vld [vmem:[%s0 + $0x20] sm:$0xff]
  %v38 = vld [vmem:[%s0 + $0x28] sm:$0xff]
  %v39 = vld [vmem:[%s0 + $0x30] sm:$0xff]
  %v40 = vld [vmem:[%s0 + $0x38] sm:$0xff]
  %v41 = vld [vmem:[%s0 + $0x40] sm:$0xff]
  %v42 = vld [vmem:[%s0 + $0x48] sm:$0xff]
  %v43 = vld [vmem:[%s0 + $0x50] sm:$0xff]
  %v44 = vld [vmem:[%s0 + $0x58] sm:$0xff]
  %v45 = vld [vmem:[%s0 + $0x60] sm:$0xff]
  %v46 = vld [vmem:[%s0 + $0x68] sm:$0xff]
  %v47 = vld [vmem:[%s0 + $0x70] sm:$0xff]
  %v48 = vld [vmem:[%s0 + $0x78] sm:$0xff]
  %v49 = vld [vmem:[%s0 + $0x80] sm:$0xff]
  %v50 = vld [vmem:[%s0 + $0x88] sm:$0xff]
  %v51 = vld [vmem:[%s0 + $0x90] sm:$0xff]
  %v52 = vld [vmem:[%s0 + $0x98] sm:$0xff]
  %v53 = vld [vmem:[%s0 + $0xa0] sm:$0xff]
  %v54 = vld [vmem:[%s0 + $0xa8] sm:$0xff]
  %v55 = vld [vmem:[%s0 + $0xb0] sm:$0xff]
  %v56 = vld [vmem:[%s0 + $0xb8] sm:$0xff]
  %v57 = vld [vmem:[%s0 + $0xc0] sm:$0xff]
  %v58 = vld [vmem:[%s0 + $0xc8] sm:$0xff]
  %v59 = vld [vmem:[%s0 + $0xd0] sm:$0xff]
  %v60 = vld [vmem:[%s0 + $0xd8] sm:$0xff]
  %v61 = vld [vmem:[%s0 + $0xe0] sm:$0xff]
  %v62 = vld [vmem:[%s0 + $0xe8] sm:$0xff]
  %v63 = vld [vmem:[%s0 + $0xf0] sm:$0xff]
  %v64 = vld [vmem:[%s0 + $0xf8] sm:$0xff]
  %v65 = vld [vmem:[%s0 + $0x100] sm:$0xff]
  %v66 = vld [vmem:[%s0 + $0x108] sm:$0xff]
  %v67 = vld [vmem:[%s0 + $0x110] sm:$0xff]
  %v68 = vld [vmem:[%s0 + $0x118] sm:$0xff]
  %v69 = vld [vmem:[%s0 + $0x120] sm:$0xff]
  %v70 = vld [vmem:[%s0 + $0x128] sm:$0xff]
  %v71 = vld [vmem:[%s0 + $0x130] sm:$0xff]
  %v72 = vld [vmem:[%s0 + $0x138] sm:$0xff]
  %v73 = vld [vmem:[%s0 + $0x140] sm:$0xff]
  %v74 = vld [vmem:[%s0 + $0x148] sm:$0xff]
  %v75 = vld [vmem:[%s0 + $0x150] sm:$0xff]
  %v76 = vld [vmem:[%s0 + $0x158] sm:$0xff]
  %v77 = vld [vmem:[%s0 + $0x160] sm:$0xff]
  %v78 = vld [vmem:[%s0 + $0x168] sm:$0xff]
  %v79 = vld [vmem:[%s0 + $0x170] sm:$0xff]
  %v80 = vld [vmem:[%s0 + $0x178] sm:$0xff]
  %v81 = vld [vmem:[%s0 + $0x180] sm:$0xff]
  %v82 = vld [vmem:[%s0 + $0x188] sm:$0xff]
  %v83 = vld [vmem:[%s0 + $0x190] sm:$0xff]
  %v84 = vld [vmem:[%s0 + $0x198] sm:$0xff]
  %v85 = vld [vmem:[%s0 + $0x1a0] sm:$0xff]
  %v86 = vld [vmem:[%s0 + $0x1a8] sm:$0xff]
  %v87 = vld [vmem:[%s0 + $0x1b0] sm:$0xff]
  %v88 = vld [vmem:[%s0 + $0x1b8] sm:$0xff]
  %v89 = vld [vmem:[%s0 + $0x1c0] sm:$0xff]
  %v90 = vld [vmem:[%s0 + $0x1c8] sm:$0xff]
  %v91 = vld [vmem:[%s0 + $0x1d0] sm:$0xff]
  %v92 = vld [vmem:[%s0 + $0x1d8] sm:$0xff]
  %v93 = vld [vmem:[%s0 + $0x1e0] sm:$0xff]
  %v94 = vld [vmem:[%s0 + $0x1e8] sm:$0xff]
  %v95 = vld [vmem:[%s0 + $0x1f0] sm:$0xff]
  %v96 = vld [vmem:[%s0 + $0x1f8] sm:$0xff]
  %v97 = vld [vmem:[%s0 + $0x200] sm:$0xff]
  %v98 = vld [vmem:[%s0 + $0x208] sm:$0xff]
  %v99 = vld [vmem:[%s0 + $0x210] sm:$0xff]
  %v100 = vld [vmem:[%s0 + $0x218] sm:$0xff]
  %v101 = vld [vmem:[%s0 + $0x220] sm:$0xff]
  %v102 = vld [vmem:[%s0 + $0x228] sm:$0xff]
  %v103 = vld [vmem:[%s0 + $0x230] sm:$0xff]
  %v104 = vld [vmem:[%s0 + $0x238] sm:$0xff]
  %v105 = vld [vmem:[%s0 + $0x240] sm:$0xff]
  %v106 = vld [vmem:[%s0 + $0x248] sm:$0xff]
  %v107 = vld [vmem:[%s0 + $0x250] sm:$0xff]
  %v108 = vld [vmem:[%s0 + $0x258] sm:$0xff]
  %v109 = vld [vmem:[%s0 + $0x260] sm:$0xff]
  %v110 = vld [vmem:[%s0 + $0x268] sm:$0xff]
  %v111 = vld [vmem:[%s0 + $0x270] sm:$0xff]
  %v112 = vld [vmem:[%s0 + $0x278] sm:$0xff]
  %v113 = vld [vmem:[%s0 + $0x280] sm:$0xff]
  %v114 = vld [vmem:[%s0 + $0x288] sm:$0xff]
  %v115 = vld [vmem:[%s0 + $0x290] sm:$0xff]
  %v116 = vld [vmem:[%s0 + $0x298] sm:$0xff]
  %v117 = vld [vmem:[%s0 + $0x2a0] sm:$0xff]
  %v118 = vld [vmem:[%s0 + $0x2a8] sm:$0xff]
  %v119 = vld [vmem:[%s0 + $0x2b0] sm:$0xff]
  %v120 = vld [vmem:[%s0 + $0x2b8] sm:$0xff]
  %v121 = vld [vmem:[%s0 + $0x2c0] sm:$0xff]
  %v122 = vld [vmem:[%s0 + $0x2c8] sm:$0xff]
  %v123 = vld [vmem:[%s0 + $0x2d0] sm:$0xff]
  %v124 = vld [vmem:[%s0 + $0x2d8] sm:$0xff]
  %v125 = vld [vmem:[%s0 + $0x2e0] sm:$0xff]
  %v126 = vld [vmem:[%s0 + $0x2e8] sm:$0xff]
  %v127 = vld [vmem:[%s0 + $0x2f0] sm:$0xff]
  %v128 = vld [vmem:[%s0 + $0x2f8] sm:$0xff]
  %v129 = vld [vmem:[%s0 + $0x300] sm:$0xff]
  %v130 = vld [vmem:[%s0 + $0x308] sm:$0xff]
  %v131 = vld [vmem:[%s0 + $0x310] sm:$0xff]
  %v132 = vld [vmem:[%s0 + $0x318] sm:$0xff]
  %v133 = vld [vmem:[%s1] sm:$0xf]
  %v134 = vld [vmem:[%s1 + $0x4] sm:$0xf]
  %v135 = vld [vmem:[%s1 + $0x8] sm:$0xf]
  %v136 = vld [vmem:[%s1 + $0xc] sm:$0xf]
  %v137 = vld [vmem:[%s1 + $0x10] sm:$0xf]
  %v138 = vld [vmem:[%s1 + $0x14] sm:$0xf]
  %v139 = vld [vmem:[%s1 + $0x18] sm:$0xf]
  %v140 = vld [vmem:[%s1 + $0x1c] sm:$0xf]
  %v141 = vld [vmem:[%s1 + $0x20] sm:$0xf]
  %v142 = vld [vmem:[%s1 + $0x24] sm:$0xf]
  %v143 = vld [vmem:[%s1 + $0x28] sm:$0xf]
  %v144 = vld [vmem:[%s1 + $0x2c] sm:$0xf]
  %v145 = vld [vmem:[%s1 + $0x30] sm:$0xf]
  %v146 = vld [vmem:[%s1 + $0x34] sm:$0xf]
  %v147 = vld [vmem:[%s1 + $0x38] sm:$0xf]
  %v148 = vld [vmem:[%s1 + $0x3c] sm:$0xf]
  %v149 = vld [vmem:[%s1 + $0x40] sm:$0xf]
  %v150 = vld [vmem:[%s1 + $0x44] sm:$0xf]
  %v151 = vld [vmem:[%s1 + $0x48] sm:$0xf]
  %v152 = vld [vmem:[%s1 + $0x4c] sm:$0xf]
  %v253 = vunpack.c.l.b16 %v33
  %v254 = vunpack.c.h.b16 %v33
  %v255 = vunpack.c.l.b16 %v34
  %v256 = vunpack.c.h.b16 %v34
  %v257 = vunpack.c.l.b16 %v35
  %v258 = vunpack.c.h.b16 %v35
  %v259 = vunpack.c.l.b16 %v36
  %v260 = vunpack.c.h.b16 %v36
  %v261 = vunpack.c.l.b16 %v37
  %v262 = vunpack.c.h.b16 %v37
  %v263 = vunpack.c.l.b16 %v38
  %v264 = vunpack.c.h.b16 %v38
  %v265 = vunpack.c.l.b16 %v39
  %v266 = vunpack.c.h.b16 %v39
  %v267 = vunpack.c.l.b16 %v40
  %v268 = vunpack.c.h.b16 %v40
  %v269 = vunpack.c.l.b16 %v41
  %v270 = vunpack.c.h.b16 %v41
  %v271 = vunpack.c.l.b16 %v42
  %v272 = vunpack.c.h.b16 %v42
  %v273 = vunpack.c.l.b16 %v43
  %v274 = vunpack.c.h.b16 %v43
  %v275 = vunpack.c.l.b16 %v44
  %v276 = vunpack.c.h.b16 %v44
  %v277 = vunpack.c.l.b16 %v45
  %v278 = vunpack.c.h.b16 %v45
  %v279 = vunpack.c.l.b16 %v46
  %v280 = vunpack.c.h.b16 %v46
  %v281 = vunpack.c.l.b16 %v47
  %v282 = vunpack.c.h.b16 %v47
  %v283 = vunpack.c.l.b16 %v48
  %v284 = vunpack.c.h.b16 %v48
  %v285 = vunpack.c.l.b16 %v49
  %v286 = vunpack.c.h.b16 %v49
  %v287 = vunpack.c.l.b16 %v50
  %v288 = vunpack.c.h.b16 %v50
  %v289 = vunpack.c.l.b16 %v51
  %v290 = vunpack.c.h.b16 %v51
  %v291 = vunpack.c.l.b16 %v52
  %v292 = vunpack.c.h.b16 %v52
  %v293 = vunpack.c.l.b16 %v53
  %v294 = vunpack.c.h.b16 %v53
  %v295 = vunpack.c.l.b16 %v54
  %v296 = vunpack.c.h.b16 %v54
  %v297 = vunpack.c.l.b16 %v55
  %v298 = vunpack.c.h.b16 %v55
  %v299 = vunpack.c.l.b16 %v56
  %v300 = vunpack.c.h.b16 %v56
  %v301 = vunpack.c.l.b16 %v57
  %v302 = vunpack.c.h.b16 %v57
  %v303 = vunpack.c.l.b16 %v58
  %v304 = vunpack.c.h.b16 %v58
  %v305 = vunpack.c.l.b16 %v59
  %v306 = vunpack.c.h.b16 %v59
  %v307 = vunpack.c.l.b16 %v60
  %v308 = vunpack.c.h.b16 %v60
  %v309 = vunpack.c.l.b16 %v61
  %v310 = vunpack.c.h.b16 %v61
  %v311 = vunpack.c.l.b16 %v62
  %v312 = vunpack.c.h.b16 %v62
  %v313 = vunpack.c.l.b16 %v63
  %v314 = vunpack.c.h.b16 %v63
  %v315 = vunpack.c.l.b16 %v64
  %v316 = vunpack.c.h.b16 %v64
  %v317 = vunpack.c.l.b16 %v65
  %v318 = vunpack.c.h.b16 %v65
  %v319 = vunpack.c.l.b16 %v66
  %v320 = vunpack.c.h.b16 %v66
  %v321 = vunpack.c.l.b16 %v67
  %v322 = vunpack.c.h.b16 %v67
  %v323 = vunpack.c.l.b16 %v68
  %v324 = vunpack.c.h.b16 %v68
  %v325 = vunpack.c.l.b16 %v69
  %v326 = vunpack.c.h.b16 %v69
  %v327 = vunpack.c.l.b16 %v70
  %v328 = vunpack.c.h.b16 %v70
  %v329 = vunpack.c.l.b16 %v71
  %v330 = vunpack.c.h.b16 %v71
  %v331 = vunpack.c.l.b16 %v72
  %v332 = vunpack.c.h.b16 %v72
  %v333 = vunpack.c.l.b16 %v73
  %v334 = vunpack.c.h.b16 %v73
  %v335 = vunpack.c.l.b16 %v74
  %v336 = vunpack.c.h.b16 %v74
  %v337 = vunpack.c.l.b16 %v75
  %v338 = vunpack.c.h.b16 %v75
  %v339 = vunpack.c.l.b16 %v76
  %v340 = vunpack.c.h.b16 %v76
  %v341 = vunpack.c.l.b16 %v77
  %v342 = vunpack.c.h.b16 %v77
  %v343 = vunpack.c.l.b16 %v78
  %v344 = vunpack.c.h.b16 %v78
  %v345 = vunpack.c.l.b16 %v79
  %v346 = vunpack.c.h.b16 %v79
  %v347 = vunpack.c.l.b16 %v80
  %v348 = vunpack.c.h.b16 %v80
  %v349 = vunpack.c.l.b16 %v81
  %v350 = vunpack.c.h.b16 %v81
  %v351 = vunpack.c.l.b16 %v82
  %v352 = vunpack.c.h.b16 %v82
  %v353 = vunpack.c.l.b16 %v83
  %v354 = vunpack.c.h.b16 %v83
  %v355 = vunpack.c.l.b16 %v84
  %v356 = vunpack.c.h.b16 %v84
  %v357 = vunpack.c.l.b16 %v85
  %v358 = vunpack.c.h.b16 %v85
  %v359 = vunpack.c.l.b16 %v86
  %v360 = vunpack.c.h.b16 %v86
  %v361 = vunpack.c.l.b16 %v87
  %v362 = vunpack.c.h.b16 %v87
  %v363 = vunpack.c.l.b16 %v88
  %v364 = vunpack.c.h.b16 %v88
  %v365 = vunpack.c.l.b16 %v89
  %v366 = vunpack.c.h.b16 %v89
  %v367 = vunpack.c.l.b16 %v90
  %v368 = vunpack.c.h.b16 %v90
  %v369 = vunpack.c.l.b16 %v91
  %v370 = vunpack.c.h.b16 %v91
  %v371 = vunpack.c.l.b16 %v92
  %v372 = vunpack.c.h.b16 %v92
  %v373 = vunpack.c.l.b16 %v93
  %v374 = vunpack.c.h.b16 %v93
  %v375 = vunpack.c.l.b16 %v94
  %v376 = vunpack.c.h.b16 %v94
  %v377 = vunpack.c.l.b16 %v95
  %v378 = vunpack.c.h.b16 %v95
  %v379 = vunpack.c.l.b16 %v96
  %v380 = vunpack.c.h.b16 %v96
  %v381 = vunpack.c.l.b16 %v97
  %v382 = vunpack.c.h.b16 %v97
  %v383 = vunpack.c.l.b16 %v98
  %v384 = vunpack.c.h.b16 %v98
  %v385 = vunpack.c.l.b16 %v99
  %v386 = vunpack.c.h.b16 %v99
  %v387 = vunpack.c.l.b16 %v100
  %v388 = vunpack.c.h.b16 %v100
  %v389 = vunpack.c.l.b16 %v101
  %v390 = vunpack.c.h.b16 %v101
  %v391 = vunpack.c.l.b16 %v102
  %v392 = vunpack.c.h.b16 %v102
  %v393 = vunpack.c.l.b16 %v103
  %v394 = vunpack.c.h.b16 %v103
  %v395 = vunpack.c.l.b16 %v104
  %v396 = vunpack.c.h.b16 %v104
  %v397 = vunpack.c.l.b16 %v105
  %v398 = vunpack.c.h.b16 %v105
  %v399 = vunpack.c.l.b16 %v106
  %v400 = vunpack.c.h.b16 %v106
  %v401 = vunpack.c.l.b16 %v107
  %v402 = vunpack.c.h.b16 %v107
  %v403 = vunpack.c.l.b16 %v108
  %v404 = vunpack.c.h.b16 %v108
  %v405 = vunpack.c.l.b16 %v109
  %v406 = vunpack.c.h.b16 %v109
  %v407 = vunpack.c.l.b16 %v110
  %v408 = vunpack.c.h.b16 %v110
  %v409 = vunpack.c.l.b16 %v111
  %v410 = vunpack.c.h.b16 %v111
  %v411 = vunpack.c.l.b16 %v112
  %v412 = vunpack.c.h.b16 %v112
  %v413 = vunpack.c.l.b16 %v113
  %v414 = vunpack.c.h.b16 %v113
  %v415 = vunpack.c.l.b16 %v114
  %v416 = vunpack.c.h.b16 %v114
  %v417 = vunpack.c.l.b16 %v115
  %v418 = vunpack.c.h.b16 %v115
  %v419 = vunpack.c.l.b16 %v116
  %v420 = vunpack.c.h.b16 %v116
  %v421 = vunpack.c.l.b16 %v117
  %v422 = vunpack.c.h.b16 %v117
  %v423 = vunpack.c.l.b16 %v118
  %v424 = vunpack.c.h.b16 %v118
  %v425 = vunpack.c.l.b16 %v119
  %v426 = vunpack.c.h.b16 %v119
  %v427 = vunpack.c.l.b16 %v120
  %v428 = vunpack.c.h.b16 %v120
  %v429 = vunpack.c.l.b16 %v121
  %v430 = vunpack.c.h.b16 %v121
  %v431 = vunpack.c.l.b16 %v122
  %v432 = vunpack.c.h.b16 %v122
  %v433 = vunpack.c.l.b16 %v123
  %v434 = vunpack.c.h.b16 %v123
  %v435 = vunpack.c.l.b16 %v124
  %v436 = vunpack.c.h.b16 %v124
  %v437 = vunpack.c.l.b16 %v125
  %v438 = vunpack.c.h.b16 %v125
  %v439 = vunpack.c.l.b16 %v126
  %v440 = vunpack.c.h.b16 %v126
  %v441 = vunpack.c.l.b16 %v127
  %v442 = vunpack.c.h.b16 %v127
  %v443 = vunpack.c.l.b16 %v128
  %v444 = vunpack.c.h.b16 %v128
  %v445 = vunpack.c.l.b16 %v129
  %v446 = vunpack.c.h.b16 %v129
  %v447 = vunpack.c.l.b16 %v130
  %v448 = vunpack.c.h.b16 %v130
  %v449 = vunpack.c.l.b16 %v131
  %v450 = vunpack.c.h.b16 %v131
  %v451 = vunpack.c.l.b16 %v132
  %v452 = vunpack.c.h.b16 %v132
  %v453 = vpack.c.b16 %v255, %v253
  %v454 = vpack.c.b16 %v256, %v254
  %v455 = vpack.c.b16 %v259, %v257
  %v456 = vpack.c.b16 %v260, %v258
  %v457 = vpack.c.b16 %v263, %v261
  %v458 = vpack.c.b16 %v264, %v262
  %v459 = vpack.c.b16 %v267, %v265
  %v460 = vpack.c.b16 %v268, %v266
  %v461 = vpack.c.b16 %v271, %v269
  %v462 = vpack.c.b16 %v272, %v270
  %v463 = vpack.c.b16 %v275, %v273
  %v464 = vpack.c.b16 %v276, %v274
  %v465 = vpack.c.b16 %v279, %v277
  %v466 = vpack.c.b16 %v280, %v278
  %v467 = vpack.c.b16 %v283, %v281
  %v468 = vpack.c.b16 %v284, %v282
  %v469 = vpack.c.b16 %v287, %v285
  %v470 = vpack.c.b16 %v288, %v286
  %v471 = vpack.c.b16 %v291, %v289
  %v472 = vpack.c.b16 %v292, %v290
  %v473 = vpack.c.b16 %v295, %v293
  %v474 = vpack.c.b16 %v296, %v294
  %v475 = vpack.c.b16 %v299, %v297
  %v476 = vpack.c.b16 %v300, %v298
  %v477 = vpack.c.b16 %v303, %v301
  %v478 = vpack.c.b16 %v304, %v302
  %v479 = vpack.c.b16 %v307, %v305
  %v480 = vpack.c.b16 %v308, %v306
  %v481 = vpack.c.b16 %v311, %v309
  %v482 = vpack.c.b16 %v312, %v310
  %v483 = vpack.c.b16 %v315, %v313
  %v484 = vpack.c.b16 %v316, %v314
  %v485 = vpack.c.b16 %v319, %v317
  %v486 = vpack.c.b16 %v320, %v318
  %v487 = vpack.c.b16 %v323, %v321
  %v488 = vpack.c.b16 %v324, %v322
  %v489 = vpack.c.b16 %v327, %v325
  %v490 = vpack.c.b16 %v328, %v326
  %v491 = vpack.c.b16 %v331, %v329
  %v492 = vpack.c.b16 %v332, %v330
  %v493 = vpack.c.b16 %v335, %v333
  %v494 = vpack.c.b16 %v336, %v334
  %v495 = vpack.c.b16 %v339, %v337
  %v496 = vpack.c.b16 %v340, %v338
  %v497 = vpack.c.b16 %v343, %v341
  %v498 = vpack.c.b16 %v344, %v342
  %v499 = vpack.c.b16 %v347, %v345
  %v500 = vpack.c.b16 %v348, %v346
  %v501 = vpack.c.b16 %v351, %v349
  %v502 = vpack.c.b16 %v352, %v350
  %v503 = vpack.c.b16 %v355, %v353
  %v504 = vpack.c.b16 %v356, %v354
  %v505 = vpack.c.b16 %v359, %v357
  %v506 = vpack.c.b16 %v360, %v358
  %v507 = vpack.c.b16 %v363, %v361
  %v508 = vpack.c.b16 %v364, %v362
  %v509 = vpack.c.b16 %v367, %v365
  %v510 = vpack.c.b16 %v368, %v366
  %v511 = vpack.c.b16 %v371, %v369
  %v512 = vpack.c.b16 %v372, %v370
  %v513 = vpack.c.b16 %v375, %v373
  %v514 = vpack.c.b16 %v376, %v374
  %v515 = vpack.c.b16 %v379, %v377
  %v516 = vpack.c.b16 %v380, %v378
  %v517 = vpack.c.b16 %v383, %v381
  %v518 = vpack.c.b16 %v384, %v382
  %v519 = vpack.c.b16 %v387, %v385
  %v520 = vpack.c.b16 %v388, %v386
  %v521 = vpack.c.b16 %v391, %v389
  %v522 = vpack.c.b16 %v392, %v390
  %v523 = vpack.c.b16 %v395, %v393
  %v524 = vpack.c.b16 %v396, %v394
  %v525 = vpack.c.b16 %v399, %v397
  %v526 = vpack.c.b16 %v400, %v398
  %v527 = vpack.c.b16 %v403, %v401
  %v528 = vpack.c.b16 %v404, %v402
  %v529 = vpack.c.b16 %v407, %v405
  %v530 = vpack.c.b16 %v408, %v406
  %v531 = vpack.c.b16 %v411, %v409
  %v532 = vpack.c.b16 %v412, %v410
  %v533 = vpack.c.b16 %v415, %v413
  %v534 = vpack.c.b16 %v416, %v414
  %v535 = vpack.c.b16 %v419, %v417
  %v536 = vpack.c.b16 %v420, %v418
  %v537 = vpack.c.b16 %v423, %v421
  %v538 = vpack.c.b16 %v424, %v422
  %v539 = vpack.c.b16 %v427, %v425
  %v540 = vpack.c.b16 %v428, %v426
  %v541 = vpack.c.b16 %v431, %v429
  %v542 = vpack.c.b16 %v432, %v430
  %v543 = vpack.c.b16 %v435, %v433
  %v544 = vpack.c.b16 %v436, %v434
  %v545 = vpack.c.b16 %v439, %v437
  %v546 = vpack.c.b16 %v440, %v438
  %v547 = vpack.c.b16 %v443, %v441
  %v548 = vpack.c.b16 %v444, %v442
  %v549 = vpack.c.b16 %v447, %v445
  %v550 = vpack.c.b16 %v448, %v446
  %v551 = vpack.c.b16 %v451, %v449
  %v552 = vpack.c.b16 %v452, %v450
  %v623 = vunpack.c.l.b16 %v133
  %v624 = vunpack.c.l.b16 %v134
  %v625 = vunpack.c.l.b16 %v135
  %v626 = vunpack.c.l.b16 %v136
  %v627 = vunpack.c.l.b16 %v137
  %v628 = vunpack.c.l.b16 %v138
  %v629 = vunpack.c.l.b16 %v139
  %v630 = vunpack.c.l.b16 %v140
  %v631 = vunpack.c.l.b16 %v141
  %v632 = vunpack.c.l.b16 %v142
  %v633 = vunpack.c.l.b16 %v143
  %v634 = vunpack.c.l.b16 %v144
  %v635 = vunpack.c.l.b16 %v145
  %v636 = vunpack.c.l.b16 %v146
  %v637 = vunpack.c.l.b16 %v147
  %v638 = vunpack.c.l.b16 %v148
  %v639 = vunpack.c.l.b16 %v149
  %v640 = vunpack.c.l.b16 %v150
  %v641 = vunpack.c.l.b16 %v151
  %v642 = vunpack.c.l.b16 %v152
  %v643 = vpack.c.b16 %v624, %v623
  %v644 = vpack.c.b16 %v626, %v625
  %v645 = vpack.c.b16 %v628, %v627
  %v646 = vpack.c.b16 %v630, %v629
  %v647 = vpack.c.b16 %v632, %v631
  %v648 = vpack.c.b16 %v634, %v633
  %v649 = vpack.c.b16 %v636, %v635
  %v650 = vpack.c.b16 %v638, %v637
  %v651 = vpack.c.b16 %v640, %v639
  %v652 = vpack.c.b16 %v642, %v641
  %vm663 = vcmask 261120
  %v665 = vsel %vm663, %v454, 0
  %v668 = vsel %vm663, %v456, 0
  %v671 = vsel %vm663, %v458, 0
  %v674 = vsel %vm663, %v460, 0
  %v677 = vsel %vm663, %v462, 0
  %v680 = vsel %vm663, %v464, 0
  %v683 = vsel %vm663, %v466, 0
  %v686 = vsel %vm663, %v468, 0
  %v689 = vsel %vm663, %v470, 0
  %v692 = vsel %vm663, %v472, 0
  %v695 = vsel %vm663, %v474, 0
  %v698 = vsel %vm663, %v476, 0
  %v701 = vsel %vm663, %v478, 0
  %v704 = vsel %vm663, %v480, 0
  %v707 = vsel %vm663, %v482, 0
  %v710 = vsel %vm663, %v484, 0
  %v713 = vsel %vm663, %v486, 0
  %v716 = vsel %vm663, %v488, 0
  %v719 = vsel %vm663, %v490, 0
  %v722 = vsel %vm663, %v492, 0
  %v725 = vsel %vm663, %v494, 0
  %v728 = vsel %vm663, %v496, 0
  %v731 = vsel %vm663, %v498, 0
  %v734 = vsel %vm663, %v500, 0
  %v737 = vsel %vm663, %v502, 0
  %v740 = vsel %vm663, %v504, 0
  %v743 = vsel %vm663, %v506, 0
  %v746 = vsel %vm663, %v508, 0
  %v749 = vsel %vm663, %v510, 0
  %v752 = vsel %vm663, %v512, 0
  %v755 = vsel %vm663, %v514, 0
  %v758 = vsel %vm663, %v516, 0
  %v761 = vsel %vm663, %v518, 0
  %v764 = vsel %vm663, %v520, 0
  %v767 = vsel %vm663, %v522, 0
  %v770 = vsel %vm663, %v524, 0
  %v773 = vsel %vm663, %v526, 0
  %v776 = vsel %vm663, %v528, 0
  %v779 = vsel %vm663, %v530, 0
  %v782 = vsel %vm663, %v532, 0
  %v785 = vsel %vm663, %v534, 0
  %v788 = vsel %vm663, %v536, 0
  %v791 = vsel %vm663, %v538, 0
  %v794 = vsel %vm663, %v540, 0
  %v797 = vsel %vm663, %v542, 0
  %v800 = vsel %vm663, %v544, 0
  %v803 = vsel %vm663, %v546, 0
  %v806 = vsel %vm663, %v548, 0
  %v809 = vsel %vm663, %v550, 0
  %v812 = vsel %vm663, %v552, 0
  %814 = vmatpush.bf16.msra.mxu0 %v650
  %815 = vmatpush.bf16.msra.mxu0 %v649
  %816 = vmatpush.bf16.msra.mxu0 %v648
  %817 = vmatpush.bf16.msra.mxu0 %v647
  %818 = vmatpush.bf16.msra.mxu0 %v646
  %819 = vmatpush.bf16.msra.mxu0 %v645
  %820 = vmatpush.bf16.msra.mxu0 %v644
  %821 = vmatpush.bf16.msra.mxu0 %v643
  %822 = vmatmul.bf16.gmra.mxu0 %v453
  %v823 = vpop.f32.mrf.mxu0
  %v824 = vadd.f32 0.0, %v823
  %v825 = vpop.f32.mrf.mxu0
  %v826 = vadd.f32 0.0, %v825
  %827 = vmatmul.bf16.gmra.mxu0 %v455
  %v828 = vpop.f32.mrf.mxu0
  %v829 = vadd.f32 0.0, %v828
  %v830 = vpop.f32.mrf.mxu0
  %v831 = vadd.f32 0.0, %v830
  %832 = vmatmul.bf16.gmra.mxu0 %v457
  %v833 = vpop.f32.mrf.mxu0
  %v834 = vadd.f32 0.0, %v833
  %v835 = vpop.f32.mrf.mxu0
  %v836 = vadd.f32 0.0, %v835
  %837 = vmatmul.bf16.gmra.mxu0 %v459
  %v838 = vpop.f32.mrf.mxu0
  %v839 = vadd.f32 0.0, %v838
  %v840 = vpop.f32.mrf.mxu0
  %v841 = vadd.f32 0.0, %v840
  %842 = vmatmul.bf16.gmra.mxu0 %v461
  %v843 = vpop.f32.mrf.mxu0
  %v844 = vadd.f32 0.0, %v843
  %v845 = vpop.f32.mrf.mxu0
  %v846 = vadd.f32 0.0, %v845
  %847 = vmatmul.bf16.gmra.mxu0 %v463
  %v848 = vpop.f32.mrf.mxu0
  %v849 = vadd.f32 0.0, %v848
  %v850 = vpop.f32.mrf.mxu0
  %v851 = vadd.f32 0.0, %v850
  %852 = vmatmul.bf16.gmra.mxu0 %v465
  %v853 = vpop.f32.mrf.mxu0
  %v854 = vadd.f32 0.0, %v853
  %v855 = vpop.f32.mrf.mxu0
  %v856 = vadd.f32 0.0, %v855
  %857 = vmatmul.bf16.gmra.mxu0 %v467
  %v858 = vpop.f32.mrf.mxu0
  %v859 = vadd.f32 0.0, %v858
  %v860 = vpop.f32.mrf.mxu0
  %v861 = vadd.f32 0.0, %v860
  %862 = vmatmul.bf16.gmra.mxu0 %v469
  %v863 = vpop.f32.mrf.mxu0
  %v864 = vadd.f32 0.0, %v863
  %v865 = vpop.f32.mrf.mxu0
  %v866 = vadd.f32 0.0, %v865
  %867 = vmatmul.bf16.gmra.mxu0 %v471
  %v868 = vpop.f32.mrf.mxu0
  %v869 = vadd.f32 0.0, %v868
  %v870 = vpop.f32.mrf.mxu0
  %v871 = vadd.f32 0.0, %v870
  %872 = vmatmul.bf16.gmra.mxu0 %v473
  %v873 = vpop.f32.mrf.mxu0
  %v874 = vadd.f32 0.0, %v873
  %v875 = vpop.f32.mrf.mxu0
  %v876 = vadd.f32 0.0, %v875
  %877 = vmatmul.bf16.gmra.mxu0 %v475
  %v878 = vpop.f32.mrf.mxu0
  %v879 = vadd.f32 0.0, %v878
  %v880 = vpop.f32.mrf.mxu0
  %v881 = vadd.f32 0.0, %v880
  %882 = vmatmul.bf16.gmra.mxu0 %v477
  %v883 = vpop.f32.mrf.mxu0
  %v884 = vadd.f32 0.0, %v883
  %v885 = vpop.f32.mrf.mxu0
  %v886 = vadd.f32 0.0, %v885
  %887 = vmatmul.bf16.gmra.mxu0 %v479
  %v888 = vpop.f32.mrf.mxu0
  %v889 = vadd.f32 0.0, %v888
  %v890 = vpop.f32.mrf.mxu0
  %v891 = vadd.f32 0.0, %v890
  %892 = vmatmul.bf16.gmra.mxu0 %v481
  %v893 = vpop.f32.mrf.mxu0
  %v894 = vadd.f32 0.0, %v893
  %v895 = vpop.f32.mrf.mxu0
  %v896 = vadd.f32 0.0, %v895
  %897 = vmatmul.bf16.gmra.mxu0 %v483
  %v898 = vpop.f32.mrf.mxu0
  %v899 = vadd.f32 0.0, %v898
  %v900 = vpop.f32.mrf.mxu0
  %v901 = vadd.f32 0.0, %v900
  %902 = vmatmul.bf16.gmra.mxu0 %v485
  %v903 = vpop.f32.mrf.mxu0
  %v904 = vadd.f32 0.0, %v903
  %v905 = vpop.f32.mrf.mxu0
  %v906 = vadd.f32 0.0, %v905
  %907 = vmatmul.bf16.gmra.mxu0 %v487
  %v908 = vpop.f32.mrf.mxu0
  %v909 = vadd.f32 0.0, %v908
  %v910 = vpop.f32.mrf.mxu0
  %v911 = vadd.f32 0.0, %v910
  %912 = vmatmul.bf16.gmra.mxu0 %v489
  %v913 = vpop.f32.mrf.mxu0
  %v914 = vadd.f32 0.0, %v913
  %v915 = vpop.f32.mrf.mxu0
  %v916 = vadd.f32 0.0, %v915
  %917 = vmatmul.bf16.gmra.mxu0 %v491
  %v918 = vpop.f32.mrf.mxu0
  %v919 = vadd.f32 0.0, %v918
  %v920 = vpop.f32.mrf.mxu0
  %v921 = vadd.f32 0.0, %v920
  %922 = vmatmul.bf16.gmra.mxu0 %v493
  %v923 = vpop.f32.mrf.mxu0
  %v924 = vadd.f32 0.0, %v923
  %v925 = vpop.f32.mrf.mxu0
  %v926 = vadd.f32 0.0, %v925
  %927 = vmatmul.bf16.gmra.mxu0 %v495
  %v928 = vpop.f32.mrf.mxu0
  %v929 = vadd.f32 0.0, %v928
  %v930 = vpop.f32.mrf.mxu0
  %v931 = vadd.f32 0.0, %v930
  %932 = vmatmul.bf16.gmra.mxu0 %v497
  %v933 = vpop.f32.mrf.mxu0
  %v934 = vadd.f32 0.0, %v933
  %v935 = vpop.f32.mrf.mxu0
  %v936 = vadd.f32 0.0, %v935
  %937 = vmatmul.bf16.gmra.mxu0 %v499
  %v938 = vpop.f32.mrf.mxu0
  %v939 = vadd.f32 0.0, %v938
  %v940 = vpop.f32.mrf.mxu0
  %v941 = vadd.f32 0.0, %v940
  %942 = vmatmul.bf16.gmra.mxu0 %v501
  %v943 = vpop.f32.mrf.mxu0
  %v944 = vadd.f32 0.0, %v943
  %v945 = vpop.f32.mrf.mxu0
  %v946 = vadd.f32 0.0, %v945
  %947 = vmatmul.bf16.gmra.mxu0 %v503
  %v948 = vpop.f32.mrf.mxu0
  %v949 = vadd.f32 0.0, %v948
  %v950 = vpop.f32.mrf.mxu0
  %v951 = vadd.f32 0.0, %v950
  %952 = vmatmul.bf16.gmra.mxu0 %v505
  %v953 = vpop.f32.mrf.mxu0
  %v954 = vadd.f32 0.0, %v953
  %v955 = vpop.f32.mrf.mxu0
  %v956 = vadd.f32 0.0, %v955
  %957 = vmatmul.bf16.gmra.mxu0 %v507
  %v958 = vpop.f32.mrf.mxu0
  %v959 = vadd.f32 0.0, %v958
  %v960 = vpop.f32.mrf.mxu0
  %v961 = vadd.f32 0.0, %v960
  %962 = vmatmul.bf16.gmra.mxu0 %v509
  %v963 = vpop.f32.mrf.mxu0
  %v964 = vadd.f32 0.0, %v963
  %v965 = vpop.f32.mrf.mxu0
  %v966 = vadd.f32 0.0, %v965
  %967 = vmatmul.bf16.gmra.mxu0 %v511
  %v968 = vpop.f32.mrf.mxu0
  %v969 = vadd.f32 0.0, %v968
  %v970 = vpop.f32.mrf.mxu0
  %v971 = vadd.f32 0.0, %v970
  %972 = vmatmul.bf16.gmra.mxu0 %v513
  %v973 = vpop.f32.mrf.mxu0
  %v974 = vadd.f32 0.0, %v973
  %v975 = vpop.f32.mrf.mxu0
  %v976 = vadd.f32 0.0, %v975
  %977 = vmatmul.bf16.gmra.mxu0 %v515
  %v978 = vpop.f32.mrf.mxu0
  %v979 = vadd.f32 0.0, %v978
  %v980 = vpop.f32.mrf.mxu0
  %v981 = vadd.f32 0.0, %v980
  %982 = vmatmul.bf16.gmra.mxu0 %v517
  %v983 = vpop.f32.mrf.mxu0
  %v984 = vadd.f32 0.0, %v983
  %v985 = vpop.f32.mrf.mxu0
  %v986 = vadd.f32 0.0, %v985
  %987 = vmatmul.bf16.gmra.mxu0 %v519
  %v988 = vpop.f32.mrf.mxu0
  %v989 = vadd.f32 0.0, %v988
  %v990 = vpop.f32.mrf.mxu0
  %v991 = vadd.f32 0.0, %v990
  %992 = vmatmul.bf16.gmra.mxu0 %v521
  %v993 = vpop.f32.mrf.mxu0
  %v994 = vadd.f32 0.0, %v993
  %v995 = vpop.f32.mrf.mxu0
  %v996 = vadd.f32 0.0, %v995
  %997 = vmatmul.bf16.gmra.mxu0 %v523
  %v998 = vpop.f32.mrf.mxu0
  %v999 = vadd.f32 0.0, %v998
  %v1000 = vpop.f32.mrf.mxu0
  %v1001 = vadd.f32 0.0, %v1000
  %1002 = vmatmul.bf16.gmra.mxu0 %v525
  %v1003 = vpop.f32.mrf.mxu0
  %v1004 = vadd.f32 0.0, %v1003
  %v1005 = vpop.f32.mrf.mxu0
  %v1006 = vadd.f32 0.0, %v1005
  %1007 = vmatmul.bf16.gmra.mxu0 %v527
  %v1008 = vpop.f32.mrf.mxu0
  %v1009 = vadd.f32 0.0, %v1008
  %v1010 = vpop.f32.mrf.mxu0
  %v1011 = vadd.f32 0.0, %v1010
  %1012 = vmatmul.bf16.gmra.mxu0 %v529
  %v1013 = vpop.f32.mrf.mxu0
  %v1014 = vadd.f32 0.0, %v1013
  %v1015 = vpop.f32.mrf.mxu0
  %v1016 = vadd.f32 0.0, %v1015
  %1017 = vmatmul.bf16.gmra.mxu0 %v531
  %v1018 = vpop.f32.mrf.mxu0
  %v1019 = vadd.f32 0.0, %v1018
  %v1020 = vpop.f32.mrf.mxu0
  %v1021 = vadd.f32 0.0, %v1020
  %1022 = vmatmul.bf16.gmra.mxu0 %v533
  %v1023 = vpop.f32.mrf.mxu0
  %v1024 = vadd.f32 0.0, %v1023
  %v1025 = vpop.f32.mrf.mxu0
  %v1026 = vadd.f32 0.0, %v1025
  %1027 = vmatmul.bf16.gmra.mxu0 %v535
  %v1028 = vpop.f32.mrf.mxu0
  %v1029 = vadd.f32 0.0, %v1028
  %v1030 = vpop.f32.mrf.mxu0
  %v1031 = vadd.f32 0.0, %v1030
  %1032 = vmatmul.bf16.gmra.mxu0 %v537
  %v1033 = vpop.f32.mrf.mxu0
  %v1034 = vadd.f32 0.0, %v1033
  %v1035 = vpop.f32.mrf.mxu0
  %v1036 = vadd.f32 0.0, %v1035
  %1037 = vmatmul.bf16.gmra.mxu0 %v539
  %v1038 = vpop.f32.mrf.mxu0
  %v1039 = vadd.f32 0.0, %v1038
  %v1040 = vpop.f32.mrf.mxu0
  %v1041 = vadd.f32 0.0, %v1040
  %1042 = vmatmul.bf16.gmra.mxu0 %v541
  %v1043 = vpop.f32.mrf.mxu0
  %v1044 = vadd.f32 0.0, %v1043
  %v1045 = vpop.f32.mrf.mxu0
  %v1046 = vadd.f32 0.0, %v1045
  %1047 = vmatmul.bf16.gmra.mxu0 %v543
  %v1048 = vpop.f32.mrf.mxu0
  %v1049 = vadd.f32 0.0, %v1048
  %v1050 = vpop.f32.mrf.mxu0
  %v1051 = vadd.f32 0.0, %v1050
  %1052 = vmatmul.bf16.gmra.mxu0 %v545
  %v1053 = vpop.f32.mrf.mxu0
  %v1054 = vadd.f32 0.0, %v1053
  %v1055 = vpop.f32.mrf.mxu0
  %v1056 = vadd.f32 0.0, %v1055
  %1057 = vmatmul.bf16.gmra.mxu0 %v547
  %v1058 = vpop.f32.mrf.mxu0
  %v1059 = vadd.f32 0.0, %v1058
  %v1060 = vpop.f32.mrf.mxu0
  %v1061 = vadd.f32 0.0, %v1060
  %1062 = vmatmul.bf16.gmra.mxu0 %v549
  %v1063 = vpop.f32.mrf.mxu0
  %v1064 = vadd.f32 0.0, %v1063
  %v1065 = vpop.f32.mrf.mxu0
  %v1066 = vadd.f32 0.0, %v1065
  %1067 = vmatmul.bf16.gmra.mxu0 %v551
  %v1068 = vpop.f32.mrf.mxu0
  %v1069 = vadd.f32 0.0, %v1068
  %v1070 = vpop.f32.mrf.mxu0
  %v1071 = vadd.f32 0.0, %v1070
  %1072 = vdwg.mxu0
  %1073 = vmatpush.bf16.msra.mxu0 0
  %1074 = vmatpush.bf16.msra.mxu0 0
  %1075 = vmatpush.bf16.msra.mxu0 0
  %1076 = vmatpush.bf16.msra.mxu0 0
  %1077 = vmatpush.bf16.msra.mxu0 0
  %1078 = vmatpush.bf16.msra.mxu0 0
  %1079 = vmatpush.bf16.msra.mxu0 %v652
  %1080 = vmatpush.bf16.msra.mxu0 %v651
  %1081 = vmatmul.bf16.gmra.mxu0 %v665
  %v1082 = vpop.f32.mrf.mxu0
  %v1083 = vadd.f32 %v824, %v1082
  %v1084 = vpop.f32.mrf.mxu0
  %v1085 = vadd.f32 %v826, %v1084
  %1086 = vmatmul.bf16.gmra.mxu0 %v668
  %v1087 = vpop.f32.mrf.mxu0
  %v1088 = vadd.f32 %v829, %v1087
  %v1089 = vpop.f32.mrf.mxu0
  %v1090 = vadd.f32 %v831, %v1089
  %1091 = vmatmul.bf16.gmra.mxu0 %v671
  %v1092 = vpop.f32.mrf.mxu0
  %v1093 = vadd.f32 %v834, %v1092
  %v1094 = vpop.f32.mrf.mxu0
  %v1095 = vadd.f32 %v836, %v1094
  %1096 = vmatmul.bf16.gmra.mxu0 %v674
  %v1097 = vpop.f32.mrf.mxu0
  %v1098 = vadd.f32 %v839, %v1097
  %v1099 = vpop.f32.mrf.mxu0
  %v1100 = vadd.f32 %v841, %v1099
  %1101 = vmatmul.bf16.gmra.mxu0 %v677
  %v1102 = vpop.f32.mrf.mxu0
  %v1103 = vadd.f32 %v844, %v1102
  %v1104 = vpop.f32.mrf.mxu0
  %v1105 = vadd.f32 %v846, %v1104
  %1106 = vmatmul.bf16.gmra.mxu0 %v680
  %v1107 = vpop.f32.mrf.mxu0
  %v1108 = vadd.f32 %v849, %v1107
  %v1109 = vpop.f32.mrf.mxu0
  %v1110 = vadd.f32 %v851, %v1109
  %1111 = vmatmul.bf16.gmra.mxu0 %v683
  %v1112 = vpop.f32.mrf.mxu0
  %v1113 = vadd.f32 %v854, %v1112
  %v1114 = vpop.f32.mrf.mxu0
  %v1115 = vadd.f32 %v856, %v1114
  %1116 = vmatmul.bf16.gmra.mxu0 %v686
  %v1117 = vpop.f32.mrf.mxu0
  %v1118 = vadd.f32 %v859, %v1117
  %v1119 = vpop.f32.mrf.mxu0
  %v1120 = vadd.f32 %v861, %v1119
  %1121 = vmatmul.bf16.gmra.mxu0 %v689
  %v1122 = vpop.f32.mrf.mxu0
  %v1123 = vadd.f32 %v864, %v1122
  %v1124 = vpop.f32.mrf.mxu0
  %v1125 = vadd.f32 %v866, %v1124
  %1126 = vmatmul.bf16.gmra.mxu0 %v692
  %v1127 = vpop.f32.mrf.mxu0
  %v1128 = vadd.f32 %v869, %v1127
  %v1129 = vpop.f32.mrf.mxu0
  %v1130 = vadd.f32 %v871, %v1129
  %1131 = vmatmul.bf16.gmra.mxu0 %v695
  %v1132 = vpop.f32.mrf.mxu0
  %v1133 = vadd.f32 %v874, %v1132
  %v1134 = vpop.f32.mrf.mxu0
  %v1135 = vadd.f32 %v876, %v1134
  %1136 = vmatmul.bf16.gmra.mxu0 %v698
  %v1137 = vpop.f32.mrf.mxu0
  %v1138 = vadd.f32 %v879, %v1137
  %v1139 = vpop.f32.mrf.mxu0
  %v1140 = vadd.f32 %v881, %v1139
  %1141 = vmatmul.bf16.gmra.mxu0 %v701
  %v1142 = vpop.f32.mrf.mxu0
  %v1143 = vadd.f32 %v884, %v1142
  %v1144 = vpop.f32.mrf.mxu0
  %v1145 = vadd.f32 %v886, %v1144
  %1146 = vmatmul.bf16.gmra.mxu0 %v704
  %v1147 = vpop.f32.mrf.mxu0
  %v1148 = vadd.f32 %v889, %v1147
  %v1149 = vpop.f32.mrf.mxu0
  %v1150 = vadd.f32 %v891, %v1149
  %1151 = vmatmul.bf16.gmra.mxu0 %v707
  %v1152 = vpop.f32.mrf.mxu0
  %v1153 = vadd.f32 %v894, %v1152
  %v1154 = vpop.f32.mrf.mxu0
  %v1155 = vadd.f32 %v896, %v1154
  %1156 = vmatmul.bf16.gmra.mxu0 %v710
  %v1157 = vpop.f32.mrf.mxu0
  %v1158 = vadd.f32 %v899, %v1157
  %v1159 = vpop.f32.mrf.mxu0
  %v1160 = vadd.f32 %v901, %v1159
  %1161 = vmatmul.bf16.gmra.mxu0 %v713
  %v1162 = vpop.f32.mrf.mxu0
  %v1163 = vadd.f32 %v904, %v1162
  %v1164 = vpop.f32.mrf.mxu0
  %v1165 = vadd.f32 %v906, %v1164
  %1166 = vmatmul.bf16.gmra.mxu0 %v716
  %v1167 = vpop.f32.mrf.mxu0
  %v1168 = vadd.f32 %v909, %v1167
  %v1169 = vpop.f32.mrf.mxu0
  %v1170 = vadd.f32 %v911, %v1169
  %1171 = vmatmul.bf16.gmra.mxu0 %v719
  %v1172 = vpop.f32.mrf.mxu0
  %v1173 = vadd.f32 %v914, %v1172
  %v1174 = vpop.f32.mrf.mxu0
  %v1175 = vadd.f32 %v916, %v1174
  %1176 = vmatmul.bf16.gmra.mxu0 %v722
  %v1177 = vpop.f32.mrf.mxu0
  %v1178 = vadd.f32 %v919, %v1177
  %v1179 = vpop.f32.mrf.mxu0
  %v1180 = vadd.f32 %v921, %v1179
  %1181 = vmatmul.bf16.gmra.mxu0 %v725
  %v1182 = vpop.f32.mrf.mxu0
  %v1183 = vadd.f32 %v924, %v1182
  %v1184 = vpop.f32.mrf.mxu0
  %v1185 = vadd.f32 %v926, %v1184
  %1186 = vmatmul.bf16.gmra.mxu0 %v728
  %v1187 = vpop.f32.mrf.mxu0
  %v1188 = vadd.f32 %v929, %v1187
  %v1189 = vpop.f32.mrf.mxu0
  %v1190 = vadd.f32 %v931, %v1189
  %1191 = vmatmul.bf16.gmra.mxu0 %v731
  %v1192 = vpop.f32.mrf.mxu0
  %v1193 = vadd.f32 %v934, %v1192
  %v1194 = vpop.f32.mrf.mxu0
  %v1195 = vadd.f32 %v936, %v1194
  %1196 = vmatmul.bf16.gmra.mxu0 %v734
  %v1197 = vpop.f32.mrf.mxu0
  %v1198 = vadd.f32 %v939, %v1197
  %v1199 = vpop.f32.mrf.mxu0
  %v1200 = vadd.f32 %v941, %v1199
  %1201 = vmatmul.bf16.gmra.mxu0 %v737
  %v1202 = vpop.f32.mrf.mxu0
  %v1203 = vadd.f32 %v944, %v1202
  %v1204 = vpop.f32.mrf.mxu0
  %v1205 = vadd.f32 %v946, %v1204
  %1206 = vmatmul.bf16.gmra.mxu0 %v740
  %v1207 = vpop.f32.mrf.mxu0
  %v1208 = vadd.f32 %v949, %v1207
  %v1209 = vpop.f32.mrf.mxu0
  %v1210 = vadd.f32 %v951, %v1209
  %1211 = vmatmul.bf16.gmra.mxu0 %v743
  %v1212 = vpop.f32.mrf.mxu0
  %v1213 = vadd.f32 %v954, %v1212
  %v1214 = vpop.f32.mrf.mxu0
  %v1215 = vadd.f32 %v956, %v1214
  %1216 = vmatmul.bf16.gmra.mxu0 %v746
  %v1217 = vpop.f32.mrf.mxu0
  %v1218 = vadd.f32 %v959, %v1217
  %v1219 = vpop.f32.mrf.mxu0
  %v1220 = vadd.f32 %v961, %v1219
  %1221 = vmatmul.bf16.gmra.mxu0 %v749
  %v1222 = vpop.f32.mrf.mxu0
  %v1223 = vadd.f32 %v964, %v1222
  %v1224 = vpop.f32.mrf.mxu0
  %v1225 = vadd.f32 %v966, %v1224
  %1226 = vmatmul.bf16.gmra.mxu0 %v752
  %v1227 = vpop.f32.mrf.mxu0
  %v1228 = vadd.f32 %v969, %v1227
  %v1229 = vpop.f32.mrf.mxu0
  %v1230 = vadd.f32 %v971, %v1229
  %1231 = vmatmul.bf16.gmra.mxu0 %v755
  %v1232 = vpop.f32.mrf.mxu0
  %v1233 = vadd.f32 %v974, %v1232
  %v1234 = vpop.f32.mrf.mxu0
  %v1235 = vadd.f32 %v976, %v1234
  %1236 = vmatmul.bf16.gmra.mxu0 %v758
  %v1237 = vpop.f32.mrf.mxu0
  %v1238 = vadd.f32 %v979, %v1237
  %v1239 = vpop.f32.mrf.mxu0
  %v1240 = vadd.f32 %v981, %v1239
  %1241 = vmatmul.bf16.gmra.mxu0 %v761
  %v1242 = vpop.f32.mrf.mxu0
  %v1243 = vadd.f32 %v984, %v1242
  %v1244 = vpop.f32.mrf.mxu0
  %v1245 = vadd.f32 %v986, %v1244
  %1246 = vmatmul.bf16.gmra.mxu0 %v764
  %v1247 = vpop.f32.mrf.mxu0
  %v1248 = vadd.f32 %v989, %v1247
  %v1249 = vpop.f32.mrf.mxu0
  %v1250 = vadd.f32 %v991, %v1249
  %1251 = vmatmul.bf16.gmra.mxu0 %v767
  %v1252 = vpop.f32.mrf.mxu0
  %v1253 = vadd.f32 %v994, %v1252
  %v1254 = vpop.f32.mrf.mxu0
  %v1255 = vadd.f32 %v996, %v1254
  %1256 = vmatmul.bf16.gmra.mxu0 %v770
  %v1257 = vpop.f32.mrf.mxu0
  %v1258 = vadd.f32 %v999, %v1257
  %v1259 = vpop.f32.mrf.mxu0
  %v1260 = vadd.f32 %v1001, %v1259
  %1261 = vmatmul.bf16.gmra.mxu0 %v773
  %v1262 = vpop.f32.mrf.mxu0
  %v1263 = vadd.f32 %v1004, %v1262
  %v1264 = vpop.f32.mrf.mxu0
  %v1265 = vadd.f32 %v1006, %v1264
  %1266 = vmatmul.bf16.gmra.mxu0 %v776
  %v1267 = vpop.f32.mrf.mxu0
  %v1268 = vadd.f32 %v1009, %v1267
  %v1269 = vpop.f32.mrf.mxu0
  %v1270 = vadd.f32 %v1011, %v1269
  %1271 = vmatmul.bf16.gmra.mxu0 %v779
  %v1272 = vpop.f32.mrf.mxu0
  %v1273 = vadd.f32 %v1014, %v1272
  %v1274 = vpop.f32.mrf.mxu0
  %v1275 = vadd.f32 %v1016, %v1274
  %1276 = vmatmul.bf16.gmra.mxu0 %v782
  %v1277 = vpop.f32.mrf.mxu0
  %v1278 = vadd.f32 %v1019, %v1277
  %v1279 = vpop.f32.mrf.mxu0
  %v1280 = vadd.f32 %v1021, %v1279
  %1281 = vmatmul.bf16.gmra.mxu0 %v785
  %v1282 = vpop.f32.mrf.mxu0
  %v1283 = vadd.f32 %v1024, %v1282
  %v1284 = vpop.f32.mrf.mxu0
  %v1285 = vadd.f32 %v1026, %v1284
  %1286 = vmatmul.bf16.gmra.mxu0 %v788
  %v1287 = vpop.f32.mrf.mxu0
  %v1288 = vadd.f32 %v1029, %v1287
  %v1289 = vpop.f32.mrf.mxu0
  %v1290 = vadd.f32 %v1031, %v1289
  %1291 = vmatmul.bf16.gmra.mxu0 %v791
  %v1292 = vpop.f32.mrf.mxu0
  %v1293 = vadd.f32 %v1034, %v1292
  %v1294 = vpop.f32.mrf.mxu0
  %v1295 = vadd.f32 %v1036, %v1294
  %1296 = vmatmul.bf16.gmra.mxu0 %v794
  %v1297 = vpop.f32.mrf.mxu0
  %v1298 = vadd.f32 %v1039, %v1297
  %v1299 = vpop.f32.mrf.mxu0
  %v1300 = vadd.f32 %v1041, %v1299
  %1301 = vmatmul.bf16.gmra.mxu0 %v797
  %v1302 = vpop.f32.mrf.mxu0
  %v1303 = vadd.f32 %v1044, %v1302
  %v1304 = vpop.f32.mrf.mxu0
  %v1305 = vadd.f32 %v1046, %v1304
  %1306 = vmatmul.bf16.gmra.mxu0 %v800
  %v1307 = vpop.f32.mrf.mxu0
  %v1308 = vadd.f32 %v1049, %v1307
  %v1309 = vpop.f32.mrf.mxu0
  %v1310 = vadd.f32 %v1051, %v1309
  %1311 = vmatmul.bf16.gmra.mxu0 %v803
  %v1312 = vpop.f32.mrf.mxu0
  %v1313 = vadd.f32 %v1054, %v1312
  %v1314 = vpop.f32.mrf.mxu0
  %v1315 = vadd.f32 %v1056, %v1314
  %1316 = vmatmul.bf16.gmra.mxu0 %v806
  %v1317 = vpop.f32.mrf.mxu0
  %v1318 = vadd.f32 %v1059, %v1317
  %v1319 = vpop.f32.mrf.mxu0
  %v1320 = vadd.f32 %v1061, %v1319
  %1321 = vmatmul.bf16.gmra.mxu0 %v809
  %v1322 = vpop.f32.mrf.mxu0
  %v1323 = vadd.f32 %v1064, %v1322
  %v1324 = vpop.f32.mrf.mxu0
  %v1325 = vadd.f32 %v1066, %v1324
  %1326 = vmatmul.bf16.gmra.mxu0 %v812
  %v1327 = vpop.f32.mrf.mxu0
  %v1328 = vadd.f32 %v1069, %v1327
  %v1329 = vpop.f32.mrf.mxu0
  %v1330 = vadd.f32 %v1071, %v1329
  %1331 = vdwg.mxu0
  %v1332 = vmax.f32 %v1083, %v1145
  %v1333 = vmax.f32 %v1332, %v1208
  %v1334 = vmax.f32 %v1333, %v1270
  %v1335 = vmax.f32 %v1085, %v1148
  %v1336 = vmax.f32 %v1335, %v1210
  %v1337 = vmax.f32 %v1336, %v1273
  %v1338 = vmax.f32 %v1088, %v1150
  %v1339 = vmax.f32 %v1338, %v1213
  %v1340 = vmax.f32 %v1339, %v1275
  %v1341 = vmax.f32 %v1090, %v1153
  %v1342 = vmax.f32 %v1341, %v1215
  %v1343 = vmax.f32 %v1342, %v1278
  %v1344 = vmax.f32 %v1093, %v1155
  %v1345 = vmax.f32 %v1344, %v1218
  %v1346 = vmax.f32 %v1345, %v1280
  %v1347 = vmax.f32 %v1095, %v1158
  %v1348 = vmax.f32 %v1347, %v1220
  %v1349 = vmax.f32 %v1348, %v1283
  %v1350 = vmax.f32 %v1098, %v1160
  %v1351 = vmax.f32 %v1350, %v1223
  %v1352 = vmax.f32 %v1351, %v1285
  %v1353 = vmax.f32 %v1100, %v1163
  %v1354 = vmax.f32 %v1353, %v1225
  %v1355 = vmax.f32 %v1354, %v1288
  %v1356 = vmax.f32 %v1103, %v1165
  %v1357 = vmax.f32 %v1356, %v1228
  %v1358 = vmax.f32 %v1357, %v1290
  %v1359 = vmax.f32 %v1105, %v1168
  %v1360 = vmax.f32 %v1359, %v1230
  %v1361 = vmax.f32 %v1360, %v1293
  %v1362 = vmax.f32 %v1108, %v1170
  %v1363 = vmax.f32 %v1362, %v1233
  %v1364 = vmax.f32 %v1363, %v1295
  %v1365 = vmax.f32 %v1110, %v1173
  %v1366 = vmax.f32 %v1365, %v1235
  %v1367 = vmax.f32 %v1366, %v1298
  %v1368 = vmax.f32 %v1113, %v1175
  %v1369 = vmax.f32 %v1368, %v1238
  %v1370 = vmax.f32 %v1369, %v1300
  %v1371 = vmax.f32 %v1115, %v1178
  %v1372 = vmax.f32 %v1371, %v1240
  %v1373 = vmax.f32 %v1372, %v1303
  %v1374 = vmax.f32 %v1118, %v1180
  %v1375 = vmax.f32 %v1374, %v1243
  %v1376 = vmax.f32 %v1375, %v1305
  %v1377 = vmax.f32 %v1120, %v1183
  %v1378 = vmax.f32 %v1377, %v1245
  %v1379 = vmax.f32 %v1378, %v1308
  %v1380 = vmax.f32 %v1123, %v1185
  %v1381 = vmax.f32 %v1380, %v1248
  %v1382 = vmax.f32 %v1381, %v1310
  %v1383 = vmax.f32 %v1125, %v1188
  %v1384 = vmax.f32 %v1383, %v1250
  %v1385 = vmax.f32 %v1384, %v1313
  %v1386 = vmax.f32 %v1128, %v1190
  %v1387 = vmax.f32 %v1386, %v1253
  %v1388 = vmax.f32 %v1387, %v1315
  %v1389 = vmax.f32 %v1130, %v1193
  %v1390 = vmax.f32 %v1389, %v1255
  %v1391 = vmax.f32 %v1390, %v1318
  %v1392 = vmax.f32 %v1133, %v1195
  %v1393 = vmax.f32 %v1392, %v1258
  %v1394 = vmax.f32 %v1393, %v1320
  %v1395 = vmax.f32 %v1135, %v1198
  %v1396 = vmax.f32 %v1395, %v1260
  %v1397 = vmax.f32 %v1396, %v1323
  %v1398 = vmax.f32 %v1138, %v1200
  %v1399 = vmax.f32 %v1398, %v1263
  %v1400 = vmax.f32 %v1399, %v1325
  %v1401 = vmax.f32 %v1140, %v1203
  %v1402 = vmax.f32 %v1401, %v1265
  %v1403 = vmax.f32 %v1402, %v1328
  %v1404 = vmax.f32 %v1143, %v1205
  %v1405 = vmax.f32 %v1404, %v1268
  %v1406 = vmax.f32 %v1405, %v1330
  %v1407 = vld [vmem:[%s2] sm:$0x1]
  %v1409 = vperm.slane %v1407, 0
  %v1411 = vadd.f32 %v1334, %v1409
  %v1412 = vadd.f32 %v1337, %v1409
  %v1413 = vadd.f32 %v1340, %v1409
  %v1414 = vadd.f32 %v1343, %v1409
  %v1415 = vadd.f32 %v1346, %v1409
  %v1416 = vadd.f32 %v1349, %v1409
  %v1417 = vadd.f32 %v1352, %v1409
  %v1418 = vadd.f32 %v1355, %v1409
  %v1419 = vadd.f32 %v1358, %v1409
  %v1420 = vadd.f32 %v1361, %v1409
  %v1421 = vadd.f32 %v1364, %v1409
  %v1422 = vadd.f32 %v1367, %v1409
  %v1423 = vadd.f32 %v1370, %v1409
  %v1424 = vadd.f32 %v1373, %v1409
  %v1425 = vadd.f32 %v1376, %v1409
  %v1426 = vadd.f32 %v1379, %v1409
  %v1427 = vadd.f32 %v1382, %v1409
  %v1428 = vadd.f32 %v1385, %v1409
  %v1429 = vadd.f32 %v1388, %v1409
  %v1430 = vadd.f32 %v1391, %v1409
  %v1431 = vadd.f32 %v1394, %v1409
  %v1432 = vadd.f32 %v1397, %v1409
  %v1433 = vadd.f32 %v1400, %v1409
  %v1434 = vadd.f32 %v1403, %v1409
  %v1435 = vadd.f32 %v1406, %v1409
  %v1436 = vmax.f32 %v1411, 0.0
  %v1437 = vmax.f32 %v1412, 0.0
  %v1438 = vmax.f32 %v1413, 0.0
  %v1439 = vmax.f32 %v1414, 0.0
  %v1440 = vmax.f32 %v1415, 0.0
  %v1441 = vmax.f32 %v1416, 0.0
  %v1442 = vmax.f32 %v1417, 0.0
  %v1443 = vmax.f32 %v1418, 0.0
  %v1444 = vmax.f32 %v1419, 0.0
  %v1445 = vmax.f32 %v1420, 0.0
  %v1446 = vmax.f32 %v1421, 0.0
  %v1447 = vmax.f32 %v1422, 0.0
  %v1448 = vmax.f32 %v1423, 0.0
  %v1449 = vmax.f32 %v1424, 0.0
  %v1450 = vmax.f32 %v1425, 0.0
  %v1451 = vmax.f32 %v1426, 0.0
  %v1452 = vmax.f32 %v1427, 0.0
  %v1453 = vmax.f32 %v1428, 0.0
  %v1454 = vmax.f32 %v1429, 0.0
  %v1455 = vmax.f32 %v1430, 0.0
  %v1456 = vmax.f32 %v1431, 0.0
  %v1457 = vmax.f32 %v1432, 0.0
  %v1458 = vmax.f32 %v1433, 0.0
  %v1459 = vmax.f32 %v1434, 0.0
  %v1460 = vmax.f32 %v1435, 0.0
  %v1461 = vpack.c.bf16 %v1436, %v1436
  %v1462 = vpack.c.bf16 %v1437, %v1437
  %v1463 = vpack.c.bf16 %v1438, %v1438
  %v1464 = vpack.c.bf16 %v1439, %v1439
  %v1465 = vpack.c.bf16 %v1440, %v1440
  %v1466 = vpack.c.bf16 %v1441, %v1441
  %v1467 = vpack.c.bf16 %v1442, %v1442
  %v1468 = vpack.c.bf16 %v1443, %v1443
  %v1469 = vpack.c.bf16 %v1444, %v1444
  %v1470 = vpack.c.bf16 %v1445, %v1445
  %v1471 = vpack.c.bf16 %v1446, %v1446
  %v1472 = vpack.c.bf16 %v1447, %v1447
  %v1473 = vpack.c.bf16 %v1448, %v1448
  %v1474 = vpack.c.bf16 %v1449, %v1449
  %v1475 = vpack.c.bf16 %v1450, %v1450
  %v1476 = vpack.c.bf16 %v1451, %v1451
  %v1477 = vpack.c.bf16 %v1452, %v1452
  %v1478 = vpack.c.bf16 %v1453, %v1453
  %v1479 = vpack.c.bf16 %v1454, %v1454
  %v1480 = vpack.c.bf16 %v1455, %v1455
  %v1481 = vpack.c.bf16 %v1456, %v1456
  %v1482 = vpack.c.bf16 %v1457, %v1457
  %v1483 = vpack.c.bf16 %v1458, %v1458
  %v1484 = vpack.c.bf16 %v1459, %v1459
  %v1485 = vpack.c.bf16 %v1460, %v1460
  %1486 = vst [vmem:[#allocation2] sm:$0xf] %v1461
  %1487 = vst [vmem:[#allocation2 + $0x4] sm:$0xf] %v1462
  %1488 = vst [vmem:[#allocation2 + $0x8] sm:$0xf] %v1463
  %1489 = vst [vmem:[#allocation2 + $0xc] sm:$0xf] %v1464
  %1490 = vst [vmem:[#allocation2 + $0x10] sm:$0xf] %v1465
  %1491 = vst [vmem:[#allocation2 + $0x14] sm:$0xf] %v1466
  %1492 = vst [vmem:[#allocation2 + $0x18] sm:$0xf] %v1467
  %1493 = vst [vmem:[#allocation2 + $0x1c] sm:$0xf] %v1468
  %1494 = vst [vmem:[#allocation2 + $0x20] sm:$0xf] %v1469
  %1495 = vst [vmem:[#allocation2 + $0x24] sm:$0xf] %v1470
  %1496 = vst [vmem:[#allocation2 + $0x28] sm:$0xf] %v1471
  %1497 = vst [vmem:[#allocation2 + $0x2c] sm:$0xf] %v1472
  %1498 = vst [vmem:[#allocation2 + $0x30] sm:$0xf] %v1473
  %1499 = vst [vmem:[#allocation2 + $0x34] sm:$0xf] %v1474
  %1500 = vst [vmem:[#allocation2 + $0x38] sm:$0xf] %v1475
  %1501 = vst [vmem:[#allocation2 + $0x3c] sm:$0xf] %v1476
  %1502 = vst [vmem:[#allocation2 + $0x40] sm:$0xf] %v1477
  %1503 = vst [vmem:[#allocation2 + $0x44] sm:$0xf] %v1478
  %1504 = vst [vmem:[#allocation2 + $0x48] sm:$0xf] %v1479
  %1505 = vst [vmem:[#allocation2 + $0x4c] sm:$0xf] %v1480
  %1506 = vst [vmem:[#allocation2 + $0x50] sm:$0xf] %v1481
  %1507 = vst [vmem:[#allocation2 + $0x54] sm:$0xf] %v1482
  %1508 = vst [vmem:[#allocation2 + $0x58] sm:$0xf] %v1483
  %1509 = vst [vmem:[#allocation2 + $0x5c] sm:$0xf] %v1484
  %1510 = vst [vmem:[#allocation2 + $0x60] sm:$0xf] %v1485
  %v1511 = vld [vmem:[#allocation2] sm:$0xff]
  %v1512 = vld [vmem:[#allocation2 + $0x8] sm:$0xff]
  %v1513 = vld [vmem:[#allocation2 + $0x10] sm:$0xff]
  %v1514 = vld [vmem:[#allocation2 + $0x18] sm:$0xff]
  %v1515 = vld [vmem:[#allocation2 + $0x20] sm:$0xff]
  %v1516 = vld [vmem:[#allocation2 + $0x28] sm:$0xff]
  %v1517 = vld [vmem:[#allocation2 + $0x30] sm:$0xff]
  %v1518 = vld [vmem:[#allocation2 + $0x38] sm:$0xff]
  %v1519 = vld [vmem:[#allocation2 + $0x40] sm:$0xff]
  %v1520 = vld [vmem:[#allocation2 + $0x48] sm:$0xff]
  %v1521 = vld [vmem:[#allocation2 + $0x50] sm:$0xff]
  %v1522 = vld [vmem:[#allocation2 + $0x58] sm:$0xff]
  %v1523 = vld [vmem:[#allocation2 + $0x60] sm:$0xf]
  %v1524 = vld [vmem:[%s3] sm:$0xf]
  %v1525 = vld [vmem:[%s3 + $0x4] sm:$0xf]
  %v1526 = vld [vmem:[%s3 + $0x8] sm:$0xf]
  %v1527 = vld [vmem:[%s3 + $0xc] sm:$0xf]
  %v1528 = vld [vmem:[%s3 + $0x10] sm:$0xf]
  %v1529 = vld [vmem:[%s3 + $0x14] sm:$0xf]
  %v1530 = vld [vmem:[%s3 + $0x18] sm:$0xf]
  %v1531 = vld [vmem:[%s3 + $0x1c] sm:$0xf]
  %v1532 = vld [vmem:[%s3 + $0x20] sm:$0xf]
  %v1533 = vld [vmem:[%s3 + $0x24] sm:$0xf]
  %v1534 = vld [vmem:[%s3 + $0x28] sm:$0xf]
  %v1535 = vld [vmem:[%s3 + $0x2c] sm:$0xf]
  %v1536 = vld [vmem:[%s3 + $0x30] sm:$0xf]
  %v1537 = vld [vmem:[%s3 + $0x34] sm:$0xf]
  %v1538 = vld [vmem:[%s3 + $0x38] sm:$0xf]
  %v1539 = vld [vmem:[%s3 + $0x3c] sm:$0xf]
  %v1540 = vld [vmem:[%s3 + $0x40] sm:$0xf]
  %v1541 = vld [vmem:[%s3 + $0x44] sm:$0xf]
  %v1542 = vld [vmem:[%s3 + $0x48] sm:$0xf]
  %v1543 = vld [vmem:[%s3 + $0x4c] sm:$0xf]
  %v1544 = vld [vmem:[%s3 + $0x50] sm:$0xf]
  %v1545 = vld [vmem:[%s3 + $0x54] sm:$0xf]
  %v1546 = vld [vmem:[%s3 + $0x58] sm:$0xf]
  %v1547 = vld [vmem:[%s3 + $0x5c] sm:$0xf]
  %v1548 = vld [vmem:[%s3 + $0x60] sm:$0xf]
  %v1549 = vld [vmem:[%s3 + $0x64] sm:$0xf]
  %v1550 = vld [vmem:[%s3 + $0x68] sm:$0xf]
  %v1551 = vld [vmem:[%s3 + $0x6c] sm:$0xf]
  %v1552 = vld [vmem:[%s3 + $0x70] sm:$0xf]
  %v1553 = vld [vmem:[%s3 + $0x74] sm:$0xf]
  %v1554 = vld [vmem:[%s3 + $0x78] sm:$0xf]
  %v1555 = vld [vmem:[%s3 + $0x7c] sm:$0xf]
  %v1556 = vld [vmem:[%s3 + $0x80] sm:$0xf]
  %v1557 = vld [vmem:[%s3 + $0x84] sm:$0xf]
  %v1558 = vld [vmem:[%s3 + $0x88] sm:$0xf]
  %v1559 = vld [vmem:[%s3 + $0x8c] sm:$0xf]
  %v1560 = vld [vmem:[%s3 + $0x90] sm:$0xf]
  %v1561 = vld [vmem:[%s3 + $0x94] sm:$0xf]
  %v1562 = vld [vmem:[%s3 + $0x98] sm:$0xf]
  %v1563 = vld [vmem:[%s3 + $0x9c] sm:$0xf]
  %v1564 = vld [vmem:[%s3 + $0xa0] sm:$0xf]
  %v1565 = vld [vmem:[%s3 + $0xa4] sm:$0xf]
  %v1566 = vld [vmem:[%s3 + $0xa8] sm:$0xf]
  %v1567 = vld [vmem:[%s3 + $0xac] sm:$0xf]
  %v1568 = vld [vmem:[%s3 + $0xb0] sm:$0xf]
  %v1569 = vld [vmem:[%s3 + $0xb4] sm:$0xf]
  %v1570 = vld [vmem:[%s3 + $0xb8] sm:$0xf]
  %v1571 = vld [vmem:[%s3 + $0xbc] sm:$0xf]
  %v1572 = vld [vmem:[%s3 + $0xc0] sm:$0xf]
  %v1573 = vld [vmem:[%s3 + $0xc4] sm:$0xf]
  %v1574 = vld [vmem:[%s3 + $0xc8] sm:$0xf]
  %v1575 = vld [vmem:[%s3 + $0xcc] sm:$0xf]
  %v1576 = vld [vmem:[%s3 + $0xd0] sm:$0xf]
  %v1577 = vld [vmem:[%s3 + $0xd4] sm:$0xf]
  %v1578 = vld [vmem:[%s3 + $0xd8] sm:$0xf]
  %v1579 = vld [vmem:[%s3 + $0xdc] sm:$0xf]
  %v1580 = vld [vmem:[%s3 + $0xe0] sm:$0xf]
  %v1581 = vld [vmem:[%s3 + $0xe4] sm:$0xf]
  %v1582 = vld [vmem:[%s3 + $0xe8] sm:$0xf]
  %v1583 = vld [vmem:[%s3 + $0xec] sm:$0xf]
  %v1584 = vld [vmem:[%s3 + $0xf0] sm:$0xf]
  %v1585 = vld [vmem:[%s3 + $0xf4] sm:$0xf]
  %v1586 = vld [vmem:[%s3 + $0xf8] sm:$0xf]
  %v1587 = vld [vmem:[%s3 + $0xfc] sm:$0xf]
  %v1588 = vld [vmem:[%s3 + $0x100] sm:$0xf]
  %v1589 = vld [vmem:[%s3 + $0x104] sm:$0xf]
  %v1590 = vld [vmem:[%s3 + $0x108] sm:$0xf]
  %v1591 = vld [vmem:[%s3 + $0x10c] sm:$0xf]
  %v1592 = vld [vmem:[%s3 + $0x110] sm:$0xf]
  %v1593 = vld [vmem:[%s3 + $0x114] sm:$0xf]
  %v1594 = vld [vmem:[%s3 + $0x118] sm:$0xf]
  %v1595 = vld [vmem:[%s3 + $0x11c] sm:$0xf]
  %v1596 = vld [vmem:[%s3 + $0x120] sm:$0xf]
  %v1597 = vld [vmem:[%s3 + $0x124] sm:$0xf]
  %v1598 = vld [vmem:[%s3 + $0x128] sm:$0xf]
  %v1599 = vld [vmem:[%s3 + $0x12c] sm:$0xf]
  %v1600 = vld [vmem:[%s3 + $0x130] sm:$0xf]
  %v1601 = vld [vmem:[%s3 + $0x134] sm:$0xf]
  %v1602 = vld [vmem:[%s3 + $0x138] sm:$0xf]
  %v1603 = vld [vmem:[%s3 + $0x13c] sm:$0xf]
  %v1604 = vld [vmem:[%s3 + $0x140] sm:$0xf]
  %v1605 = vld [vmem:[%s3 + $0x144] sm:$0xf]
  %v1606 = vld [vmem:[%s3 + $0x148] sm:$0xf]
  %v1607 = vld [vmem:[%s3 + $0x14c] sm:$0xf]
  %v1608 = vld [vmem:[%s3 + $0x150] sm:$0xf]
  %v1609 = vld [vmem:[%s3 + $0x154] sm:$0xf]
  %v1610 = vld [vmem:[%s3 + $0x158] sm:$0xf]
  %v1611 = vld [vmem:[%s3 + $0x15c] sm:$0xf]
  %v1612 = vld [vmem:[%s3 + $0x160] sm:$0xf]
  %v1613 = vld [vmem:[%s3 + $0x164] sm:$0xf]
  %v1614 = vld [vmem:[%s3 + $0x168] sm:$0xf]
  %v1615 = vld [vmem:[%s3 + $0x16c] sm:$0xf]
  %v1616 = vld [vmem:[%s3 + $0x170] sm:$0xf]
  %v1617 = vld [vmem:[%s3 + $0x174] sm:$0xf]
  %v1618 = vld [vmem:[%s3 + $0x178] sm:$0xf]
  %v1619 = vld [vmem:[%s3 + $0x17c] sm:$0xf]
  %v1620 = vld [vmem:[%s3 + $0x180] sm:$0xf]
  %v1621 = vld [vmem:[%s3 + $0x184] sm:$0xf]
  %v1622 = vld [vmem:[%s3 + $0x188] sm:$0xf]
  %v1623 = vld [vmem:[%s3 + $0x18c] sm:$0xf]
  %v1624 = vld [vmem:[%s3 + $0x190] sm:$0xf]
  %v1625 = vld [vmem:[%s3 + $0x194] sm:$0xf]
  %v1626 = vld [vmem:[%s3 + $0x198] sm:$0xf]
  %v1627 = vld [vmem:[%s3 + $0x19c] sm:$0xf]
  %v1628 = vld [vmem:[%s3 + $0x1a0] sm:$0xf]
  %v1629 = vld [vmem:[%s3 + $0x1a4] sm:$0xf]
  %v1630 = vld [vmem:[%s3 + $0x1a8] sm:$0xf]
  %v1631 = vld [vmem:[%s3 + $0x1ac] sm:$0xf]
  %v1632 = vld [vmem:[%s3 + $0x1b0] sm:$0xf]
  %v1633 = vld [vmem:[%s3 + $0x1b4] sm:$0xf]
  %v1634 = vld [vmem:[%s3 + $0x1b8] sm:$0xf]
  %v1635 = vld [vmem:[%s3 + $0x1bc] sm:$0xf]
  %v1636 = vld [vmem:[%s3 + $0x1c0] sm:$0xf]
  %v1637 = vld [vmem:[%s3 + $0x1c4] sm:$0xf]
  %v1638 = vld [vmem:[%s3 + $0x1c8] sm:$0xf]
  %v1639 = vld [vmem:[%s3 + $0x1cc] sm:$0xf]
  %v1640 = vld [vmem:[%s3 + $0x1d0] sm:$0xf]
  %v1641 = vld [vmem:[%s3 + $0x1d4] sm:$0xf]
  %v1642 = vld [vmem:[%s3 + $0x1d8] sm:$0xf]
  %v1643 = vld [vmem:[%s3 + $0x1dc] sm:$0xf]
  %v1644 = vld [vmem:[%s3 + $0x1e0] sm:$0xf]
  %v1645 = vld [vmem:[%s3 + $0x1e4] sm:$0xf]
  %v1646 = vld [vmem:[%s3 + $0x1e8] sm:$0xf]
  %v1647 = vld [vmem:[%s3 + $0x1ec] sm:$0xf]
  %v1648 = vld [vmem:[%s3 + $0x1f0] sm:$0xf]
  %v1649 = vld [vmem:[%s3 + $0x1f4] sm:$0xf]
  %v1650 = vld [vmem:[%s3 + $0x1f8] sm:$0xf]
  %v1651 = vld [vmem:[%s3 + $0x1fc] sm:$0xf]
  %v1652 = vld [vmem:[%s3 + $0x200] sm:$0xf]
  %v1653 = vld [vmem:[%s3 + $0x204] sm:$0xf]
  %v1654 = vld [vmem:[%s3 + $0x208] sm:$0xf]
  %v1655 = vld [vmem:[%s3 + $0x20c] sm:$0xf]
  %v1656 = vld [vmem:[%s3 + $0x210] sm:$0xf]
  %v1657 = vld [vmem:[%s3 + $0x214] sm:$0xf]
  %v1658 = vld [vmem:[%s3 + $0x218] sm:$0xf]
  %v1659 = vld [vmem:[%s3 + $0x21c] sm:$0xf]
  %v1660 = vld [vmem:[%s3 + $0x220] sm:$0xf]
  %v1661 = vld [vmem:[%s3 + $0x224] sm:$0xf]
  %v1662 = vld [vmem:[%s3 + $0x228] sm:$0xf]
  %v1663 = vld [vmem:[%s3 + $0x22c] sm:$0xf]
  %v1664 = vld [vmem:[%s3 + $0x230] sm:$0xf]
  %v1665 = vld [vmem:[%s3 + $0x234] sm:$0xf]
  %v1666 = vld [vmem:[%s3 + $0x238] sm:$0xf]
  %v1667 = vld [vmem:[%s3 + $0x23c] sm:$0xf]
  %v1668 = vld [vmem:[%s3 + $0x240] sm:$0xf]
  %v1669 = vld [vmem:[%s3 + $0x244] sm:$0xf]
  %v1670 = vld [vmem:[%s3 + $0x248] sm:$0xf]
  %v1671 = vld [vmem:[%s3 + $0x24c] sm:$0xf]
  %v1672 = vld [vmem:[%s3 + $0x250] sm:$0xf]
  %v1673 = vld [vmem:[%s3 + $0x254] sm:$0xf]
  %v1674 = vld [vmem:[%s3 + $0x258] sm:$0xf]
  %v1675 = vld [vmem:[%s3 + $0x25c] sm:$0xf]
  %v1676 = vld [vmem:[%s3 + $0x260] sm:$0xf]
  %v1677 = vld [vmem:[%s3 + $0x264] sm:$0xf]
  %v1678 = vld [vmem:[%s3 + $0x268] sm:$0xf]
  %v1679 = vld [vmem:[%s3 + $0x26c] sm:$0xf]
  %v1680 = vld [vmem:[%s3 + $0x270] sm:$0xf]
  %v1681 = vld [vmem:[%s3 + $0x274] sm:$0xf]
  %v1682 = vld [vmem:[%s3 + $0x278] sm:$0xf]
  %v1683 = vld [vmem:[%s3 + $0x27c] sm:$0xf]
  %v1684 = vld [vmem:[%s3 + $0x280] sm:$0xf]
  %v1685 = vld [vmem:[%s3 + $0x284] sm:$0xf]
  %v1686 = vld [vmem:[%s3 + $0x288] sm:$0xf]
  %v1687 = vld [vmem:[%s3 + $0x28c] sm:$0xf]
  %v1688 = vld [vmem:[%s3 + $0x290] sm:$0xf]
  %v1689 = vld [vmem:[%s3 + $0x294] sm:$0xf]
  %v1690 = vld [vmem:[%s3 + $0x298] sm:$0xf]
  %v1691 = vld [vmem:[%s3 + $0x29c] sm:$0xf]
  %v1692 = vld [vmem:[%s3 + $0x2a0] sm:$0xf]
  %v1693 = vld [vmem:[%s3 + $0x2a4] sm:$0xf]
  %v1694 = vld [vmem:[%s3 + $0x2a8] sm:$0xf]
  %v1695 = vld [vmem:[%s3 + $0x2ac] sm:$0xf]
  %v1696 = vld [vmem:[%s3 + $0x2b0] sm:$0xf]
  %v1697 = vld [vmem:[%s3 + $0x2b4] sm:$0xf]
  %v1698 = vld [vmem:[%s3 + $0x2b8] sm:$0xf]
  %v1699 = vld [vmem:[%s3 + $0x2bc] sm:$0xf]
  %v1700 = vld [vmem:[%s3 + $0x2c0] sm:$0xf]
  %v1701 = vld [vmem:[%s3 + $0x2c4] sm:$0xf]
  %v1702 = vld [vmem:[%s3 + $0x2c8] sm:$0xf]
  %v1703 = vld [vmem:[%s3 + $0x2cc] sm:$0xf]
  %v1704 = vld [vmem:[%s3 + $0x2d0] sm:$0xf]
  %v1705 = vld [vmem:[%s3 + $0x2d4] sm:$0xf]
  %v1706 = vld [vmem:[%s3 + $0x2d8] sm:$0xf]
  %v1707 = vld [vmem:[%s3 + $0x2dc] sm:$0xf]
  %v1708 = vld [vmem:[%s3 + $0x2e0] sm:$0xf]
  %v1709 = vld [vmem:[%s3 + $0x2e4] sm:$0xf]
  %v1710 = vld [vmem:[%s3 + $0x2e8] sm:$0xf]
  %v1711 = vld [vmem:[%s3 + $0x2ec] sm:$0xf]
  %v1712 = vld [vmem:[%s3 + $0x2f0] sm:$0xf]
  %v1713 = vld [vmem:[%s3 + $0x2f4] sm:$0xf]
  %v1714 = vld [vmem:[%s3 + $0x2f8] sm:$0xf]
  %v1715 = vld [vmem:[%s3 + $0x2fc] sm:$0xf]
  %v1716 = vld [vmem:[%s3 + $0x300] sm:$0xf]
  %v1717 = vld [vmem:[%s3 + $0x304] sm:$0xf]
  %v1718 = vld [vmem:[%s3 + $0x308] sm:$0xf]
  %v1719 = vld [vmem:[%s3 + $0x30c] sm:$0xf]
  %v1720 = vld [vmem:[%s3 + $0x310] sm:$0xf]
  %v1721 = vld [vmem:[%s3 + $0x314] sm:$0xf]
  %v1722 = vld [vmem:[%s3 + $0x318] sm:$0xf]
  %v1723 = vld [vmem:[%s3 + $0x31c] sm:$0xf]
  %v1724 = vld [vmem:[%s3 + $0x320] sm:$0xf]
  %v1725 = vld [vmem:[%s3 + $0x324] sm:$0xf]
  %v1726 = vld [vmem:[%s3 + $0x328] sm:$0xf]
  %v1727 = vld [vmem:[%s3 + $0x32c] sm:$0xf]
  %v1728 = vld [vmem:[%s3 + $0x330] sm:$0xf]
  %v1729 = vld [vmem:[%s3 + $0x334] sm:$0xf]
  %v1730 = vld [vmem:[%s3 + $0x338] sm:$0xf]
  %v1731 = vld [vmem:[%s3 + $0x33c] sm:$0xf]
  %v1732 = vld [vmem:[%s3 + $0x340] sm:$0xf]
  %v1733 = vld [vmem:[%s3 + $0x344] sm:$0xf]
  %v1734 = vld [vmem:[%s3 + $0x348] sm:$0xf]
  %v1735 = vld [vmem:[%s3 + $0x34c] sm:$0xf]
  %v1736 = vld [vmem:[%s3 + $0x350] sm:$0xf]
  %v1737 = vld [vmem:[%s3 + $0x354] sm:$0xf]
  %v1738 = vld [vmem:[%s3 + $0x358] sm:$0xf]
  %v1739 = vld [vmem:[%s3 + $0x35c] sm:$0xf]
  %v1740 = vld [vmem:[%s3 + $0x360] sm:$0xf]
  %v1741 = vld [vmem:[%s3 + $0x364] sm:$0xf]
  %v1742 = vld [vmem:[%s3 + $0x368] sm:$0xf]
  %v1743 = vld [vmem:[%s3 + $0x36c] sm:$0xf]
  %v1744 = vld [vmem:[%s3 + $0x370] sm:$0xf]
  %v1745 = vld [vmem:[%s3 + $0x374] sm:$0xf]
  %v1746 = vld [vmem:[%s3 + $0x378] sm:$0xf]
  %v1747 = vld [vmem:[%s3 + $0x37c] sm:$0xf]
  %v1748 = vld [vmem:[%s3 + $0x380] sm:$0xf]
  %v1749 = vld [vmem:[%s3 + $0x384] sm:$0xf]
  %v1750 = vld [vmem:[%s3 + $0x388] sm:$0xf]
  %v1751 = vld [vmem:[%s3 + $0x38c] sm:$0xf]
  %v1752 = vld [vmem:[%s3 + $0x390] sm:$0xf]
  %v1753 = vld [vmem:[%s3 + $0x394] sm:$0xf]
  %v1754 = vld [vmem:[%s3 + $0x398] sm:$0xf]
  %v1755 = vld [vmem:[%s3 + $0x39c] sm:$0xf]
  %v1756 = vld [vmem:[%s3 + $0x3a0] sm:$0xf]
  %v1757 = vld [vmem:[%s3 + $0x3a4] sm:$0xf]
  %v1758 = vld [vmem:[%s3 + $0x3a8] sm:$0xf]
  %v1759 = vld [vmem:[%s3 + $0x3ac] sm:$0xf]
  %v1760 = vld [vmem:[%s3 + $0x3b0] sm:$0xf]
  %v1761 = vld [vmem:[%s3 + $0x3b4] sm:$0xf]
  %v1762 = vld [vmem:[%s3 + $0x3b8] sm:$0xf]
  %v1763 = vld [vmem:[%s3 + $0x3bc] sm:$0xf]
  %v1764 = vld [vmem:[%s3 + $0x3c0] sm:$0xf]
  %v1765 = vld [vmem:[%s3 + $0x3c4] sm:$0xf]
  %v1766 = vld [vmem:[%s3 + $0x3c8] sm:$0xf]
  %v1767 = vld [vmem:[%s3 + $0x3cc] sm:$0xf]
  %v1768 = vld [vmem:[%s3 + $0x3d0] sm:$0xf]
  %v1769 = vld [vmem:[%s3 + $0x3d4] sm:$0xf]
  %v1770 = vld [vmem:[%s3 + $0x3d8] sm:$0xf]
  %v1771 = vld [vmem:[%s3 + $0x3dc] sm:$0xf]
  %v1772 = vld [vmem:[%s3 + $0x3e0] sm:$0xf]
  %v1773 = vld [vmem:[%s3 + $0x3e4] sm:$0xf]
  %v1774 = vld [vmem:[%s3 + $0x3e8] sm:$0xf]
  %v1775 = vld [vmem:[%s3 + $0x3ec] sm:$0xf]
  %v1776 = vld [vmem:[%s3 + $0x3f0] sm:$0xf]
  %v1777 = vld [vmem:[%s3 + $0x3f4] sm:$0xf]
  %v1778 = vld [vmem:[%s3 + $0x3f8] sm:$0xf]
  %v1779 = vld [vmem:[%s3 + $0x3fc] sm:$0xf]
  %v1780 = vld [vmem:[%s3 + $0x400] sm:$0xf]
  %v1781 = vld [vmem:[%s3 + $0x404] sm:$0xf]
  %v1782 = vld [vmem:[%s3 + $0x408] sm:$0xf]
  %v1783 = vld [vmem:[%s3 + $0x40c] sm:$0xf]
  %v1784 = vld [vmem:[%s3 + $0x410] sm:$0xf]
  %v1785 = vld [vmem:[%s3 + $0x414] sm:$0xf]
  %v1786 = vld [vmem:[%s3 + $0x418] sm:$0xf]
  %v1787 = vld [vmem:[%s3 + $0x41c] sm:$0xf]
  %v1788 = vld [vmem:[%s3 + $0x420] sm:$0xf]
  %v1789 = vld [vmem:[%s3 + $0x424] sm:$0xf]
  %v1790 = vld [vmem:[%s3 + $0x428] sm:$0xf]
  %v1791 = vld [vmem:[%s3 + $0x42c] sm:$0xf]
  %v1792 = vld [vmem:[%s3 + $0x430] sm:$0xf]
  %v1793 = vld [vmem:[%s3 + $0x434] sm:$0xf]
  %v1794 = vld [vmem:[%s3 + $0x438] sm:$0xf]
  %v1795 = vld [vmem:[%s3 + $0x43c] sm:$0xf]
  %v1796 = vld [vmem:[%s3 + $0x440] sm:$0xf]
  %v1797 = vld [vmem:[%s3 + $0x444] sm:$0xf]
  %v1798 = vld [vmem:[%s3 + $0x448] sm:$0xf]
  %v1799 = vld [vmem:[%s3 + $0x44c] sm:$0xf]
  %v1800 = vld [vmem:[%s3 + $0x450] sm:$0xf]
  %v1801 = vld [vmem:[%s3 + $0x454] sm:$0xf]
  %v1802 = vld [vmem:[%s3 + $0x458] sm:$0xf]
  %v1803 = vld [vmem:[%s3 + $0x45c] sm:$0xf]
  %v1804 = vld [vmem:[%s3 + $0x460] sm:$0xf]
  %v1805 = vld [vmem:[%s3 + $0x464] sm:$0xf]
  %v1806 = vld [vmem:[%s3 + $0x468] sm:$0xf]
  %v1807 = vld [vmem:[%s3 + $0x46c] sm:$0xf]
  %v1808 = vld [vmem:[%s3 + $0x470] sm:$0xf]
  %v1809 = vld [vmem:[%s3 + $0x474] sm:$0xf]
  %v1810 = vld [vmem:[%s3 + $0x478] sm:$0xf]
  %v1811 = vld [vmem:[%s3 + $0x47c] sm:$0xf]
  %v1812 = vld [vmem:[%s3 + $0x480] sm:$0xf]
  %v1813 = vld [vmem:[%s3 + $0x484] sm:$0xf]
  %v1814 = vld [vmem:[%s3 + $0x488] sm:$0xf]
  %v1815 = vld [vmem:[%s3 + $0x48c] sm:$0xf]
  %v1816 = vld [vmem:[%s3 + $0x490] sm:$0xf]
  %v1817 = vld [vmem:[%s3 + $0x494] sm:$0xf]
  %v1818 = vld [vmem:[%s3 + $0x498] sm:$0xf]
  %v1819 = vld [vmem:[%s3 + $0x49c] sm:$0xf]
  %v1820 = vld [vmem:[%s3 + $0x4a0] sm:$0xf]
  %v1821 = vld [vmem:[%s3 + $0x4a4] sm:$0xf]
  %v1822 = vld [vmem:[%s3 + $0x4a8] sm:$0xf]
  %v1823 = vld [vmem:[%s3 + $0x4ac] sm:$0xf]
  %v1824 = vld [vmem:[%s3 + $0x4b0] sm:$0xf]
  %v1825 = vld [vmem:[%s3 + $0x4b4] sm:$0xf]
  %v1826 = vld [vmem:[%s3 + $0x4b8] sm:$0xf]
  %v1827 = vld [vmem:[%s3 + $0x4bc] sm:$0xf]
  %v1828 = vld [vmem:[%s3 + $0x4c0] sm:$0xf]
  %v1829 = vld [vmem:[%s3 + $0x4c4] sm:$0xf]
  %v1830 = vld [vmem:[%s3 + $0x4c8] sm:$0xf]
  %v1831 = vld [vmem:[%s3 + $0x4cc] sm:$0xf]
  %v1832 = vld [vmem:[%s3 + $0x4d0] sm:$0xf]
  %v1833 = vld [vmem:[%s3 + $0x4d4] sm:$0xf]
  %v1834 = vld [vmem:[%s3 + $0x4d8] sm:$0xf]
  %v1835 = vld [vmem:[%s3 + $0x4dc] sm:$0xf]
  %v1836 = vld [vmem:[%s3 + $0x4e0] sm:$0xf]
  %v1837 = vld [vmem:[%s3 + $0x4e4] sm:$0xf]
  %v1838 = vld [vmem:[%s3 + $0x4e8] sm:$0xf]
  %v1839 = vld [vmem:[%s3 + $0x4ec] sm:$0xf]
  %v1840 = vld [vmem:[%s3 + $0x4f0] sm:$0xf]
  %v1841 = vld [vmem:[%s3 + $0x4f4] sm:$0xf]
  %v1842 = vld [vmem:[%s3 + $0x4f8] sm:$0xf]
  %v1843 = vld [vmem:[%s3 + $0x4fc] sm:$0xf]
  %v1844 = vld [vmem:[%s3 + $0x500] sm:$0xf]
  %v1845 = vld [vmem:[%s3 + $0x504] sm:$0xf]
  %v1846 = vld [vmem:[%s3 + $0x508] sm:$0xf]
  %v1847 = vld [vmem:[%s3 + $0x50c] sm:$0xf]
  %v1848 = vld [vmem:[%s3 + $0x510] sm:$0xf]
  %v1849 = vld [vmem:[%s3 + $0x514] sm:$0xf]
  %v1850 = vld [vmem:[%s3 + $0x518] sm:$0xf]
  %v1851 = vld [vmem:[%s3 + $0x51c] sm:$0xf]
  %v1852 = vld [vmem:[%s3 + $0x520] sm:$0xf]
  %v1853 = vld [vmem:[%s3 + $0x524] sm:$0xf]
  %v1854 = vld [vmem:[%s3 + $0x528] sm:$0xf]
  %v1855 = vld [vmem:[%s3 + $0x52c] sm:$0xf]
  %v1856 = vld [vmem:[%s3 + $0x530] sm:$0xf]
  %v1857 = vld [vmem:[%s3 + $0x534] sm:$0xf]
  %v1858 = vld [vmem:[%s3 + $0x538] sm:$0xf]
  %v1859 = vld [vmem:[%s3 + $0x53c] sm:$0xf]
  %v1860 = vld [vmem:[%s3 + $0x540] sm:$0xf]
  %v1861 = vld [vmem:[%s3 + $0x544] sm:$0xf]
  %v1862 = vld [vmem:[%s3 + $0x548] sm:$0xf]
  %v1863 = vld [vmem:[%s3 + $0x54c] sm:$0xf]
  %v1864 = vld [vmem:[%s3 + $0x550] sm:$0xf]
  %v1865 = vld [vmem:[%s3 + $0x554] sm:$0xf]
  %v1866 = vld [vmem:[%s3 + $0x558] sm:$0xf]
  %v1867 = vld [vmem:[%s3 + $0x55c] sm:$0xf]
  %v1868 = vld [vmem:[%s3 + $0x560] sm:$0xf]
  %v1869 = vld [vmem:[%s3 + $0x564] sm:$0xf]
  %v1870 = vld [vmem:[%s3 + $0x568] sm:$0xf]
  %v1871 = vld [vmem:[%s3 + $0x56c] sm:$0xf]
  %v1872 = vld [vmem:[%s3 + $0x570] sm:$0xf]
  %v1873 = vld [vmem:[%s3 + $0x574] sm:$0xf]
  %v1874 = vld [vmem:[%s3 + $0x578] sm:$0xf]
  %v1875 = vld [vmem:[%s3 + $0x57c] sm:$0xf]
  %v1876 = vld [vmem:[%s3 + $0x580] sm:$0xf]
  %v1877 = vld [vmem:[%s3 + $0x584] sm:$0xf]
  %v1878 = vld [vmem:[%s3 + $0x588] sm:$0xf]
  %v1879 = vld [vmem:[%s3 + $0x58c] sm:$0xf]
  %v1880 = vld [vmem:[%s3 + $0x590] sm:$0xf]
  %v1881 = vld [vmem:[%s3 + $0x594] sm:$0xf]
  %v1882 = vld [vmem:[%s3 + $0x598] sm:$0xf]
  %v1883 = vld [vmem:[%s3 + $0x59c] sm:$0xf]
  %v1884 = vld [vmem:[%s3 + $0x5a0] sm:$0xf]
  %v1885 = vld [vmem:[%s3 + $0x5a4] sm:$0xf]
  %v1886 = vld [vmem:[%s3 + $0x5a8] sm:$0xf]
  %v1887 = vld [vmem:[%s3 + $0x5ac] sm:$0xf]
  %v1888 = vld [vmem:[%s3 + $0x5b0] sm:$0xf]
  %v1889 = vld [vmem:[%s3 + $0x5b4] sm:$0xf]
  %v1890 = vld [vmem:[%s3 + $0x5b8] sm:$0xf]
  %v1891 = vld [vmem:[%s3 + $0x5bc] sm:$0xf]
  %v1892 = vld [vmem:[%s3 + $0x5c0] sm:$0xf]
  %v1893 = vld [vmem:[%s3 + $0x5c4] sm:$0xf]
  %v1894 = vld [vmem:[%s3 + $0x5c8] sm:$0xf]
  %v1895 = vld [vmem:[%s3 + $0x5cc] sm:$0xf]
  %v1896 = vld [vmem:[%s3 + $0x5d0] sm:$0xf]
  %v1897 = vld [vmem:[%s3 + $0x5d4] sm:$0xf]
  %v1898 = vld [vmem:[%s3 + $0x5d8] sm:$0xf]
  %v1899 = vld [vmem:[%s3 + $0x5dc] sm:$0xf]
  %v1900 = vld [vmem:[%s3 + $0x5e0] sm:$0xf]
  %v1901 = vld [vmem:[%s3 + $0x5e4] sm:$0xf]
  %v1902 = vld [vmem:[%s3 + $0x5e8] sm:$0xf]
  %v1903 = vld [vmem:[%s3 + $0x5ec] sm:$0xf]
  %v1904 = vld [vmem:[%s3 + $0x5f0] sm:$0xf]
  %v1905 = vld [vmem:[%s3 + $0x5f4] sm:$0xf]
  %v1906 = vld [vmem:[%s3 + $0x5f8] sm:$0xf]
  %v1907 = vld [vmem:[%s3 + $0x5fc] sm:$0xf]
  %v1908 = vld [vmem:[%s3 + $0x600] sm:$0xf]
  %v1909 = vld [vmem:[%s3 + $0x604] sm:$0xf]
  %v1910 = vld [vmem:[%s3 + $0x608] sm:$0xf]
  %v1911 = vld [vmem:[%s3 + $0x60c] sm:$0xf]
  %v1912 = vld [vmem:[%s3 + $0x610] sm:$0xf]
  %v1913 = vld [vmem:[%s3 + $0x614] sm:$0xf]
  %v1914 = vld [vmem:[%s3 + $0x618] sm:$0xf]
  %v1915 = vld [vmem:[%s3 + $0x61c] sm:$0xf]
  %v1916 = vld [vmem:[%s3 + $0x620] sm:$0xf]
  %v1917 = vld [vmem:[%s3 + $0x624] sm:$0xf]
  %v1918 = vld [vmem:[%s3 + $0x628] sm:$0xf]
  %v1919 = vld [vmem:[%s3 + $0x62c] sm:$0xf]
  %v1920 = vld [vmem:[%s3 + $0x630] sm:$0xf]
  %v1921 = vld [vmem:[%s3 + $0x634] sm:$0xf]
  %v1922 = vld [vmem:[%s3 + $0x638] sm:$0xf]
  %v1923 = vld [vmem:[%s3 + $0x63c] sm:$0xf]
  %v1924 = vld [vmem:[%s4] sm:$0x1]
  %v1926 = vperm.slane %v1924, 0
  %v1941 = vunpack.c.l.b16 %v1511
  %v1942 = vunpack.c.h.b16 %v1511
  %v1943 = vunpack.c.l.b16 %v1512
  %v1944 = vunpack.c.h.b16 %v1512
  %v1945 = vunpack.c.l.b16 %v1513
  %v1946 = vunpack.c.h.b16 %v1513
  %v1947 = vunpack.c.l.b16 %v1514
  %v1948 = vunpack.c.h.b16 %v1514
  %v1949 = vunpack.c.l.b16 %v1515
  %v1950 = vunpack.c.h.b16 %v1515
  %v1951 = vunpack.c.l.b16 %v1516
  %v1952 = vunpack.c.h.b16 %v1516
  %v1953 = vunpack.c.l.b16 %v1517
  %v1954 = vunpack.c.h.b16 %v1517
  %v1955 = vunpack.c.l.b16 %v1518
  %v1956 = vunpack.c.h.b16 %v1518
  %v1957 = vunpack.c.l.b16 %v1519
  %v1958 = vunpack.c.h.b16 %v1519
  %v1959 = vunpack.c.l.b16 %v1520
  %v1960 = vunpack.c.h.b16 %v1520
  %v1961 = vunpack.c.l.b16 %v1521
  %v1962 = vunpack.c.h.b16 %v1521
  %v1963 = vunpack.c.l.b16 %v1522
  %v1964 = vunpack.c.h.b16 %v1522
  %v1965 = vunpack.c.l.b16 %v1523
  %v1966 = vpack.c.b16 %v1941, %v1941
  %v1967 = vpack.c.b16 %v1942, %v1942
  %v1968 = vpack.c.b16 %v1943, %v1943
  %v1969 = vpack.c.b16 %v1944, %v1944
  %v1970 = vpack.c.b16 %v1945, %v1945
  %v1971 = vpack.c.b16 %v1946, %v1946
  %v1972 = vpack.c.b16 %v1947, %v1947
  %v1973 = vpack.c.b16 %v1948, %v1948
  %v1974 = vpack.c.b16 %v1949, %v1949
  %v1975 = vpack.c.b16 %v1950, %v1950
  %v1976 = vpack.c.b16 %v1951, %v1951
  %v1977 = vpack.c.b16 %v1952, %v1952
  %v1978 = vpack.c.b16 %v1953, %v1953
  %v1979 = vpack.c.b16 %v1954, %v1954
  %v1980 = vpack.c.b16 %v1955, %v1955
  %v1981 = vpack.c.b16 %v1956, %v1956
  %v1982 = vpack.c.b16 %v1957, %v1957
  %v1983 = vpack.c.b16 %v1958, %v1958
  %v1984 = vpack.c.b16 %v1959, %v1959
  %v1985 = vpack.c.b16 %v1960, %v1960
  %v1986 = vpack.c.b16 %v1961, %v1961
  %v1987 = vpack.c.b16 %v1962, %v1962
  %v1988 = vpack.c.b16 %v1963, %v1963
  %v1989 = vpack.c.b16 %v1964, %v1964
  %v1990 = vpack.c.b16 %v1965, %v1965
  %v2416 = vunpack.c.l.b16 %v1524
  %v2417 = vunpack.c.l.b16 %v1525
  %v2418 = vunpack.c.l.b16 %v1526
  %v2419 = vunpack.c.l.b16 %v1527
  %v2420 = vunpack.c.l.b16 %v1528
  %v2421 = vunpack.c.l.b16 %v1529
  %v2422 = vunpack.c.l.b16 %v1530
  %v2423 = vunpack.c.l.b16 %v1531
  %v2424 = vunpack.c.l.b16 %v1532
  %v2425 = vunpack.c.l.b16 %v1533
  %v2426 = vunpack.c.l.b16 %v1534
  %v2427 = vunpack.c.l.b16 %v1535
  %v2428 = vunpack.c.l.b16 %v1536
  %v2429 = vunpack.c.l.b16 %v1537
  %v2430 = vunpack.c.l.b16 %v1538
  %v2431 = vunpack.c.l.b16 %v1539
  %v2432 = vunpack.c.l.b16 %v1540
  %v2433 = vunpack.c.l.b16 %v1541
  %v2434 = vunpack.c.l.b16 %v1542
  %v2435 = vunpack.c.l.b16 %v1543
  %v2436 = vunpack.c.l.b16 %v1544
  %v2437 = vunpack.c.l.b16 %v1545
  %v2438 = vunpack.c.l.b16 %v1546
  %v2439 = vunpack.c.l.b16 %v1547
  %v2440 = vunpack.c.l.b16 %v1548
  %v2441 = vunpack.c.l.b16 %v1549
  %v2442 = vunpack.c.l.b16 %v1550
  %v2443 = vunpack.c.l.b16 %v1551
  %v2444 = vunpack.c.l.b16 %v1552
  %v2445 = vunpack.c.l.b16 %v1553
  %v2446 = vunpack.c.l.b16 %v1554
  %v2447 = vunpack.c.l.b16 %v1555
  %v2448 = vunpack.c.l.b16 %v1556
  %v2449 = vunpack.c.l.b16 %v1557
  %v2450 = vunpack.c.l.b16 %v1558
  %v2451 = vunpack.c.l.b16 %v1559
  %v2452 = vunpack.c.l.b16 %v1560
  %v2453 = vunpack.c.l.b16 %v1561
  %v2454 = vunpack.c.l.b16 %v1562
  %v2455 = vunpack.c.l.b16 %v1563
  %v2456 = vunpack.c.l.b16 %v1564
  %v2457 = vunpack.c.l.b16 %v1565
  %v2458 = vunpack.c.l.b16 %v1566
  %v2459 = vunpack.c.l.b16 %v1567
  %v2460 = vunpack.c.l.b16 %v1568
  %v2461 = vunpack.c.l.b16 %v1569
  %v2462 = vunpack.c.l.b16 %v1570
  %v2463 = vunpack.c.l.b16 %v1571
  %v2464 = vunpack.c.l.b16 %v1572
  %v2465 = vunpack.c.l.b16 %v1573
  %v2466 = vunpack.c.l.b16 %v1574
  %v2467 = vunpack.c.l.b16 %v1575
  %v2468 = vunpack.c.l.b16 %v1576
  %v2469 = vunpack.c.l.b16 %v1577
  %v2470 = vunpack.c.l.b16 %v1578
  %v2471 = vunpack.c.l.b16 %v1579
  %v2472 = vunpack.c.l.b16 %v1580
  %v2473 = vunpack.c.l.b16 %v1581
  %v2474 = vunpack.c.l.b16 %v1582
  %v2475 = vunpack.c.l.b16 %v1583
  %v2476 = vunpack.c.l.b16 %v1584
  %v2477 = vunpack.c.l.b16 %v1585
  %v2478 = vunpack.c.l.b16 %v1586
  %v2479 = vunpack.c.l.b16 %v1587
  %v2480 = vunpack.c.l.b16 %v1588
  %v2481 = vunpack.c.l.b16 %v1589
  %v2482 = vunpack.c.l.b16 %v1590
  %v2483 = vunpack.c.l.b16 %v1591
  %v2484 = vunpack.c.l.b16 %v1592
  %v2485 = vunpack.c.l.b16 %v1593
  %v2486 = vunpack.c.l.b16 %v1594
  %v2487 = vunpack.c.l.b16 %v1595
  %v2488 = vunpack.c.l.b16 %v1596
  %v2489 = vunpack.c.l.b16 %v1597
  %v2490 = vunpack.c.l.b16 %v1598
  %v2491 = vunpack.c.l.b16 %v1599
  %v2492 = vunpack.c.l.b16 %v1600
  %v2493 = vunpack.c.l.b16 %v1601
  %v2494 = vunpack.c.l.b16 %v1602
  %v2495 = vunpack.c.l.b16 %v1603
  %v2496 = vunpack.c.l.b16 %v1604
  %v2497 = vunpack.c.l.b16 %v1605
  %v2498 = vunpack.c.l.b16 %v1606
  %v2499 = vunpack.c.l.b16 %v1607
  %v2500 = vunpack.c.l.b16 %v1608
  %v2501 = vunpack.c.l.b16 %v1609
  %v2502 = vunpack.c.l.b16 %v1610
  %v2503 = vunpack.c.l.b16 %v1611
  %v2504 = vunpack.c.l.b16 %v1612
  %v2505 = vunpack.c.l.b16 %v1613
  %v2506 = vunpack.c.l.b16 %v1614
  %v2507 = vunpack.c.l.b16 %v1615
  %v2508 = vunpack.c.l.b16 %v1616
  %v2509 = vunpack.c.l.b16 %v1617
  %v2510 = vunpack.c.l.b16 %v1618
  %v2511 = vunpack.c.l.b16 %v1619
  %v2512 = vunpack.c.l.b16 %v1620
  %v2513 = vunpack.c.l.b16 %v1621
  %v2514 = vunpack.c.l.b16 %v1622
  %v2515 = vunpack.c.l.b16 %v1623
  %v2516 = vunpack.c.l.b16 %v1624
  %v2517 = vunpack.c.l.b16 %v1625
  %v2518 = vunpack.c.l.b16 %v1626
  %v2519 = vunpack.c.l.b16 %v1627
  %v2520 = vunpack.c.l.b16 %v1628
  %v2521 = vunpack.c.l.b16 %v1629
  %v2522 = vunpack.c.l.b16 %v1630
  %v2523 = vunpack.c.l.b16 %v1631
  %v2524 = vunpack.c.l.b16 %v1632
  %v2525 = vunpack.c.l.b16 %v1633
  %v2526 = vunpack.c.l.b16 %v1634
  %v2527 = vunpack.c.l.b16 %v1635
  %v2528 = vunpack.c.l.b16 %v1636
  %v2529 = vunpack.c.l.b16 %v1637
  %v2530 = vunpack.c.l.b16 %v1638
  %v2531 = vunpack.c.l.b16 %v1639
  %v2532 = vunpack.c.l.b16 %v1640
  %v2533 = vunpack.c.l.b16 %v1641
  %v2534 = vunpack.c.l.b16 %v1642
  %v2535 = vunpack.c.l.b16 %v1643
  %v2536 = vunpack.c.l.b16 %v1644
  %v2537 = vunpack.c.l.b16 %v1645
  %v2538 = vunpack.c.l.b16 %v1646
  %v2539 = vunpack.c.l.b16 %v1647
  %v2540 = vunpack.c.l.b16 %v1648
  %v2541 = vunpack.c.l.b16 %v1649
  %v2542 = vunpack.c.l.b16 %v1650
  %v2543 = vunpack.c.l.b16 %v1651
  %v2544 = vunpack.c.l.b16 %v1652
  %v2545 = vunpack.c.l.b16 %v1653
  %v2546 = vunpack.c.l.b16 %v1654
  %v2547 = vunpack.c.l.b16 %v1655
  %v2548 = vunpack.c.l.b16 %v1656
  %v2549 = vunpack.c.l.b16 %v1657
  %v2550 = vunpack.c.l.b16 %v1658
  %v2551 = vunpack.c.l.b16 %v1659
  %v2552 = vunpack.c.l.b16 %v1660
  %v2553 = vunpack.c.l.b16 %v1661
  %v2554 = vunpack.c.l.b16 %v1662
  %v2555 = vunpack.c.l.b16 %v1663
  %v2556 = vunpack.c.l.b16 %v1664
  %v2557 = vunpack.c.l.b16 %v1665
  %v2558 = vunpack.c.l.b16 %v1666
  %v2559 = vunpack.c.l.b16 %v1667
  %v2560 = vunpack.c.l.b16 %v1668
  %v2561 = vunpack.c.l.b16 %v1669
  %v2562 = vunpack.c.l.b16 %v1670
  %v2563 = vunpack.c.l.b16 %v1671
  %v2564 = vunpack.c.l.b16 %v1672
  %v2565 = vunpack.c.l.b16 %v1673
  %v2566 = vunpack.c.l.b16 %v1674
  %v2567 = vunpack.c.l.b16 %v1675
  %v2568 = vunpack.c.l.b16 %v1676
  %v2569 = vunpack.c.l.b16 %v1677
  %v2570 = vunpack.c.l.b16 %v1678
  %v2571 = vunpack.c.l.b16 %v1679
  %v2572 = vunpack.c.l.b16 %v1680
  %v2573 = vunpack.c.l.b16 %v1681
  %v2574 = vunpack.c.l.b16 %v1682
  %v2575 = vunpack.c.l.b16 %v1683
  %v2576 = vunpack.c.l.b16 %v1684
  %v2577 = vunpack.c.l.b16 %v1685
  %v2578 = vunpack.c.l.b16 %v1686
  %v2579 = vunpack.c.l.b16 %v1687
  %v2580 = vunpack.c.l.b16 %v1688
  %v2581 = vunpack.c.l.b16 %v1689
  %v2582 = vunpack.c.l.b16 %v1690
  %v2583 = vunpack.c.l.b16 %v1691
  %v2584 = vunpack.c.l.b16 %v1692
  %v2585 = vunpack.c.l.b16 %v1693
  %v2586 = vunpack.c.l.b16 %v1694
  %v2587 = vunpack.c.l.b16 %v1695
  %v2588 = vunpack.c.l.b16 %v1696
  %v2589 = vunpack.c.l.b16 %v1697
  %v2590 = vunpack.c.l.b16 %v1698
  %v2591 = vunpack.c.l.b16 %v1699
  %v2592 = vunpack.c.l.b16 %v1700
  %v2593 = vunpack.c.l.b16 %v1701
  %v2594 = vunpack.c.l.b16 %v1702
  %v2595 = vunpack.c.l.b16 %v1703
  %v2596 = vunpack.c.l.b16 %v1704
  %v2597 = vunpack.c.l.b16 %v1705
  %v2598 = vunpack.c.l.b16 %v1706
  %v2599 = vunpack.c.l.b16 %v1707
  %v2600 = vunpack.c.l.b16 %v1708
  %v2601 = vunpack.c.l.b16 %v1709
  %v2602 = vunpack.c.l.b16 %v1710
  %v2603 = vunpack.c.l.b16 %v1711
  %v2604 = vunpack.c.l.b16 %v1712
  %v2605 = vunpack.c.l.b16 %v1713
  %v2606 = vunpack.c.l.b16 %v1714
  %v2607 = vunpack.c.l.b16 %v1715
  %v2608 = vunpack.c.l.b16 %v1716
  %v2609 = vunpack.c.l.b16 %v1717
  %v2610 = vunpack.c.l.b16 %v1718
  %v2611 = vunpack.c.l.b16 %v1719
  %v2612 = vunpack.c.l.b16 %v1720
  %v2613 = vunpack.c.l.b16 %v1721
  %v2614 = vunpack.c.l.b16 %v1722
  %v2615 = vunpack.c.l.b16 %v1723
  %v2616 = vunpack.c.l.b16 %v1724
  %v2617 = vunpack.c.l.b16 %v1725
  %v2618 = vunpack.c.l.b16 %v1726
  %v2619 = vunpack.c.l.b16 %v1727
  %v2620 = vunpack.c.l.b16 %v1728
  %v2621 = vunpack.c.l.b16 %v1729
  %v2622 = vunpack.c.l.b16 %v1730
  %v2623 = vunpack.c.l.b16 %v1731
  %v2624 = vunpack.c.l.b16 %v1732
  %v2625 = vunpack.c.l.b16 %v1733
  %v2626 = vunpack.c.l.b16 %v1734
  %v2627 = vunpack.c.l.b16 %v1735
  %v2628 = vunpack.c.l.b16 %v1736
  %v2629 = vunpack.c.l.b16 %v1737
  %v2630 = vunpack.c.l.b16 %v1738
  %v2631 = vunpack.c.l.b16 %v1739
  %v2632 = vunpack.c.l.b16 %v1740
  %v2633 = vunpack.c.l.b16 %v1741
  %v2634 = vunpack.c.l.b16 %v1742
  %v2635 = vunpack.c.l.b16 %v1743
  %v2636 = vunpack.c.l.b16 %v1744
  %v2637 = vunpack.c.l.b16 %v1745
  %v2638 = vunpack.c.l.b16 %v1746
  %v2639 = vunpack.c.l.b16 %v1747
  %v2640 = vunpack.c.l.b16 %v1748
  %v2641 = vunpack.c.l.b16 %v1749
  %v2642 = vunpack.c.l.b16 %v1750
  %v2643 = vunpack.c.l.b16 %v1751
  %v2644 = vunpack.c.l.b16 %v1752
  %v2645 = vunpack.c.l.b16 %v1753
  %v2646 = vunpack.c.l.b16 %v1754
  %v2647 = vunpack.c.l.b16 %v1755
  %v2648 = vunpack.c.l.b16 %v1756
  %v2649 = vunpack.c.l.b16 %v1757
  %v2650 = vunpack.c.l.b16 %v1758
  %v2651 = vunpack.c.l.b16 %v1759
  %v2652 = vunpack.c.l.b16 %v1760
  %v2653 = vunpack.c.l.b16 %v1761
  %v2654 = vunpack.c.l.b16 %v1762
  %v2655 = vunpack.c.l.b16 %v1763
  %v2656 = vunpack.c.l.b16 %v1764
  %v2657 = vunpack.c.l.b16 %v1765
  %v2658 = vunpack.c.l.b16 %v1766
  %v2659 = vunpack.c.l.b16 %v1767
  %v2660 = vunpack.c.l.b16 %v1768
  %v2661 = vunpack.c.l.b16 %v1769
  %v2662 = vunpack.c.l.b16 %v1770
  %v2663 = vunpack.c.l.b16 %v1771
  %v2664 = vunpack.c.l.b16 %v1772
  %v2665 = vunpack.c.l.b16 %v1773
  %v2666 = vunpack.c.l.b16 %v1774
  %v2667 = vunpack.c.l.b16 %v1775
  %v2668 = vunpack.c.l.b16 %v1776
  %v2669 = vunpack.c.l.b16 %v1777
  %v2670 = vunpack.c.l.b16 %v1778
  %v2671 = vunpack.c.l.b16 %v1779
  %v2672 = vunpack.c.l.b16 %v1780
  %v2673 = vunpack.c.l.b16 %v1781
  %v2674 = vunpack.c.l.b16 %v1782
  %v2675 = vunpack.c.l.b16 %v1783
  %v2676 = vunpack.c.l.b16 %v1784
  %v2677 = vunpack.c.l.b16 %v1785
  %v2678 = vunpack.c.l.b16 %v1786
  %v2679 = vunpack.c.l.b16 %v1787
  %v2680 = vunpack.c.l.b16 %v1788
  %v2681 = vunpack.c.l.b16 %v1789
  %v2682 = vunpack.c.l.b16 %v1790
  %v2683 = vunpack.c.l.b16 %v1791
  %v2684 = vunpack.c.l.b16 %v1792
  %v2685 = vunpack.c.l.b16 %v1793
  %v2686 = vunpack.c.l.b16 %v1794
  %v2687 = vunpack.c.l.b16 %v1795
  %v2688 = vunpack.c.l.b16 %v1796
  %v2689 = vunpack.c.l.b16 %v1797
  %v2690 = vunpack.c.l.b16 %v1798
  %v2691 = vunpack.c.l.b16 %v1799
  %v2692 = vunpack.c.l.b16 %v1800
  %v2693 = vunpack.c.l.b16 %v1801
  %v2694 = vunpack.c.l.b16 %v1802
  %v2695 = vunpack.c.l.b16 %v1803
  %v2696 = vunpack.c.l.b16 %v1804
  %v2697 = vunpack.c.l.b16 %v1805
  %v2698 = vunpack.c.l.b16 %v1806
  %v2699 = vunpack.c.l.b16 %v1807
  %v2700 = vunpack.c.l.b16 %v1808
  %v2701 = vunpack.c.l.b16 %v1809
  %v2702 = vunpack.c.l.b16 %v1810
  %v2703 = vunpack.c.l.b16 %v1811
  %v2704 = vunpack.c.l.b16 %v1812
  %v2705 = vunpack.c.l.b16 %v1813
  %v2706 = vunpack.c.l.b16 %v1814
  %v2707 = vunpack.c.l.b16 %v1815
  %v2708 = vunpack.c.l.b16 %v1816
  %v2709 = vunpack.c.l.b16 %v1817
  %v2710 = vunpack.c.l.b16 %v1818
  %v2711 = vunpack.c.l.b16 %v1819
  %v2712 = vunpack.c.l.b16 %v1820
  %v2713 = vunpack.c.l.b16 %v1821
  %v2714 = vunpack.c.l.b16 %v1822
  %v2715 = vunpack.c.l.b16 %v1823
  %v2716 = vunpack.c.l.b16 %v1824
  %v2717 = vunpack.c.l.b16 %v1825
  %v2718 = vunpack.c.l.b16 %v1826
  %v2719 = vunpack.c.l.b16 %v1827
  %v2720 = vunpack.c.l.b16 %v1828
  %v2721 = vunpack.c.l.b16 %v1829
  %v2722 = vunpack.c.l.b16 %v1830
  %v2723 = vunpack.c.l.b16 %v1831
  %v2724 = vunpack.c.l.b16 %v1832
  %v2725 = vunpack.c.l.b16 %v1833
  %v2726 = vunpack.c.l.b16 %v1834
  %v2727 = vunpack.c.l.b16 %v1835
  %v2728 = vunpack.c.l.b16 %v1836
  %v2729 = vunpack.c.l.b16 %v1837
  %v2730 = vunpack.c.l.b16 %v1838
  %v2731 = vunpack.c.l.b16 %v1839
  %v2732 = vunpack.c.l.b16 %v1840
  %v2733 = vunpack.c.l.b16 %v1841
  %v2734 = vunpack.c.l.b16 %v1842
  %v2735 = vunpack.c.l.b16 %v1843
  %v2736 = vunpack.c.l.b16 %v1844
  %v2737 = vunpack.c.l.b16 %v1845
  %v2738 = vunpack.c.l.b16 %v1846
  %v2739 = vunpack.c.l.b16 %v1847
  %v2740 = vunpack.c.l.b16 %v1848
  %v2741 = vunpack.c.l.b16 %v1849
  %v2742 = vunpack.c.l.b16 %v1850
  %v2743 = vunpack.c.l.b16 %v1851
  %v2744 = vunpack.c.l.b16 %v1852
  %v2745 = vunpack.c.l.b16 %v1853
  %v2746 = vunpack.c.l.b16 %v1854
  %v2747 = vunpack.c.l.b16 %v1855
  %v2748 = vunpack.c.l.b16 %v1856
  %v2749 = vunpack.c.l.b16 %v1857
  %v2750 = vunpack.c.l.b16 %v1858
  %v2751 = vunpack.c.l.b16 %v1859
  %v2752 = vunpack.c.l.b16 %v1860
  %v2753 = vunpack.c.l.b16 %v1861
  %v2754 = vunpack.c.l.b16 %v1862
  %v2755 = vunpack.c.l.b16 %v1863
  %v2756 = vunpack.c.l.b16 %v1864
  %v2757 = vunpack.c.l.b16 %v1865
  %v2758 = vunpack.c.l.b16 %v1866
  %v2759 = vunpack.c.l.b16 %v1867
  %v2760 = vunpack.c.l.b16 %v1868
  %v2761 = vunpack.c.l.b16 %v1869
  %v2762 = vunpack.c.l.b16 %v1870
  %v2763 = vunpack.c.l.b16 %v1871
  %v2764 = vunpack.c.l.b16 %v1872
  %v2765 = vunpack.c.l.b16 %v1873
  %v2766 = vunpack.c.l.b16 %v1874
  %v2767 = vunpack.c.l.b16 %v1875
  %v2768 = vunpack.c.l.b16 %v1876
  %v2769 = vunpack.c.l.b16 %v1877
  %v2770 = vunpack.c.l.b16 %v1878
  %v2771 = vunpack.c.l.b16 %v1879
  %v2772 = vunpack.c.l.b16 %v1880
  %v2773 = vunpack.c.l.b16 %v1881
  %v2774 = vunpack.c.l.b16 %v1882
  %v2775 = vunpack.c.l.b16 %v1883
  %v2776 = vunpack.c.l.b16 %v1884
  %v2777 = vunpack.c.l.b16 %v1885
  %v2778 = vunpack.c.l.b16 %v1886
  %v2779 = vunpack.c.l.b16 %v1887
  %v2780 = vunpack.c.l.b16 %v1888
  %v2781 = vunpack.c.l.b16 %v1889
  %v2782 = vunpack.c.l.b16 %v1890
  %v2783 = vunpack.c.l.b16 %v1891
  %v2784 = vunpack.c.l.b16 %v1892
  %v2785 = vunpack.c.l.b16 %v1893
  %v2786 = vunpack.c.l.b16 %v1894
  %v2787 = vunpack.c.l.b16 %v1895
  %v2788 = vunpack.c.l.b16 %v1896
  %v2789 = vunpack.c.l.b16 %v1897
  %v2790 = vunpack.c.l.b16 %v1898
  %v2791 = vunpack.c.l.b16 %v1899
  %v2792 = vunpack.c.l.b16 %v1900
  %v2793 = vunpack.c.l.b16 %v1901
  %v2794 = vunpack.c.l.b16 %v1902
  %v2795 = vunpack.c.l.b16 %v1903
  %v2796 = vunpack.c.l.b16 %v1904
  %v2797 = vunpack.c.l.b16 %v1905
  %v2798 = vunpack.c.l.b16 %v1906
  %v2799 = vunpack.c.l.b16 %v1907
  %v2800 = vunpack.c.l.b16 %v1908
  %v2801 = vunpack.c.l.b16 %v1909
  %v2802 = vunpack.c.l.b16 %v1910
  %v2803 = vunpack.c.l.b16 %v1911
  %v2804 = vunpack.c.l.b16 %v1912
  %v2805 = vunpack.c.l.b16 %v1913
  %v2806 = vunpack.c.l.b16 %v1914
  %v2807 = vunpack.c.l.b16 %v1915
  %v2808 = vunpack.c.l.b16 %v1916
  %v2809 = vunpack.c.l.b16 %v1917
  %v2810 = vunpack.c.l.b16 %v1918
  %v2811 = vunpack.c.l.b16 %v1919
  %v2812 = vunpack.c.l.b16 %v1920
  %v2813 = vunpack.c.l.b16 %v1921
  %v2814 = vunpack.c.l.b16 %v1922
  %v2815 = vunpack.c.l.b16 %v1923
  %v2816 = vpack.c.b16 %v2417, %v2416
  %v2817 = vpack.c.b16 %v2419, %v2418
  %v2818 = vpack.c.b16 %v2421, %v2420
  %v2819 = vpack.c.b16 %v2423, %v2422
  %v2820 = vpack.c.b16 %v2425, %v2424
  %v2821 = vpack.c.b16 %v2427, %v2426
  %v2822 = vpack.c.b16 %v2429, %v2428
  %v2823 = vpack.c.b16 %v2431, %v2430
  %v2824 = vpack.c.b16 %v2433, %v2432
  %v2825 = vpack.c.b16 %v2435, %v2434
  %v2826 = vpack.c.b16 %v2437, %v2436
  %v2827 = vpack.c.b16 %v2439, %v2438
  %v2828 = vpack.c.b16 %v2441, %v2440
  %v2829 = vpack.c.b16 %v2443, %v2442
  %v2830 = vpack.c.b16 %v2445, %v2444
  %v2831 = vpack.c.b16 %v2447, %v2446
  %v2832 = vpack.c.b16 %v2449, %v2448
  %v2833 = vpack.c.b16 %v2451, %v2450
  %v2834 = vpack.c.b16 %v2453, %v2452
  %v2835 = vpack.c.b16 %v2455, %v2454
  %v2836 = vpack.c.b16 %v2457, %v2456
  %v2837 = vpack.c.b16 %v2459, %v2458
  %v2838 = vpack.c.b16 %v2461, %v2460
  %v2839 = vpack.c.b16 %v2463, %v2462
  %v2840 = vpack.c.b16 %v2465, %v2464
  %v2841 = vpack.c.b16 %v2467, %v2466
  %v2842 = vpack.c.b16 %v2469, %v2468
  %v2843 = vpack.c.b16 %v2471, %v2470
  %v2844 = vpack.c.b16 %v2473, %v2472
  %v2845 = vpack.c.b16 %v2475, %v2474
  %v2846 = vpack.c.b16 %v2477, %v2476
  %v2847 = vpack.c.b16 %v2479, %v2478
  %v2848 = vpack.c.b16 %v2481, %v2480
  %v2849 = vpack.c.b16 %v2483, %v2482
  %v2850 = vpack.c.b16 %v2485, %v2484
  %v2851 = vpack.c.b16 %v2487, %v2486
  %v2852 = vpack.c.b16 %v2489, %v2488
  %v2853 = vpack.c.b16 %v2491, %v2490
  %v2854 = vpack.c.b16 %v2493, %v2492
  %v2855 = vpack.c.b16 %v2495, %v2494
  %v2856 = vpack.c.b16 %v2497, %v2496
  %v2857 = vpack.c.b16 %v2499, %v2498
  %v2858 = vpack.c.b16 %v2501, %v2500
  %v2859 = vpack.c.b16 %v2503, %v2502
  %v2860 = vpack.c.b16 %v2505, %v2504
  %v2861 = vpack.c.b16 %v2507, %v2506
  %v2862 = vpack.c.b16 %v2509, %v2508
  %v2863 = vpack.c.b16 %v2511, %v2510
  %v2864 = vpack.c.b16 %v2513, %v2512
  %v2865 = vpack.c.b16 %v2515, %v2514
  %v2866 = vpack.c.b16 %v2517, %v2516
  %v2867 = vpack.c.b16 %v2519, %v2518
  %v2868 = vpack.c.b16 %v2521, %v2520
  %v2869 = vpack.c.b16 %v2523, %v2522
  %v2870 = vpack.c.b16 %v2525, %v2524
  %v2871 = vpack.c.b16 %v2527, %v2526
  %v2872 = vpack.c.b16 %v2529, %v2528
  %v2873 = vpack.c.b16 %v2531, %v2530
  %v2874 = vpack.c.b16 %v2533, %v2532
  %v2875 = vpack.c.b16 %v2535, %v2534
  %v2876 = vpack.c.b16 %v2537, %v2536
  %v2877 = vpack.c.b16 %v2539, %v2538
  %v2878 = vpack.c.b16 %v2541, %v2540
  %v2879 = vpack.c.b16 %v2543, %v2542
  %v2880 = vpack.c.b16 %v2545, %v2544
  %v2881 = vpack.c.b16 %v2547, %v2546
  %v2882 = vpack.c.b16 %v2549, %v2548
  %v2883 = vpack.c.b16 %v2551, %v2550
  %v2884 = vpack.c.b16 %v2553, %v2552
  %v2885 = vpack.c.b16 %v2555, %v2554
  %v2886 = vpack.c.b16 %v2557, %v2556
  %v2887 = vpack.c.b16 %v2559, %v2558
  %v2888 = vpack.c.b16 %v2561, %v2560
  %v2889 = vpack.c.b16 %v2563, %v2562
  %v2890 = vpack.c.b16 %v2565, %v2564
  %v2891 = vpack.c.b16 %v2567, %v2566
  %v2892 = vpack.c.b16 %v2569, %v2568
  %v2893 = vpack.c.b16 %v2571, %v2570
  %v2894 = vpack.c.b16 %v2573, %v2572
  %v2895 = vpack.c.b16 %v2575, %v2574
  %v2896 = vpack.c.b16 %v2577, %v2576
  %v2897 = vpack.c.b16 %v2579, %v2578
  %v2898 = vpack.c.b16 %v2581, %v2580
  %v2899 = vpack.c.b16 %v2583, %v2582
  %v2900 = vpack.c.b16 %v2585, %v2584
  %v2901 = vpack.c.b16 %v2587, %v2586
  %v2902 = vpack.c.b16 %v2589, %v2588
  %v2903 = vpack.c.b16 %v2591, %v2590
  %v2904 = vpack.c.b16 %v2593, %v2592
  %v2905 = vpack.c.b16 %v2595, %v2594
  %v2906 = vpack.c.b16 %v2597, %v2596
  %v2907 = vpack.c.b16 %v2599, %v2598
  %v2908 = vpack.c.b16 %v2601, %v2600
  %v2909 = vpack.c.b16 %v2603, %v2602
  %v2910 = vpack.c.b16 %v2605, %v2604
  %v2911 = vpack.c.b16 %v2607, %v2606
  %v2912 = vpack.c.b16 %v2609, %v2608
  %v2913 = vpack.c.b16 %v2611, %v2610
  %v2914 = vpack.c.b16 %v2613, %v2612
  %v2915 = vpack.c.b16 %v2615, %v2614
  %v2916 = vpack.c.b16 %v2617, %v2616
  %v2917 = vpack.c.b16 %v2619, %v2618
  %v2918 = vpack.c.b16 %v2621, %v2620
  %v2919 = vpack.c.b16 %v2623, %v2622
  %v2920 = vpack.c.b16 %v2625, %v2624
  %v2921 = vpack.c.b16 %v2627, %v2626
  %v2922 = vpack.c.b16 %v2629, %v2628
  %v2923 = vpack.c.b16 %v2631, %v2630
  %v2924 = vpack.c.b16 %v2633, %v2632
  %v2925 = vpack.c.b16 %v2635, %v2634
  %v2926 = vpack.c.b16 %v2637, %v2636
  %v2927 = vpack.c.b16 %v2639, %v2638
  %v2928 = vpack.c.b16 %v2641, %v2640
  %v2929 = vpack.c.b16 %v2643, %v2642
  %v2930 = vpack.c.b16 %v2645, %v2644
  %v2931 = vpack.c.b16 %v2647, %v2646
  %v2932 = vpack.c.b16 %v2649, %v2648
  %v2933 = vpack.c.b16 %v2651, %v2650
  %v2934 = vpack.c.b16 %v2653, %v2652
  %v2935 = vpack.c.b16 %v2655, %v2654
  %v2936 = vpack.c.b16 %v2657, %v2656
  %v2937 = vpack.c.b16 %v2659, %v2658
  %v2938 = vpack.c.b16 %v2661, %v2660
  %v2939 = vpack.c.b16 %v2663, %v2662
  %v2940 = vpack.c.b16 %v2665, %v2664
  %v2941 = vpack.c.b16 %v2667, %v2666
  %v2942 = vpack.c.b16 %v2669, %v2668
  %v2943 = vpack.c.b16 %v2671, %v2670
  %v2944 = vpack.c.b16 %v2673, %v2672
  %v2945 = vpack.c.b16 %v2675, %v2674
  %v2946 = vpack.c.b16 %v2677, %v2676
  %v2947 = vpack.c.b16 %v2679, %v2678
  %v2948 = vpack.c.b16 %v2681, %v2680
  %v2949 = vpack.c.b16 %v2683, %v2682
  %v2950 = vpack.c.b16 %v2685, %v2684
  %v2951 = vpack.c.b16 %v2687, %v2686
  %v2952 = vpack.c.b16 %v2689, %v2688
  %v2953 = vpack.c.b16 %v2691, %v2690
  %v2954 = vpack.c.b16 %v2693, %v2692
  %v2955 = vpack.c.b16 %v2695, %v2694
  %v2956 = vpack.c.b16 %v2697, %v2696
  %v2957 = vpack.c.b16 %v2699, %v2698
  %v2958 = vpack.c.b16 %v2701, %v2700
  %v2959 = vpack.c.b16 %v2703, %v2702
  %v2960 = vpack.c.b16 %v2705, %v2704
  %v2961 = vpack.c.b16 %v2707, %v2706
  %v2962 = vpack.c.b16 %v2709, %v2708
  %v2963 = vpack.c.b16 %v2711, %v2710
  %v2964 = vpack.c.b16 %v2713, %v2712
  %v2965 = vpack.c.b16 %v2715, %v2714
  %v2966 = vpack.c.b16 %v2717, %v2716
  %v2967 = vpack.c.b16 %v2719, %v2718
  %v2968 = vpack.c.b16 %v2721, %v2720
  %v2969 = vpack.c.b16 %v2723, %v2722
  %v2970 = vpack.c.b16 %v2725, %v2724
  %v2971 = vpack.c.b16 %v2727, %v2726
  %v2972 = vpack.c.b16 %v2729, %v2728
  %v2973 = vpack.c.b16 %v2731, %v2730
  %v2974 = vpack.c.b16 %v2733, %v2732
  %v2975 = vpack.c.b16 %v2735, %v2734
  %v2976 = vpack.c.b16 %v2737, %v2736
  %v2977 = vpack.c.b16 %v2739, %v2738
  %v2978 = vpack.c.b16 %v2741, %v2740
  %v2979 = vpack.c.b16 %v2743, %v2742
  %v2980 = vpack.c.b16 %v2745, %v2744
  %v2981 = vpack.c.b16 %v2747, %v2746
  %v2982 = vpack.c.b16 %v2749, %v2748
  %v2983 = vpack.c.b16 %v2751, %v2750
  %v2984 = vpack.c.b16 %v2753, %v2752
  %v2985 = vpack.c.b16 %v2755, %v2754
  %v2986 = vpack.c.b16 %v2757, %v2756
  %v2987 = vpack.c.b16 %v2759, %v2758
  %v2988 = vpack.c.b16 %v2761, %v2760
  %v2989 = vpack.c.b16 %v2763, %v2762
  %v2990 = vpack.c.b16 %v2765, %v2764
  %v2991 = vpack.c.b16 %v2767, %v2766
  %v2992 = vpack.c.b16 %v2769, %v2768
  %v2993 = vpack.c.b16 %v2771, %v2770
  %v2994 = vpack.c.b16 %v2773, %v2772
  %v2995 = vpack.c.b16 %v2775, %v2774
  %v2996 = vpack.c.b16 %v2777, %v2776
  %v2997 = vpack.c.b16 %v2779, %v2778
  %v2998 = vpack.c.b16 %v2781, %v2780
  %v2999 = vpack.c.b16 %v2783, %v2782
  %v3000 = vpack.c.b16 %v2785, %v2784
  %v3001 = vpack.c.b16 %v2787, %v2786
  %v3002 = vpack.c.b16 %v2789, %v2788
  %v3003 = vpack.c.b16 %v2791, %v2790
  %v3004 = vpack.c.b16 %v2793, %v2792
  %v3005 = vpack.c.b16 %v2795, %v2794
  %v3006 = vpack.c.b16 %v2797, %v2796
  %v3007 = vpack.c.b16 %v2799, %v2798
  %v3008 = vpack.c.b16 %v2801, %v2800
  %v3009 = vpack.c.b16 %v2803, %v2802
  %v3010 = vpack.c.b16 %v2805, %v2804
  %v3011 = vpack.c.b16 %v2807, %v2806
  %v3012 = vpack.c.b16 %v2809, %v2808
  %v3013 = vpack.c.b16 %v2811, %v2810
  %v3014 = vpack.c.b16 %v2813, %v2812
  %v3015 = vpack.c.b16 %v2815, %v2814
  %3216 = vmatpush.bf16.msra.mxu0 %v2823
  %3217 = vmatpush.bf16.msra.mxu0 %v2822
  %3218 = vmatpush.bf16.msra.mxu0 %v2821
  %3219 = vmatpush.bf16.msra.mxu0 %v2820
  %3220 = vmatpush.bf16.msra.mxu0 %v2819
  %3221 = vmatpush.bf16.msra.mxu0 %v2818
  %3222 = vmatpush.bf16.msra.mxu0 %v2817
  %3223 = vmatpush.bf16.msra.mxu0 %v2816
  %3224 = vmatmul.bf16.gmra.mxu0 %v1966
  %v3225 = vpop.f32.mrf.mxu0
  %v3226 = vadd.f32 %v1926, %v3225
  %v3227 = vpop.f32.mrf.mxu0
  %3228 = vdwg.mxu0
  %3229 = vmatpush.bf16.msra.mxu0 %v2831
  %3230 = vmatpush.bf16.msra.mxu0 %v2830
  %3231 = vmatpush.bf16.msra.mxu0 %v2829
  %3232 = vmatpush.bf16.msra.mxu0 %v2828
  %3233 = vmatpush.bf16.msra.mxu0 %v2827
  %3234 = vmatpush.bf16.msra.mxu0 %v2826
  %3235 = vmatpush.bf16.msra.mxu0 %v2825
  %3236 = vmatpush.bf16.msra.mxu0 %v2824
  %3237 = vmatmul.bf16.gmra.mxu0 %v1967
  %v3238 = vpop.f32.mrf.mxu0
  %v3239 = vadd.f32 %v3226, %v3238
  %v3240 = vpop.f32.mrf.mxu0
  %3241 = vdwg.mxu0
  %3242 = vmatpush.bf16.msra.mxu0 %v2839
  %3243 = vmatpush.bf16.msra.mxu0 %v2838
  %3244 = vmatpush.bf16.msra.mxu0 %v2837
  %3245 = vmatpush.bf16.msra.mxu0 %v2836
  %3246 = vmatpush.bf16.msra.mxu0 %v2835
  %3247 = vmatpush.bf16.msra.mxu0 %v2834
  %3248 = vmatpush.bf16.msra.mxu0 %v2833
  %3249 = vmatpush.bf16.msra.mxu0 %v2832
  %3250 = vmatmul.bf16.gmra.mxu0 %v1968
  %v3251 = vpop.f32.mrf.mxu0
  %v3252 = vadd.f32 %v3239, %v3251
  %v3253 = vpop.f32.mrf.mxu0
  %3254 = vdwg.mxu0
  %3255 = vmatpush.bf16.msra.mxu0 %v2847
  %3256 = vmatpush.bf16.msra.mxu0 %v2846
  %3257 = vmatpush.bf16.msra.mxu0 %v2845
  %3258 = vmatpush.bf16.msra.mxu0 %v2844
  %3259 = vmatpush.bf16.msra.mxu0 %v2843
  %3260 = vmatpush.bf16.msra.mxu0 %v2842
  %3261 = vmatpush.bf16.msra.mxu0 %v2841
  %3262 = vmatpush.bf16.msra.mxu0 %v2840
  %3263 = vmatmul.bf16.gmra.mxu0 %v1969
  %v3264 = vpop.f32.mrf.mxu0
  %v3265 = vadd.f32 %v3252, %v3264
  %v3266 = vpop.f32.mrf.mxu0
  %3267 = vdwg.mxu0
  %3268 = vmatpush.bf16.msra.mxu0 %v2855
  %3269 = vmatpush.bf16.msra.mxu0 %v2854
  %3270 = vmatpush.bf16.msra.mxu0 %v2853
  %3271 = vmatpush.bf16.msra.mxu0 %v2852
  %3272 = vmatpush.bf16.msra.mxu0 %v2851
  %3273 = vmatpush.bf16.msra.mxu0 %v2850
  %3274 = vmatpush.bf16.msra.mxu0 %v2849
  %3275 = vmatpush.bf16.msra.mxu0 %v2848
  %3276 = vmatmul.bf16.gmra.mxu0 %v1970
  %v3277 = vpop.f32.mrf.mxu0
  %v3278 = vadd.f32 %v3265, %v3277
  %v3279 = vpop.f32.mrf.mxu0
  %3280 = vdwg.mxu0
  %3281 = vmatpush.bf16.msra.mxu0 %v2863
  %3282 = vmatpush.bf16.msra.mxu0 %v2862
  %3283 = vmatpush.bf16.msra.mxu0 %v2861
  %3284 = vmatpush.bf16.msra.mxu0 %v2860
  %3285 = vmatpush.bf16.msra.mxu0 %v2859
  %3286 = vmatpush.bf16.msra.mxu0 %v2858
  %3287 = vmatpush.bf16.msra.mxu0 %v2857
  %3288 = vmatpush.bf16.msra.mxu0 %v2856
  %3289 = vmatmul.bf16.gmra.mxu0 %v1971
  %v3290 = vpop.f32.mrf.mxu0
  %v3291 = vadd.f32 %v3278, %v3290
  %v3292 = vpop.f32.mrf.mxu0
  %3293 = vdwg.mxu0
  %3294 = vmatpush.bf16.msra.mxu0 %v2871
  %3295 = vmatpush.bf16.msra.mxu0 %v2870
  %3296 = vmatpush.bf16.msra.mxu0 %v2869
  %3297 = vmatpush.bf16.msra.mxu0 %v2868
  %3298 = vmatpush.bf16.msra.mxu0 %v2867
  %3299 = vmatpush.bf16.msra.mxu0 %v2866
  %3300 = vmatpush.bf16.msra.mxu0 %v2865
  %3301 = vmatpush.bf16.msra.mxu0 %v2864
  %3302 = vmatmul.bf16.gmra.mxu0 %v1972
  %v3303 = vpop.f32.mrf.mxu0
  %v3304 = vadd.f32 %v3291, %v3303
  %v3305 = vpop.f32.mrf.mxu0
  %3306 = vdwg.mxu0
  %3307 = vmatpush.bf16.msra.mxu0 %v2879
  %3308 = vmatpush.bf16.msra.mxu0 %v2878
  %3309 = vmatpush.bf16.msra.mxu0 %v2877
  %3310 = vmatpush.bf16.msra.mxu0 %v2876
  %3311 = vmatpush.bf16.msra.mxu0 %v2875
  %3312 = vmatpush.bf16.msra.mxu0 %v2874
  %3313 = vmatpush.bf16.msra.mxu0 %v2873
  %3314 = vmatpush.bf16.msra.mxu0 %v2872
  %3315 = vmatmul.bf16.gmra.mxu0 %v1973
  %v3316 = vpop.f32.mrf.mxu0
  %v3317 = vadd.f32 %v3304, %v3316
  %v3318 = vpop.f32.mrf.mxu0
  %3319 = vdwg.mxu0
  %3320 = vmatpush.bf16.msra.mxu0 %v2887
  %3321 = vmatpush.bf16.msra.mxu0 %v2886
  %3322 = vmatpush.bf16.msra.mxu0 %v2885
  %3323 = vmatpush.bf16.msra.mxu0 %v2884
  %3324 = vmatpush.bf16.msra.mxu0 %v2883
  %3325 = vmatpush.bf16.msra.mxu0 %v2882
  %3326 = vmatpush.bf16.msra.mxu0 %v2881
  %3327 = vmatpush.bf16.msra.mxu0 %v2880
  %3328 = vmatmul.bf16.gmra.mxu0 %v1974
  %v3329 = vpop.f32.mrf.mxu0
  %v3330 = vadd.f32 %v3317, %v3329
  %v3331 = vpop.f32.mrf.mxu0
  %3332 = vdwg.mxu0
  %3333 = vmatpush.bf16.msra.mxu0 %v2895
  %3334 = vmatpush.bf16.msra.mxu0 %v2894
  %3335 = vmatpush.bf16.msra.mxu0 %v2893
  %3336 = vmatpush.bf16.msra.mxu0 %v2892
  %3337 = vmatpush.bf16.msra.mxu0 %v2891
  %3338 = vmatpush.bf16.msra.mxu0 %v2890
  %3339 = vmatpush.bf16.msra.mxu0 %v2889
  %3340 = vmatpush.bf16.msra.mxu0 %v2888
  %3341 = vmatmul.bf16.gmra.mxu0 %v1975
  %v3342 = vpop.f32.mrf.mxu0
  %v3343 = vadd.f32 %v3330, %v3342
  %v3344 = vpop.f32.mrf.mxu0
  %3345 = vdwg.mxu0
  %3346 = vmatpush.bf16.msra.mxu0 %v2903
  %3347 = vmatpush.bf16.msra.mxu0 %v2902
  %3348 = vmatpush.bf16.msra.mxu0 %v2901
  %3349 = vmatpush.bf16.msra.mxu0 %v2900
  %3350 = vmatpush.bf16.msra.mxu0 %v2899
  %3351 = vmatpush.bf16.msra.mxu0 %v2898
  %3352 = vmatpush.bf16.msra.mxu0 %v2897
  %3353 = vmatpush.bf16.msra.mxu0 %v2896
  %3354 = vmatmul.bf16.gmra.mxu0 %v1976
  %v3355 = vpop.f32.mrf.mxu0
  %v3356 = vadd.f32 %v3343, %v3355
  %v3357 = vpop.f32.mrf.mxu0
  %3358 = vdwg.mxu0
  %3359 = vmatpush.bf16.msra.mxu0 %v2911
  %3360 = vmatpush.bf16.msra.mxu0 %v2910
  %3361 = vmatpush.bf16.msra.mxu0 %v2909
  %3362 = vmatpush.bf16.msra.mxu0 %v2908
  %3363 = vmatpush.bf16.msra.mxu0 %v2907
  %3364 = vmatpush.bf16.msra.mxu0 %v2906
  %3365 = vmatpush.bf16.msra.mxu0 %v2905
  %3366 = vmatpush.bf16.msra.mxu0 %v2904
  %3367 = vmatmul.bf16.gmra.mxu0 %v1977
  %v3368 = vpop.f32.mrf.mxu0
  %v3369 = vadd.f32 %v3356, %v3368
  %v3370 = vpop.f32.mrf.mxu0
  %3371 = vdwg.mxu0
  %3372 = vmatpush.bf16.msra.mxu0 %v2919
  %3373 = vmatpush.bf16.msra.mxu0 %v2918
  %3374 = vmatpush.bf16.msra.mxu0 %v2917
  %3375 = vmatpush.bf16.msra.mxu0 %v2916
  %3376 = vmatpush.bf16.msra.mxu0 %v2915
  %3377 = vmatpush.bf16.msra.mxu0 %v2914
  %3378 = vmatpush.bf16.msra.mxu0 %v2913
  %3379 = vmatpush.bf16.msra.mxu0 %v2912
  %3380 = vmatmul.bf16.gmra.mxu0 %v1978
  %v3381 = vpop.f32.mrf.mxu0
  %v3382 = vadd.f32 %v3369, %v3381
  %v3383 = vpop.f32.mrf.mxu0
  %3384 = vdwg.mxu0
  %3385 = vmatpush.bf16.msra.mxu0 %v2927
  %3386 = vmatpush.bf16.msra.mxu0 %v2926
  %3387 = vmatpush.bf16.msra.mxu0 %v2925
  %3388 = vmatpush.bf16.msra.mxu0 %v2924
  %3389 = vmatpush.bf16.msra.mxu0 %v2923
  %3390 = vmatpush.bf16.msra.mxu0 %v2922
  %3391 = vmatpush.bf16.msra.mxu0 %v2921
  %3392 = vmatpush.bf16.msra.mxu0 %v2920
  %3393 = vmatmul.bf16.gmra.mxu0 %v1979
  %v3394 = vpop.f32.mrf.mxu0
  %v3395 = vadd.f32 %v3382, %v3394
  %v3396 = vpop.f32.mrf.mxu0
  %3397 = vdwg.mxu0
  %3398 = vmatpush.bf16.msra.mxu0 %v2935
  %3399 = vmatpush.bf16.msra.mxu0 %v2934
  %3400 = vmatpush.bf16.msra.mxu0 %v2933
  %3401 = vmatpush.bf16.msra.mxu0 %v2932
  %3402 = vmatpush.bf16.msra.mxu0 %v2931
  %3403 = vmatpush.bf16.msra.mxu0 %v2930
  %3404 = vmatpush.bf16.msra.mxu0 %v2929
  %3405 = vmatpush.bf16.msra.mxu0 %v2928
  %3406 = vmatmul.bf16.gmra.mxu0 %v1980
  %v3407 = vpop.f32.mrf.mxu0
  %v3408 = vadd.f32 %v3395, %v3407
  %v3409 = vpop.f32.mrf.mxu0
  %3410 = vdwg.mxu0
  %3411 = vmatpush.bf16.msra.mxu0 %v2943
  %3412 = vmatpush.bf16.msra.mxu0 %v2942
  %3413 = vmatpush.bf16.msra.mxu0 %v2941
  %3414 = vmatpush.bf16.msra.mxu0 %v2940
  %3415 = vmatpush.bf16.msra.mxu0 %v2939
  %3416 = vmatpush.bf16.msra.mxu0 %v2938
  %3417 = vmatpush.bf16.msra.mxu0 %v2937
  %3418 = vmatpush.bf16.msra.mxu0 %v2936
  %3419 = vmatmul.bf16.gmra.mxu0 %v1981
  %v3420 = vpop.f32.mrf.mxu0
  %v3421 = vadd.f32 %v3408, %v3420
  %v3422 = vpop.f32.mrf.mxu0
  %3423 = vdwg.mxu0
  %3424 = vmatpush.bf16.msra.mxu0 %v2951
  %3425 = vmatpush.bf16.msra.mxu0 %v2950
  %3426 = vmatpush.bf16.msra.mxu0 %v2949
  %3427 = vmatpush.bf16.msra.mxu0 %v2948
  %3428 = vmatpush.bf16.msra.mxu0 %v2947
  %3429 = vmatpush.bf16.msra.mxu0 %v2946
  %3430 = vmatpush.bf16.msra.mxu0 %v2945
  %3431 = vmatpush.bf16.msra.mxu0 %v2944
  %3432 = vmatmul.bf16.gmra.mxu0 %v1982
  %v3433 = vpop.f32.mrf.mxu0
  %v3434 = vadd.f32 %v3421, %v3433
  %v3435 = vpop.f32.mrf.mxu0
  %3436 = vdwg.mxu0
  %3437 = vmatpush.bf16.msra.mxu0 %v2959
  %3438 = vmatpush.bf16.msra.mxu0 %v2958
  %3439 = vmatpush.bf16.msra.mxu0 %v2957
  %3440 = vmatpush.bf16.msra.mxu0 %v2956
  %3441 = vmatpush.bf16.msra.mxu0 %v2955
  %3442 = vmatpush.bf16.msra.mxu0 %v2954
  %3443 = vmatpush.bf16.msra.mxu0 %v2953
  %3444 = vmatpush.bf16.msra.mxu0 %v2952
  %3445 = vmatmul.bf16.gmra.mxu0 %v1983
  %v3446 = vpop.f32.mrf.mxu0
  %v3447 = vadd.f32 %v3434, %v3446
  %v3448 = vpop.f32.mrf.mxu0
  %3449 = vdwg.mxu0
  %3450 = vmatpush.bf16.msra.mxu0 %v2967
  %3451 = vmatpush.bf16.msra.mxu0 %v2966
  %3452 = vmatpush.bf16.msra.mxu0 %v2965
  %3453 = vmatpush.bf16.msra.mxu0 %v2964
  %3454 = vmatpush.bf16.msra.mxu0 %v2963
  %3455 = vmatpush.bf16.msra.mxu0 %v2962
  %3456 = vmatpush.bf16.msra.mxu0 %v2961
  %3457 = vmatpush.bf16.msra.mxu0 %v2960
  %3458 = vmatmul.bf16.gmra.mxu0 %v1984
  %v3459 = vpop.f32.mrf.mxu0
  %v3460 = vadd.f32 %v3447, %v3459
  %v3461 = vpop.f32.mrf.mxu0
  %3462 = vdwg.mxu0
  %3463 = vmatpush.bf16.msra.mxu0 %v2975
  %3464 = vmatpush.bf16.msra.mxu0 %v2974
  %3465 = vmatpush.bf16.msra.mxu0 %v2973
  %3466 = vmatpush.bf16.msra.mxu0 %v2972
  %3467 = vmatpush.bf16.msra.mxu0 %v2971
  %3468 = vmatpush.bf16.msra.mxu0 %v2970
  %3469 = vmatpush.bf16.msra.mxu0 %v2969
  %3470 = vmatpush.bf16.msra.mxu0 %v2968
  %3471 = vmatmul.bf16.gmra.mxu0 %v1985
  %v3472 = vpop.f32.mrf.mxu0
  %v3473 = vadd.f32 %v3460, %v3472
  %v3474 = vpop.f32.mrf.mxu0
  %3475 = vdwg.mxu0
  %3476 = vmatpush.bf16.msra.mxu0 %v2983
  %3477 = vmatpush.bf16.msra.mxu0 %v2982
  %3478 = vmatpush.bf16.msra.mxu0 %v2981
  %3479 = vmatpush.bf16.msra.mxu0 %v2980
  %3480 = vmatpush.bf16.msra.mxu0 %v2979
  %3481 = vmatpush.bf16.msra.mxu0 %v2978
  %3482 = vmatpush.bf16.msra.mxu0 %v2977
  %3483 = vmatpush.bf16.msra.mxu0 %v2976
  %3484 = vmatmul.bf16.gmra.mxu0 %v1986
  %v3485 = vpop.f32.mrf.mxu0
  %v3486 = vadd.f32 %v3473, %v3485
  %v3487 = vpop.f32.mrf.mxu0
  %3488 = vdwg.mxu0
  %3489 = vmatpush.bf16.msra.mxu0 %v2991
  %3490 = vmatpush.bf16.msra.mxu0 %v2990
  %3491 = vmatpush.bf16.msra.mxu0 %v2989
  %3492 = vmatpush.bf16.msra.mxu0 %v2988
  %3493 = vmatpush.bf16.msra.mxu0 %v2987
  %3494 = vmatpush.bf16.msra.mxu0 %v2986
  %3495 = vmatpush.bf16.msra.mxu0 %v2985
  %3496 = vmatpush.bf16.msra.mxu0 %v2984
  %3497 = vmatmul.bf16.gmra.mxu0 %v1987
  %v3498 = vpop.f32.mrf.mxu0
  %v3499 = vadd.f32 %v3486, %v3498
  %v3500 = vpop.f32.mrf.mxu0
  %3501 = vdwg.mxu0
  %3502 = vmatpush.bf16.msra.mxu0 %v2999
  %3503 = vmatpush.bf16.msra.mxu0 %v2998
  %3504 = vmatpush.bf16.msra.mxu0 %v2997
  %3505 = vmatpush.bf16.msra.mxu0 %v2996
  %3506 = vmatpush.bf16.msra.mxu0 %v2995
  %3507 = vmatpush.bf16.msra.mxu0 %v2994
  %3508 = vmatpush.bf16.msra.mxu0 %v2993
  %3509 = vmatpush.bf16.msra.mxu0 %v2992
  %3510 = vmatmul.bf16.gmra.mxu0 %v1988
  %v3511 = vpop.f32.mrf.mxu0
  %v3512 = vadd.f32 %v3499, %v3511
  %v3513 = vpop.f32.mrf.mxu0
  %3514 = vdwg.mxu0
  %3515 = vmatpush.bf16.msra.mxu0 %v3007
  %3516 = vmatpush.bf16.msra.mxu0 %v3006
  %3517 = vmatpush.bf16.msra.mxu0 %v3005
  %3518 = vmatpush.bf16.msra.mxu0 %v3004
  %3519 = vmatpush.bf16.msra.mxu0 %v3003
  %3520 = vmatpush.bf16.msra.mxu0 %v3002
  %3521 = vmatpush.bf16.msra.mxu0 %v3001
  %3522 = vmatpush.bf16.msra.mxu0 %v3000
  %3523 = vmatmul.bf16.gmra.mxu0 %v1989
  %v3524 = vpop.f32.mrf.mxu0
  %v3525 = vadd.f32 %v3512, %v3524
  %v3526 = vpop.f32.mrf.mxu0
  %3527 = vdwg.mxu0
  %3528 = vmatpush.bf16.msra.mxu0 %v3015
  %3529 = vmatpush.bf16.msra.mxu0 %v3014
  %3530 = vmatpush.bf16.msra.mxu0 %v3013
  %3531 = vmatpush.bf16.msra.mxu0 %v3012
  %3532 = vmatpush.bf16.msra.mxu0 %v3011
  %3533 = vmatpush.bf16.msra.mxu0 %v3010
  %3534 = vmatpush.bf16.msra.mxu0 %v3009
  %3535 = vmatpush.bf16.msra.mxu0 %v3008
  %3536 = vmatmul.bf16.gmra.mxu0 %v1990
  %v3537 = vpop.f32.mrf.mxu0
  %v3538 = vadd.f32 %v3525, %v3537
  %v3539 = vpop.f32.mrf.mxu0
  %3540 = vdwg.mxu0
  %v3541 = vmax.f32 %v3538, 0.0
  %v3542 = vpack.c.bf16 %v3541, %v3541
  %v3543 = vld [vmem:[%s5] sm:$0xf]
  %v3544 = vld [vmem:[%s5 + $0x4] sm:$0xf]
  %v3545 = vld [vmem:[%s5 + $0x8] sm:$0xf]
  %v3546 = vld [vmem:[%s5 + $0xc] sm:$0xf]
  %v3547 = vld [vmem:[%s5 + $0x10] sm:$0xf]
  %v3548 = vld [vmem:[%s5 + $0x14] sm:$0xf]
  %v3549 = vld [vmem:[%s5 + $0x18] sm:$0xf]
  %v3550 = vld [vmem:[%s5 + $0x1c] sm:$0xf]
  %v3551 = vld [vmem:[%s5 + $0x20] sm:$0xf]
  %v3552 = vld [vmem:[%s5 + $0x24] sm:$0xf]
  %v3553 = vld [vmem:[%s5 + $0x28] sm:$0xf]
  %v3554 = vld [vmem:[%s5 + $0x2c] sm:$0xf]
  %v3555 = vld [vmem:[%s5 + $0x30] sm:$0xf]
  %v3556 = vld [vmem:[%s5 + $0x34] sm:$0xf]
  %v3557 = vld [vmem:[%s5 + $0x38] sm:$0xf]
  %v3558 = vld [vmem:[%s5 + $0x3c] sm:$0xf]
  %v3559 = vld [vmem:[%s6] sm:$0x1]
  %v3561 = vperm.slane %v3559, 0
  %v3579 = vunpack.c.l.b16 %v3543
  %v3580 = vunpack.c.l.b16 %v3544
  %v3581 = vunpack.c.l.b16 %v3545
  %v3582 = vunpack.c.l.b16 %v3546
  %v3583 = vunpack.c.l.b16 %v3547
  %v3584 = vunpack.c.l.b16 %v3548
  %v3585 = vunpack.c.l.b16 %v3549
  %v3586 = vunpack.c.l.b16 %v3550
  %v3587 = vunpack.c.l.b16 %v3551
  %v3588 = vunpack.c.l.b16 %v3552
  %v3589 = vunpack.c.l.b16 %v3553
  %v3590 = vunpack.c.l.b16 %v3554
  %v3591 = vunpack.c.l.b16 %v3555
  %v3592 = vunpack.c.l.b16 %v3556
  %v3593 = vunpack.c.l.b16 %v3557
  %v3594 = vunpack.c.l.b16 %v3558
  %v3595 = vpack.c.b16 %v3580, %v3579
  %v3596 = vpack.c.b16 %v3582, %v3581
  %v3597 = vpack.c.b16 %v3584, %v3583
  %v3598 = vpack.c.b16 %v3586, %v3585
  %v3599 = vpack.c.b16 %v3588, %v3587
  %v3600 = vpack.c.b16 %v3590, %v3589
  %v3601 = vpack.c.b16 %v3592, %v3591
  %v3602 = vpack.c.b16 %v3594, %v3593
  %3611 = vmatpush.bf16.msra.mxu0 %v3602
  %3612 = vmatpush.bf16.msra.mxu0 %v3601
  %3613 = vmatpush.bf16.msra.mxu0 %v3600
  %3614 = vmatpush.bf16.msra.mxu0 %v3599
  %3615 = vmatpush.bf16.msra.mxu0 %v3598
  %3616 = vmatpush.bf16.msra.mxu0 %v3597
  %3617 = vmatpush.bf16.msra.mxu0 %v3596
  %3618 = vmatpush.bf16.msra.mxu0 %v3595
  %3619 = vmatmul.bf16.gmra.mxu0 %v3542
  %v3620 = vpop.f32.mrf.mxu0
  %v3621 = vadd.f32 %v3561, %v3620
  %v3622 = vpop.f32.mrf.mxu0
  %3623 = vdwg.mxu0
  %v3624 = vmax.f32 %v3621, 0.0
  %v3625 = vpack.c.bf16 %v3624, %v3624
  %v3626 = vld [vmem:[%s7] sm:$0xf]
  %v3627 = vld [vmem:[%s7 + $0x4] sm:$0xf]
  %v3628 = vld [vmem:[%s7 + $0x8] sm:$0xf]
  %v3629 = vld [vmem:[%s7 + $0xc] sm:$0xf]
  %v3630 = vld [vmem:[%s7 + $0x10] sm:$0xf]
  %v3631 = vld [vmem:[%s7 + $0x14] sm:$0xf]
  %v3632 = vld [vmem:[%s7 + $0x18] sm:$0xf]
  %v3633 = vld [vmem:[%s7 + $0x1c] sm:$0xf]
  %v3634 = vld [vmem:[%s7 + $0x20] sm:$0xf]
  %v3635 = vld [vmem:[%s7 + $0x24] sm:$0xf]
  %v3636 = vld [vmem:[%s7 + $0x28] sm:$0xf]
  %v3637 = vld [vmem:[%s7 + $0x2c] sm:$0xf]
  %v3638 = vld [vmem:[%s7 + $0x30] sm:$0xf]
  %v3639 = vld [vmem:[%s7 + $0x34] sm:$0xf]
  %v3640 = vld [vmem:[%s7 + $0x38] sm:$0xf]
  %v3641 = vld [vmem:[%s7 + $0x3c] sm:$0xf]
  %v3642 = vld [vmem:[%s8] sm:$0x1]
  %v3644 = vperm.slane %v3642, 0
  %v3662 = vunpack.c.l.b16 %v3626
  %v3663 = vunpack.c.l.b16 %v3627
  %v3664 = vunpack.c.l.b16 %v3628
  %v3665 = vunpack.c.l.b16 %v3629
  %v3666 = vunpack.c.l.b16 %v3630
  %v3667 = vunpack.c.l.b16 %v3631
  %v3668 = vunpack.c.l.b16 %v3632
  %v3669 = vunpack.c.l.b16 %v3633
  %v3670 = vunpack.c.l.b16 %v3634
  %v3671 = vunpack.c.l.b16 %v3635
  %v3672 = vunpack.c.l.b16 %v3636
  %v3673 = vunpack.c.l.b16 %v3637
  %v3674 = vunpack.c.l.b16 %v3638
  %v3675 = vunpack.c.l.b16 %v3639
  %v3676 = vunpack.c.l.b16 %v3640
  %v3677 = vunpack.c.l.b16 %v3641
  %v3678 = vpack.c.b16 %v3663, %v3662
  %v3679 = vpack.c.b16 %v3665, %v3664
  %v3680 = vpack.c.b16 %v3667, %v3666
  %v3681 = vpack.c.b16 %v3669, %v3668
  %v3682 = vpack.c.b16 %v3671, %v3670
  %v3683 = vpack.c.b16 %v3673, %v3672
  %v3684 = vpack.c.b16 %v3675, %v3674
  %v3685 = vpack.c.b16 %v3677, %v3676
  %3694 = vmatpush.bf16.msra.mxu0 %v3685
  %3695 = vmatpush.bf16.msra.mxu0 %v3684
  %3696 = vmatpush.bf16.msra.mxu0 %v3683
  %3697 = vmatpush.bf16.msra.mxu0 %v3682
  %3698 = vmatpush.bf16.msra.mxu0 %v3681
  %3699 = vmatpush.bf16.msra.mxu0 %v3680
  %3700 = vmatpush.bf16.msra.mxu0 %v3679
  %3701 = vmatpush.bf16.msra.mxu0 %v3678
  %3702 = vmatmul.bf16.gmra.mxu0 %v3625
  %v3703 = vpop.f32.mrf.mxu0
  %v3704 = vadd.f32 %v3644, %v3703
  %v3705 = vpop.f32.mrf.mxu0
  %3706 = vdwg.mxu0
  %3707 = vst [vmem:[%s9] sm:$0xff] %v3704
  // Predicated region
  $region38: #{lenet_forward.3} parent=0 // pred_check
    _
  $region39: #{lenet_forward.3} parent=0 // pred_check_branch
    %3709 = sbr.rel (0) target = $region41
  $region40: #{lenet_forward.3} parent=0 // pred_region
    _
  $region41: #{lenet_forward.3} parent=0 // pred_fallthru
    _
  // Predicated region
  $region42: #{lenet_forward.3} parent=0 // pred_check
    _
  $region43: #{lenet_forward.3} parent=0 // pred_check_branch
    %3711 = sbr.rel (0) target = $region45
  $region44: #{lenet_forward.3} parent=0 // pred_region
    _
  $region45: #{lenet_forward.3} parent=0 // pred_fallthru
    _

</llo_original>
